<compile_context>
chip_gen: v7x
topology: tpu7x:2x2x1
jax: 0.10.0
libtpu: 0.0.40
codegen_flags: <defaults>
</compile_context>

<pallas_src>
import functools

import jax
import jax.numpy as jnp
import numpy as np
from jax.experimental import pallas as pl
from jax.experimental.pallas import tpu as pltpu

EPS = 1e-5
_COL_OFF = 8  # 8-aligned sublane offset of the conv2 halo-buffer interior (f32 tile = 8 sublanes)


# ------------------------------- fused kernel ------------------------------- #

def _bottleneck_kernel(x_ref, w1_ref, b1_ref, w2_ref, b2_ref, w3_ref, b3_ref,
                       o_ref, p_ref, acc_ref, *, H, W, planes, mxu_dtype):
    """Fused conv1x1+BN+ReLU -> conv3x3+BN+ReLU -> conv1x1+BN+add+ReLU.

    One grid step == one batch element; all intermediates stay in VMEM.
      x_ref  : (1, H*W, Cin)            activations (Cin == 4*planes)
      w*_ref : BN-scale-folded weights  (mxu_dtype, resident across the grid)
      b*_ref : (1, C) f32               folded BN biases
      o_ref  : (1, H*W, Cout) f32
      p_ref  : (H+2, W+2*_COL_OFF, P) f32 zero-bordered halo buffer for conv2
      acc_ref: (H*W, P) f32             conv2 accumulator
    """
    HW = H * W
    P = planes
    Wp = W + 2 * _COL_OFF
    xb = x_ref[0]                                             # (HW, Cin) f32

    # ---- conv1 (1x1, scale folded) + bias + ReLU : one MXU matmul ----------
    y1 = jnp.dot(xb.astype(mxu_dtype), w1_ref[...],
                 preferred_element_type=jnp.float32)
    y1 = jnp.maximum(y1 + b1_ref[...], 0.0)                   # (HW, P) f32

    # ---- stage out1 into the zero-bordered VMEM halo buffer ----------------
    # Only the border strips need to be zero (the interior is overwritten every
    # step).  Zeroing per step keeps scratch state core-local-safe under the
    # megacore "parallel" split.  The interior store starts at row 1 /
    # column _COL_OFF (an 8-aligned sublane offset -> aligned full-width store).
    zero_row = jnp.zeros((1, Wp, P), jnp.float32)
    zero_col = jnp.zeros((H + 2, _COL_OFF, P), jnp.float32)
    p_ref[0:1, :, :] = zero_row                                # top halo row
    p_ref[H + 1:H + 2, :, :] = zero_row                        # bottom halo row
    p_ref[:, 0:_COL_OFF, :] = zero_col                         # left strip (covers col _COL_OFF-1)
    p_ref[:, _COL_OFF + W:Wp, :] = zero_col                    # right strip (covers col _COL_OFF+W)
    p_ref[1:H + 1, _COL_OFF:_COL_OFF + W, :] = y1.reshape(H, W, P)

    # ---- conv2 (3x3, stride 1, pad 1) + bias + ReLU ------------------------
    # 9 shifted-window matmuls accumulated into a VMEM f32 scratch ref
    # (bounded vreg live ranges; first tap initializes, the rest accumulate).
    first = True
    for dh in range(3):
        for dw in range(3):
            c0 = _COL_OFF - 1 + dw
            patch = p_ref[dh:dh + H, c0:c0 + W, :]            # (H, W, P) f32
            lhs = patch.reshape(HW, P).astype(mxu_dtype)
            tap = jnp.dot(lhs, w2_ref[dh * 3 + dw],
                          preferred_element_type=jnp.float32)
            if first:
                acc_ref[...] = tap
                first = False
            else:
                acc_ref[...] += tap
    y2 = jnp.maximum(acc_ref[...] + b2_ref[...], 0.0)         # (HW, P) f32

    # ---- conv3 (1x1) + bias + residual add + ReLU --------------------------
    y3 = jnp.dot(y2.astype(mxu_dtype), w3_ref[...],
                 preferred_element_type=jnp.float32)
    y3 = y3 + b3_ref[...] + xb.astype(jnp.float32)            # residual in f32
    o_ref[0] = jnp.maximum(y3, 0.0).astype(o_ref.dtype)


# ------------------------------- wrappers ----------------------------------- #

def _fold_bn(gamma, beta, mean, var):
    scale = gamma * jax.lax.rsqrt(var + EPS)
    bias = beta - mean * scale
    return scale, bias


def bottleneck_forward_nhwc(x_nhwc, params, *, mxu_dtype=jnp.bfloat16):
    """Fused Bottleneck forward in NHWC (preferred entry point for chaining)."""
    N, H, W, Cin = x_nhwc.shape
    planes = params["w1"].shape[0]
    Cout = params["w3"].shape[0]
    assert Cin == Cout, "downsample=None requires inplanes == planes * expansion"

    # Fold eval-mode BN: scale into the conv weights, bias kept for the epilogue.
    s1, b1 = _fold_bn(params["g1"], params["be1"], params["m1"], params["v1"])
    s2, b2 = _fold_bn(params["g2"], params["be2"], params["m2"], params["v2"])
    s3, b3 = _fold_bn(params["g3"], params["be3"], params["m3"], params["v3"])

    w1 = (jnp.transpose(params["w1"][:, :, 0, 0]) * s1[None, :]).astype(mxu_dtype)   # (Cin, P)
    w2 = jnp.transpose(params["w2"], (2, 3, 1, 0)) * s2[None, None, None, :]          # (3,3,P,P) HWIO
    w2 = w2.reshape(9, planes, planes).astype(mxu_dtype)                              # tap-major
    w3 = (jnp.transpose(params["w3"][:, :, 0, 0]) * s3[None, :]).astype(mxu_dtype)   # (P, Cout)
    b1 = b1.reshape(1, -1).astype(jnp.float32)
    b2 = b2.reshape(1, -1).astype(jnp.float32)
    b3 = b3.reshape(1, -1).astype(jnp.float32)

    HW = H * W
    x_flat = x_nhwc.reshape(N, HW, Cin)

    kernel = functools.partial(_bottleneck_kernel, H=H, W=W, planes=planes,
                               mxu_dtype=mxu_dtype)
    out = pl.pallas_call(
        kernel,
        out_shape=jax.ShapeDtypeStruct((N, HW, Cout), jnp.float32),
        grid=(N,),
        in_specs=[
            pl.BlockSpec((1, HW, Cin), lambda n: (n, 0, 0)),           # streamed activations
            pl.BlockSpec((Cin, planes), lambda n: (0, 0)),             # resident weights
            pl.BlockSpec((1, planes), lambda n: (0, 0)),
            pl.BlockSpec((9, planes, planes), lambda n: (0, 0, 0)),
            pl.BlockSpec((1, planes), lambda n: (0, 0)),
            pl.BlockSpec((planes, Cout), lambda n: (0, 0)),
            pl.BlockSpec((1, Cout), lambda n: (0, 0)),
        ],
        out_specs=pl.BlockSpec((1, HW, Cout), lambda n: (n, 0, 0)),
        scratch_shapes=[
            pltpu.VMEM((H + 2, W + 2 * _COL_OFF, planes), jnp.float32),  # conv2 halo buffer
            pltpu.VMEM((HW, planes), jnp.float32),                       # conv2 accumulator
        ],
        compiler_params=pltpu.CompilerParams(
            dimension_semantics=("parallel",),   # pipeline over batch; 2 TCs on v7x
        ),
    )(x_flat, w1, b1, w2, b2, w3, b3)
    return out.reshape(N, H, W, Cout)


def bottleneck_forward(x_nchw, params):
    """PyTorch-parity NCHW interface. In a chain of blocks keep activations in
    NHWC and call bottleneck_forward_nhwc directly to skip these two boundary
    transposes (each is a full-tensor XLA pass)."""
    x = jnp.transpose(x_nchw, (0, 2, 3, 1))
    out = bottleneck_forward_nhwc(x, params)
    return jnp.transpose(out, (0, 3, 1, 2))


# --------------------------- pure-JAX fp32 reference ------------------------ #

def reference_forward(x, p):
    def conv(x, w, stride, pad):
        return jax.lax.conv_general_dilated(
            x, w, (stride, stride), [(pad, pad), (pad, pad)],
            dimension_numbers=("NCHW", "OIHW", "NCHW"))

    def bn(x, g, be, m, v):
        inv = g * jax.lax.rsqrt(v + EPS)
        return x * inv[None, :, None, None] + (be - m * inv)[None, :, None, None]

    out = jax.nn.relu(bn(conv(x, p["w1"], 1, 0), p["g1"], p["be1"], p["m1"], p["v1"]))
    out = jax.nn.relu(bn(conv(out, p["w2"], 1, 1), p["g2"], p["be2"], p["m2"], p["v2"]))
    out = bn(conv(out, p["w3"], 1, 0), p["g3"], p["be3"], p["m3"], p["v3"])
    return jax.nn.relu(out + x)


# ----------------------------------- main ----------------------------------- #

if __name__ == "__main__":
    key = jax.random.PRNGKey(0)
    N, H, W = 2, 16, 16
    planes = 8
    expansion = 4
    inplanes = planes * expansion  # 32; downsample=None requires inplanes == planes*4

    ks = jax.random.split(key, 16)
    x = jax.random.normal(ks[0], (N, inplanes, H, W), jnp.float32)

    params = {
        # conv weights in PyTorch OIHW layout
        "w1": jax.random.normal(ks[1], (planes, inplanes, 1, 1), jnp.float32) * 0.1,
        "w2": jax.random.normal(ks[2], (planes, planes, 3, 3), jnp.float32) * 0.1,
        "w3": jax.random.normal(ks[3], (planes * expansion, planes, 1, 1), jnp.float32) * 0.1,
        # bn1
        "g1": jax.random.normal(ks[4], (planes,), jnp.float32) * 0.1 + 1.0,
        "be1": jax.random.normal(ks[5], (planes,), jnp.float32) * 0.1,
        "m1": jax.random.normal(ks[6], (planes,), jnp.float32) * 0.1,
        "v1": jnp.abs(jax.random.normal(ks[7], (planes,), jnp.float32)) * 0.1 + 1.0,
        # bn2
        "g2": jax.random.normal(ks[8], (planes,), jnp.float32) * 0.1 + 1.0,
        "be2": jax.random.normal(ks[9], (planes,), jnp.float32) * 0.1,
        "m2": jax.random.normal(ks[10], (planes,), jnp.float32) * 0.1,
        "v2": jnp.abs(jax.random.normal(ks[11], (planes,), jnp.float32)) * 0.1 + 1.0,
        # bn3
        "g3": jax.random.normal(ks[12], (planes * expansion,), jnp.float32) * 0.1 + 1.0,
        "be3": jax.random.normal(ks[13], (planes * expansion,), jnp.float32) * 0.1,
        "m3": jax.random.normal(ks[14], (planes * expansion,), jnp.float32) * 0.1,
        "v3": jnp.abs(jax.random.normal(ks[15], (planes * expansion,), jnp.float32)) * 0.1 + 1.0,
    }

    out = jax.block_until_ready(jax.jit(bottleneck_forward)(x, params))
    ref = jax.block_until_ready(jax.jit(reference_forward)(x, params))
    # bf16 MXU operands (f32 accumulation) vs fp32 reference -> relaxed tolerance.
    np.testing.assert_allclose(np.asarray(out), np.asarray(ref), rtol=2e-2, atol=2e-2)
    print("KERNEL_OK")
</pallas_src>

<mosaic_0001>
module attributes {stable_mosaic.version = 11 : i64} {
  func.func @_bottleneck_kernel(%arg0: i32, %arg1: memref<1x256x32xf32, #tpu.memory_space<vmem>>, %arg2: memref<32x8xbf16, #tpu.memory_space<vmem>>, %arg3: memref<1x8xf32, #tpu.memory_space<vmem>>, %arg4: memref<9x8x8xbf16, #tpu.memory_space<vmem>>, %arg5: memref<1x8xf32, #tpu.memory_space<vmem>>, %arg6: memref<8x32xbf16, #tpu.memory_space<vmem>>, %arg7: memref<1x32xf32, #tpu.memory_space<vmem>>, %arg8: memref<1x256x32xf32, #tpu.memory_space<vmem>>, %arg9: memref<18x32x8xf32, #tpu.memory_space<vmem>>, %arg10: memref<256x8xf32, #tpu.memory_space<vmem>>) attributes {dimension_semantics = [#tpu.dimension_semantics<parallel>], iteration_bounds = array<i64: 2>, scalar_prefetch = 0 : i64, scratch_operands = 2 : i64, tpu.core_type = #tpu.core_type<tc>, window_params = [{transform_indices = @transform_0, window_bounds = array<i64: 1, 256, 32>}, {pipeline_mode = #tpu.pipeline_mode<synchronous>, transform_indices = @transform_1, window_bounds = array<i64: 32, 8>}, {pipeline_mode = #tpu.pipeline_mode<synchronous>, transform_indices = @transform_2, window_bounds = array<i64: 1, 8>}, {pipeline_mode = #tpu.pipeline_mode<synchronous>, transform_indices = @transform_3, window_bounds = array<i64: 9, 8, 8>}, {pipeline_mode = #tpu.pipeline_mode<synchronous>, transform_indices = @transform_4, window_bounds = array<i64: 1, 8>}, {pipeline_mode = #tpu.pipeline_mode<synchronous>, transform_indices = @transform_5, window_bounds = array<i64: 8, 32>}, {pipeline_mode = #tpu.pipeline_mode<synchronous>, transform_indices = @transform_6, window_bounds = array<i64: 1, 32>}, {transform_indices = @transform_7, window_bounds = array<i64: 1, 256, 32>}]} {
    %c0 = arith.constant 0 : index
    %c0_0 = arith.constant 0 : index
    %c0_1 = arith.constant 0 : index
    %0 = vector.load %arg1[%c0, %c0_0, %c0_1] : memref<1x256x32xf32, #tpu.memory_space<vmem>>, vector<1x256x32xf32>
    %1 = vector.shape_cast %0 : vector<1x256x32xf32> to vector<256x32xf32>
    %2 = arith.truncf %1 : vector<256x32xf32> to vector<256x32xbf16>
    %c0_2 = arith.constant 0 : index
    %c0_3 = arith.constant 0 : index
    %3 = vector.load %arg2[%c0_2, %c0_3] : memref<32x8xbf16, #tpu.memory_space<vmem>>, vector<32x8xbf16>
    %cst = arith.constant dense<0.000000e+00> : vector<256x8xf32>
    %4 = tpu.matmul %2, %3, %cst {dimension_numbers = #tpu.dot_dimension_numbers<[1], [0], [0], [1], [0, 0, 1, 1], [], []>} : vector<256x32xbf16>, vector<32x8xbf16>, vector<256x8xf32> -> vector<256x8xf32>
    %c0_4 = arith.constant 0 : index
    %c0_5 = arith.constant 0 : index
    %5 = vector.load %arg3[%c0_4, %c0_5] : memref<1x8xf32, #tpu.memory_space<vmem>>, vector<1x8xf32>
    %6 = vector.broadcast %5 : vector<1x8xf32> to vector<256x8xf32>
    %7 = arith.addf %4, %6 : vector<256x8xf32>
    %cst_6 = arith.constant 0.000000e+00 : f32
    %8 = vector.broadcast %cst_6 : f32 to vector<256x8xf32>
    %9 = arith.maximumf %7, %8 : vector<256x8xf32>
    %cst_7 = arith.constant 0.000000e+00 : f32
    %10 = vector.broadcast %cst_7 : f32 to vector<1x32x8xf32>
    %cst_8 = arith.constant 0.000000e+00 : f32
    %11 = vector.broadcast %cst_8 : f32 to vector<18x8x8xf32>
    %c0_9 = arith.constant 0 : index
    %c0_10 = arith.constant 0 : index
    %c0_11 = arith.constant 0 : index
    %12 = vector.load %arg9[%c0_9, %c0_10, %c0_11] : memref<18x32x8xf32, #tpu.memory_space<vmem>>, vector<1x32x8xf32>
    tpu.vector_store %arg9[%c0_9, %c0_10, %c0_11], %10 {strides = array<i32>} : memref<18x32x8xf32, #tpu.memory_space<vmem>>, vector<1x32x8xf32>,
    %c17 = arith.constant 17 : index
    %c0_12 = arith.constant 0 : index
    %c0_13 = arith.constant 0 : index
    %13 = vector.load %arg9[%c17, %c0_12, %c0_13] : memref<18x32x8xf32, #tpu.memory_space<vmem>>, vector<1x32x8xf32>
    tpu.vector_store %arg9[%c17, %c0_12, %c0_13], %10 {strides = array<i32>} : memref<18x32x8xf32, #tpu.memory_space<vmem>>, vector<1x32x8xf32>,
    %c0_14 = arith.constant 0 : index
    %c0_15 = arith.constant 0 : index
    %c0_16 = arith.constant 0 : index
    %14 = vector.load %arg9[%c0_14, %c0_15, %c0_16] : memref<18x32x8xf32, #tpu.memory_space<vmem>>, vector<18x8x8xf32>
    tpu.vector_store %arg9[%c0_14, %c0_15, %c0_16], %11 {strides = array<i32>} : memref<18x32x8xf32, #tpu.memory_space<vmem>>, vector<18x8x8xf32>,
    %c0_17 = arith.constant 0 : index
    %c24 = arith.constant 24 : index
    %c0_18 = arith.constant 0 : index
    %15 = vector.load %arg9[%c0_17, %c24, %c0_18] : memref<18x32x8xf32, #tpu.memory_space<vmem>>, vector<18x8x8xf32>
    tpu.vector_store %arg9[%c0_17, %c24, %c0_18], %11 {strides = array<i32>} : memref<18x32x8xf32, #tpu.memory_space<vmem>>, vector<18x8x8xf32>,
    %16 = vector.shape_cast %9 : vector<256x8xf32> to vector<16x16x8xf32>
    %c1 = arith.constant 1 : index
    %c8 = arith.constant 8 : index
    %c0_19 = arith.constant 0 : index
    %17 = vector.load %arg9[%c1, %c8, %c0_19] : memref<18x32x8xf32, #tpu.memory_space<vmem>>, vector<16x16x8xf32>
    tpu.vector_store %arg9[%c1, %c8, %c0_19], %16 {strides = array<i32>} : memref<18x32x8xf32, #tpu.memory_space<vmem>>, vector<16x16x8xf32>,
    %c0_20 = arith.constant 0 : index
    %c7 = arith.constant 7 : index
    %c0_21 = arith.constant 0 : index
    %18 = vector.load %arg9[%c0_20, %c7, %c0_21] : memref<18x32x8xf32, #tpu.memory_space<vmem>>, vector<16x16x8xf32>
    %19 = vector.shape_cast %18 : vector<16x16x8xf32> to vector<256x8xf32>
    %20 = arith.truncf %19 : vector<256x8xf32> to vector<256x8xbf16>
    %c0_22 = arith.constant 0 : index
    %c0_23 = arith.constant 0 : index
    %c0_24 = arith.constant 0 : index
    %21 = vector.load %arg4[%c0_22, %c0_23, %c0_24] : memref<9x8x8xbf16, #tpu.memory_space<vmem>>, vector<1x8x8xbf16>
    %22 = vector.shape_cast %21 : vector<1x8x8xbf16> to vector<8x8xbf16>
    %cst_25 = arith.constant dense<0.000000e+00> : vector<256x8xf32>
    %23 = tpu.matmul %20, %22, %cst_25 {dimension_numbers = #tpu.dot_dimension_numbers<[1], [0], [0], [1], [0, 0, 1, 1], [], []>} : vector<256x8xbf16>, vector<8x8xbf16>, vector<256x8xf32> -> vector<256x8xf32>
    %c0_26 = arith.constant 0 : index
    %c0_27 = arith.constant 0 : index
    %24 = vector.load %arg10[%c0_26, %c0_27] : memref<256x8xf32, #tpu.memory_space<vmem>>, vector<256x8xf32>
    tpu.vector_store %arg10[%c0_26, %c0_27], %23 {strides = array<i32>} : memref<256x8xf32, #tpu.memory_space<vmem>>, vector<256x8xf32>,
    %c0_28 = arith.constant 0 : index
    %c8_29 = arith.constant 8 : index
    %c0_30 = arith.constant 0 : index
    %25 = vector.load %arg9[%c0_28, %c8_29, %c0_30] : memref<18x32x8xf32, #tpu.memory_space<vmem>>, vector<16x16x8xf32>
    %26 = vector.shape_cast %25 : vector<16x16x8xf32> to vector<256x8xf32>
    %27 = arith.truncf %26 : vector<256x8xf32> to vector<256x8xbf16>
    %c1_31 = arith.constant 1 : index
    %c0_32 = arith.constant 0 : index
    %c0_33 = arith.constant 0 : index
    %28 = vector.load %arg4[%c1_31, %c0_32, %c0_33] : memref<9x8x8xbf16, #tpu.memory_space<vmem>>, vector<1x8x8xbf16>
    %29 = vector.shape_cast %28 : vector<1x8x8xbf16> to vector<8x8xbf16>
    %cst_34 = arith.constant dense<0.000000e+00> : vector<256x8xf32>
    %30 = tpu.matmul %27, %29, %cst_34 {dimension_numbers = #tpu.dot_dimension_numbers<[1], [0], [0], [1], [0, 0, 1, 1], [], []>} : vector<256x8xbf16>, vector<8x8xbf16>, vector<256x8xf32> -> vector<256x8xf32>
    %c0_35 = arith.constant 0 : index
    %c0_36 = arith.constant 0 : index
    %31 = vector.load %arg10[%c0_35, %c0_36] : memref<256x8xf32, #tpu.memory_space<vmem>>, vector<256x8xf32>
    %32 = arith.addf %31, %30 : vector<256x8xf32>
    %c0_37 = arith.constant 0 : index
    %c0_38 = arith.constant 0 : index
    %33 = vector.load %arg10[%c0_37, %c0_38] : memref<256x8xf32, #tpu.memory_space<vmem>>, vector<256x8xf32>
    tpu.vector_store %arg10[%c0_37, %c0_38], %32 {strides = array<i32>} : memref<256x8xf32, #tpu.memory_space<vmem>>, vector<256x8xf32>,
    %c0_39 = arith.constant 0 : index
    %c9 = arith.constant 9 : index
    %c0_40 = arith.constant 0 : index
    %34 = vector.load %arg9[%c0_39, %c9, %c0_40] : memref<18x32x8xf32, #tpu.memory_space<vmem>>, vector<16x16x8xf32>
    %35 = vector.shape_cast %34 : vector<16x16x8xf32> to vector<256x8xf32>
    %36 = arith.truncf %35 : vector<256x8xf32> to vector<256x8xbf16>
    %c2 = arith.constant 2 : index
    %c0_41 = arith.constant 0 : index
    %c0_42 = arith.constant 0 : index
    %37 = vector.load %arg4[%c2, %c0_41, %c0_42] : memref<9x8x8xbf16, #tpu.memory_space<vmem>>, vector<1x8x8xbf16>
    %38 = vector.shape_cast %37 : vector<1x8x8xbf16> to vector<8x8xbf16>
    %cst_43 = arith.constant dense<0.000000e+00> : vector<256x8xf32>
    %39 = tpu.matmul %36, %38, %cst_43 {dimension_numbers = #tpu.dot_dimension_numbers<[1], [0], [0], [1], [0, 0, 1, 1], [], []>} : vector<256x8xbf16>, vector<8x8xbf16>, vector<256x8xf32> -> vector<256x8xf32>
    %c0_44 = arith.constant 0 : index
    %c0_45 = arith.constant 0 : index
    %40 = vector.load %arg10[%c0_44, %c0_45] : memref<256x8xf32, #tpu.memory_space<vmem>>, vector<256x8xf32>
    %41 = arith.addf %40, %39 : vector<256x8xf32>
    %c0_46 = arith.constant 0 : index
    %c0_47 = arith.constant 0 : index
    %42 = vector.load %arg10[%c0_46, %c0_47] : memref<256x8xf32, #tpu.memory_space<vmem>>, vector<256x8xf32>
    tpu.vector_store %arg10[%c0_46, %c0_47], %41 {strides = array<i32>} : memref<256x8xf32, #tpu.memory_space<vmem>>, vector<256x8xf32>,
    %c1_48 = arith.constant 1 : index
    %c7_49 = arith.constant 7 : index
    %c0_50 = arith.constant 0 : index
    %43 = vector.load %arg9[%c1_48, %c7_49, %c0_50] : memref<18x32x8xf32, #tpu.memory_space<vmem>>, vector<16x16x8xf32>
    %44 = vector.shape_cast %43 : vector<16x16x8xf32> to vector<256x8xf32>
    %45 = arith.truncf %44 : vector<256x8xf32> to vector<256x8xbf16>
    %c3 = arith.constant 3 : index
    %c0_51 = arith.constant 0 : index
    %c0_52 = arith.constant 0 : index
    %46 = vector.load %arg4[%c3, %c0_51, %c0_52] : memref<9x8x8xbf16, #tpu.memory_space<vmem>>, vector<1x8x8xbf16>
    %47 = vector.shape_cast %46 : vector<1x8x8xbf16> to vector<8x8xbf16>
    %cst_53 = arith.constant dense<0.000000e+00> : vector<256x8xf32>
    %48 = tpu.matmul %45, %47, %cst_53 {dimension_numbers = #tpu.dot_dimension_numbers<[1], [0], [0], [1], [0, 0, 1, 1], [], []>} : vector<256x8xbf16>, vector<8x8xbf16>, vector<256x8xf32> -> vector<256x8xf32>
    %c0_54 = arith.constant 0 : index
    %c0_55 = arith.constant 0 : index
    %49 = vector.load %arg10[%c0_54, %c0_55] : memref<256x8xf32, #tpu.memory_space<vmem>>, vector<256x8xf32>
    %50 = arith.addf %49, %48 : vector<256x8xf32>
    %c0_56 = arith.constant 0 : index
    %c0_57 = arith.constant 0 : index
    %51 = vector.load %arg10[%c0_56, %c0_57] : memref<256x8xf32, #tpu.memory_space<vmem>>, vector<256x8xf32>
    tpu.vector_store %arg10[%c0_56, %c0_57], %50 {strides = array<i32>} : memref<256x8xf32, #tpu.memory_space<vmem>>, vector<256x8xf32>,
    %c1_58 = arith.constant 1 : index
    %c8_59 = arith.constant 8 : index
    %c0_60 = arith.constant 0 : index
    %52 = vector.load %arg9[%c1_58, %c8_59, %c0_60] : memref<18x32x8xf32, #tpu.memory_space<vmem>>, vector<16x16x8xf32>
    %53 = vector.shape_cast %52 : vector<16x16x8xf32> to vector<256x8xf32>
    %54 = arith.truncf %53 : vector<256x8xf32> to vector<256x8xbf16>
    %c4 = arith.constant 4 : index
    %c0_61 = arith.constant 0 : index
    %c0_62 = arith.constant 0 : index
    %55 = vector.load %arg4[%c4, %c0_61, %c0_62] : memref<9x8x8xbf16, #tpu.memory_space<vmem>>, vector<1x8x8xbf16>
    %56 = vector.shape_cast %55 : vector<1x8x8xbf16> to vector<8x8xbf16>
    %cst_63 = arith.constant dense<0.000000e+00> : vector<256x8xf32>
    %57 = tpu.matmul %54, %56, %cst_63 {dimension_numbers = #tpu.dot_dimension_numbers<[1], [0], [0], [1], [0, 0, 1, 1], [], []>} : vector<256x8xbf16>, vector<8x8xbf16>, vector<256x8xf32> -> vector<256x8xf32>
    %c0_64 = arith.constant 0 : index
    %c0_65 = arith.constant 0 : index
    %58 = vector.load %arg10[%c0_64, %c0_65] : memref<256x8xf32, #tpu.memory_space<vmem>>, vector<256x8xf32>
    %59 = arith.addf %58, %57 : vector<256x8xf32>
    %c0_66 = arith.constant 0 : index
    %c0_67 = arith.constant 0 : index
    %60 = vector.load %arg10[%c0_66, %c0_67] : memref<256x8xf32, #tpu.memory_space<vmem>>, vector<256x8xf32>
    tpu.vector_store %arg10[%c0_66, %c0_67], %59 {strides = array<i32>} : memref<256x8xf32, #tpu.memory_space<vmem>>, vector<256x8xf32>,
    %c1_68 = arith.constant 1 : index
    %c9_69 = arith.constant 9 : index
    %c0_70 = arith.constant 0 : index
    %61 = vector.load %arg9[%c1_68, %c9_69, %c0_70] : memref<18x32x8xf32, #tpu.memory_space<vmem>>, vector<16x16x8xf32>
    %62 = vector.shape_cast %61 : vector<16x16x8xf32> to vector<256x8xf32>
    %63 = arith.truncf %62 : vector<256x8xf32> to vector<256x8xbf16>
    %c5 = arith.constant 5 : index
    %c0_71 = arith.constant 0 : index
    %c0_72 = arith.constant 0 : index
    %64 = vector.load %arg4[%c5, %c0_71, %c0_72] : memref<9x8x8xbf16, #tpu.memory_space<vmem>>, vector<1x8x8xbf16>
    %65 = vector.shape_cast %64 : vector<1x8x8xbf16> to vector<8x8xbf16>
    %cst_73 = arith.constant dense<0.000000e+00> : vector<256x8xf32>
    %66 = tpu.matmul %63, %65, %cst_73 {dimension_numbers = #tpu.dot_dimension_numbers<[1], [0], [0], [1], [0, 0, 1, 1], [], []>} : vector<256x8xbf16>, vector<8x8xbf16>, vector<256x8xf32> -> vector<256x8xf32>
    %c0_74 = arith.constant 0 : index
    %c0_75 = arith.constant 0 : index
    %67 = vector.load %arg10[%c0_74, %c0_75] : memref<256x8xf32, #tpu.memory_space<vmem>>, vector<256x8xf32>
    %68 = arith.addf %67, %66 : vector<256x8xf32>
    %c0_76 = arith.constant 0 : index
    %c0_77 = arith.constant 0 : index
    %69 = vector.load %arg10[%c0_76, %c0_77] : memref<256x8xf32, #tpu.memory_space<vmem>>, vector<256x8xf32>
    tpu.vector_store %arg10[%c0_76, %c0_77], %68 {strides = array<i32>} : memref<256x8xf32, #tpu.memory_space<vmem>>, vector<256x8xf32>,
    %c2_78 = arith.constant 2 : index
    %c7_79 = arith.constant 7 : index
    %c0_80 = arith.constant 0 : index
    %70 = vector.load %arg9[%c2_78, %c7_79, %c0_80] : memref<18x32x8xf32, #tpu.memory_space<vmem>>, vector<16x16x8xf32>
    %71 = vector.shape_cast %70 : vector<16x16x8xf32> to vector<256x8xf32>
    %72 = arith.truncf %71 : vector<256x8xf32> to vector<256x8xbf16>
    %c6 = arith.constant 6 : index
    %c0_81 = arith.constant 0 : index
    %c0_82 = arith.constant 0 : index
    %73 = vector.load %arg4[%c6, %c0_81, %c0_82] : memref<9x8x8xbf16, #tpu.memory_space<vmem>>, vector<1x8x8xbf16>
    %74 = vector.shape_cast %73 : vector<1x8x8xbf16> to vector<8x8xbf16>
    %cst_83 = arith.constant dense<0.000000e+00> : vector<256x8xf32>
    %75 = tpu.matmul %72, %74, %cst_83 {dimension_numbers = #tpu.dot_dimension_numbers<[1], [0], [0], [1], [0, 0, 1, 1], [], []>} : vector<256x8xbf16>, vector<8x8xbf16>, vector<256x8xf32> -> vector<256x8xf32>
    %c0_84 = arith.constant 0 : index
    %c0_85 = arith.constant 0 : index
    %76 = vector.load %arg10[%c0_84, %c0_85] : memref<256x8xf32, #tpu.memory_space<vmem>>, vector<256x8xf32>
    %77 = arith.addf %76, %75 : vector<256x8xf32>
    %c0_86 = arith.constant 0 : index
    %c0_87 = arith.constant 0 : index
    %78 = vector.load %arg10[%c0_86, %c0_87] : memref<256x8xf32, #tpu.memory_space<vmem>>, vector<256x8xf32>
    tpu.vector_store %arg10[%c0_86, %c0_87], %77 {strides = array<i32>} : memref<256x8xf32, #tpu.memory_space<vmem>>, vector<256x8xf32>,
    %c2_88 = arith.constant 2 : index
    %c8_89 = arith.constant 8 : index
    %c0_90 = arith.constant 0 : index
    %79 = vector.load %arg9[%c2_88, %c8_89, %c0_90] : memref<18x32x8xf32, #tpu.memory_space<vmem>>, vector<16x16x8xf32>
    %80 = vector.shape_cast %79 : vector<16x16x8xf32> to vector<256x8xf32>
    %81 = arith.truncf %80 : vector<256x8xf32> to vector<256x8xbf16>
    %c7_91 = arith.constant 7 : index
    %c0_92 = arith.constant 0 : index
    %c0_93 = arith.constant 0 : index
    %82 = vector.load %arg4[%c7_91, %c0_92, %c0_93] : memref<9x8x8xbf16, #tpu.memory_space<vmem>>, vector<1x8x8xbf16>
    %83 = vector.shape_cast %82 : vector<1x8x8xbf16> to vector<8x8xbf16>
    %cst_94 = arith.constant dense<0.000000e+00> : vector<256x8xf32>
    %84 = tpu.matmul %81, %83, %cst_94 {dimension_numbers = #tpu.dot_dimension_numbers<[1], [0], [0], [1], [0, 0, 1, 1], [], []>} : vector<256x8xbf16>, vector<8x8xbf16>, vector<256x8xf32> -> vector<256x8xf32>
    %c0_95 = arith.constant 0 : index
    %c0_96 = arith.constant 0 : index
    %85 = vector.load %arg10[%c0_95, %c0_96] : memref<256x8xf32, #tpu.memory_space<vmem>>, vector<256x8xf32>
    %86 = arith.addf %85, %84 : vector<256x8xf32>
    %c0_97 = arith.constant 0 : index
    %c0_98 = arith.constant 0 : index
    %87 = vector.load %arg10[%c0_97, %c0_98] : memref<256x8xf32, #tpu.memory_space<vmem>>, vector<256x8xf32>
    tpu.vector_store %arg10[%c0_97, %c0_98], %86 {strides = array<i32>} : memref<256x8xf32, #tpu.memory_space<vmem>>, vector<256x8xf32>,
    %c2_99 = arith.constant 2 : index
    %c9_100 = arith.constant 9 : index
    %c0_101 = arith.constant 0 : index
    %88 = vector.load %arg9[%c2_99, %c9_100, %c0_101] : memref<18x32x8xf32, #tpu.memory_space<vmem>>, vector<16x16x8xf32>
    %89 = vector.shape_cast %88 : vector<16x16x8xf32> to vector<256x8xf32>
    %90 = arith.truncf %89 : vector<256x8xf32> to vector<256x8xbf16>
    %c8_102 = arith.constant 8 : index
    %c0_103 = arith.constant 0 : index
    %c0_104 = arith.constant 0 : index
    %91 = vector.load %arg4[%c8_102, %c0_103, %c0_104] : memref<9x8x8xbf16, #tpu.memory_space<vmem>>, vector<1x8x8xbf16>
    %92 = vector.shape_cast %91 : vector<1x8x8xbf16> to vector<8x8xbf16>
    %cst_105 = arith.constant dense<0.000000e+00> : vector<256x8xf32>
    %93 = tpu.matmul %90, %92, %cst_105 {dimension_numbers = #tpu.dot_dimension_numbers<[1], [0], [0], [1], [0, 0, 1, 1], [], []>} : vector<256x8xbf16>, vector<8x8xbf16>, vector<256x8xf32> -> vector<256x8xf32>
    %c0_106 = arith.constant 0 : index
    %c0_107 = arith.constant 0 : index
    %94 = vector.load %arg10[%c0_106, %c0_107] : memref<256x8xf32, #tpu.memory_space<vmem>>, vector<256x8xf32>
    %95 = arith.addf %94, %93 : vector<256x8xf32>
    %c0_108 = arith.constant 0 : index
    %c0_109 = arith.constant 0 : index
    %96 = vector.load %arg10[%c0_108, %c0_109] : memref<256x8xf32, #tpu.memory_space<vmem>>, vector<256x8xf32>
    tpu.vector_store %arg10[%c0_108, %c0_109], %95 {strides = array<i32>} : memref<256x8xf32, #tpu.memory_space<vmem>>, vector<256x8xf32>,
    %c0_110 = arith.constant 0 : index
    %c0_111 = arith.constant 0 : index
    %97 = vector.load %arg10[%c0_110, %c0_111] : memref<256x8xf32, #tpu.memory_space<vmem>>, vector<256x8xf32>
    %c0_112 = arith.constant 0 : index
    %c0_113 = arith.constant 0 : index
    %98 = vector.load %arg5[%c0_112, %c0_113] : memref<1x8xf32, #tpu.memory_space<vmem>>, vector<1x8xf32>
    %99 = vector.broadcast %98 : vector<1x8xf32> to vector<256x8xf32>
    %100 = arith.addf %97, %99 : vector<256x8xf32>
    %cst_114 = arith.constant 0.000000e+00 : f32
    %101 = vector.broadcast %cst_114 : f32 to vector<256x8xf32>
    %102 = arith.maximumf %100, %101 : vector<256x8xf32>
    %103 = arith.truncf %102 : vector<256x8xf32> to vector<256x8xbf16>
    %c0_115 = arith.constant 0 : index
    %c0_116 = arith.constant 0 : index
    %104 = vector.load %arg6[%c0_115, %c0_116] : memref<8x32xbf16, #tpu.memory_space<vmem>>, vector<8x32xbf16>
    %cst_117 = arith.constant dense<0.000000e+00> : vector<256x32xf32>
    %105 = tpu.matmul %103, %104, %cst_117 {dimension_numbers = #tpu.dot_dimension_numbers<[1], [0], [0], [1], [0, 0, 1, 1], [], []>} : vector<256x8xbf16>, vector<8x32xbf16>, vector<256x32xf32> -> vector<256x32xf32>
    %c0_118 = arith.constant 0 : index
    %c0_119 = arith.constant 0 : index
    %106 = vector.load %arg7[%c0_118, %c0_119] : memref<1x32xf32, #tpu.memory_space<vmem>>, vector<1x32xf32>
    %107 = vector.broadcast %106 : vector<1x32xf32> to vector<256x32xf32>
    %108 = arith.addf %105, %107 : vector<256x32xf32>
    %109 = arith.addf %108, %1 : vector<256x32xf32>
    %cst_120 = arith.constant 0.000000e+00 : f32
    %110 = vector.broadcast %cst_120 : f32 to vector<256x32xf32>
    %111 = arith.maximumf %109, %110 : vector<256x32xf32>
    %c0_121 = arith.constant 0 : index
    %c0_122 = arith.constant 0 : index
    %c0_123 = arith.constant 0 : index
    %112 = vector.load %arg8[%c0_121, %c0_122, %c0_123] : memref<1x256x32xf32, #tpu.memory_space<vmem>>, vector<1x256x32xf32>
    %113 = vector.shape_cast %112 : vector<1x256x32xf32> to vector<256x32xf32>
    %114 = vector.shape_cast %111 : vector<256x32xf32> to vector<1x256x32xf32>
    tpu.vector_store %arg8[%c0_121, %c0_122, %c0_123], %114 {strides = array<i32>} : memref<1x256x32xf32, #tpu.memory_space<vmem>>, vector<1x256x32xf32>,
    return
  }
  func.func @transform_0(%arg0: i32) -> (i32, i32, i32) {
    %c0_i32 = arith.constant 0 : i32
    %c0_i32_0 = arith.constant 0 : i32
    %c0_i32_1 = arith.constant 0 : i32
    return %arg0, %c0_i32, %c0_i32_0 : i32, i32, i32
  }
  func.func @transform_1(%arg0: i32) -> (i32, i32) {
    %c0_i32 = arith.constant 0 : i32
    %c0_i32_0 = arith.constant 0 : i32
    %c0_i32_1 = arith.constant 0 : i32
    return %c0_i32, %c0_i32_0 : i32, i32
  }
  func.func @transform_2(%arg0: i32) -> (i32, i32) {
    %c0_i32 = arith.constant 0 : i32
    %c0_i32_0 = arith.constant 0 : i32
    %c0_i32_1 = arith.constant 0 : i32
    return %c0_i32, %c0_i32_0 : i32, i32
  }
  func.func @transform_3(%arg0: i32) -> (i32, i32, i32) {
    %c0_i32 = arith.constant 0 : i32
    %c0_i32_0 = arith.constant 0 : i32
    %c0_i32_1 = arith.constant 0 : i32
    %c0_i32_2 = arith.constant 0 : i32
    return %c0_i32, %c0_i32_0, %c0_i32_1 : i32, i32, i32
  }
  func.func @transform_4(%arg0: i32) -> (i32, i32) {
    %c0_i32 = arith.constant 0 : i32
    %c0_i32_0 = arith.constant 0 : i32
    %c0_i32_1 = arith.constant 0 : i32
    return %c0_i32, %c0_i32_0 : i32, i32
  }
  func.func @transform_5(%arg0: i32) -> (i32, i32) {
    %c0_i32 = arith.constant 0 : i32
    %c0_i32_0 = arith.constant 0 : i32
    %c0_i32_1 = arith.constant 0 : i32
    return %c0_i32, %c0_i32_0 : i32, i32
  }
  func.func @transform_6(%arg0: i32) -> (i32, i32) {
    %c0_i32 = arith.constant 0 : i32
    %c0_i32_0 = arith.constant 0 : i32
    %c0_i32_1 = arith.constant 0 : i32
    return %c0_i32, %c0_i32_0 : i32, i32
  }
  func.func @transform_7(%arg0: i32) -> (i32, i32, i32) {
    %c0_i32 = arith.constant 0 : i32
    %c0_i32_0 = arith.constant 0 : i32
    %c0_i32_1 = arith.constant 0 : i32
    return %arg0, %c0_i32, %c0_i32_0 : i32, i32, i32
  }
}

</mosaic_0001>

<llo_original>
// kernel: bottleneck_forward.1
$region0: #{bottleneck_forward.1}
  #allocation0 [shape = 'u32[]', space=smem, size = 0x4, offset = 0x4, fixed_abs, tag = 'smem constant byte address 0x4 - core index']
  #allocation1 [shape = 'u32[144,128]{1,0:T(1,128)}', space=vmem, size = 0x12000, scoped, tag = 'internal scratch']
  #allocation2 [shape = 'f32[18,32,8]{2,1,0:T(8,128)}', space=vmem, size = 0x48000, scoped, tag = 'scratch operand']
  #allocation3 [shape = 'f32[256,8]{1,0:T(8,128)}', space=vmem, size = 0x20000, scoped, tag = 'scratch operand']
  %s0 = inlined_call_operand.hbm [shape: f32[2,256,32], index: 0, kind: input, shape index: {}]
  %s1 = inlined_call_operand.vmem [shape: bf16[32,8], index: 1, kind: input, shape index: {}]
  %s2 = inlined_call_operand.vmem [shape: f32[1,8], index: 2, kind: input, shape index: {}]
  %s3 = inlined_call_operand.vmem [shape: bf16[9,8,8], index: 3, kind: input, shape index: {}]
  %s4 = inlined_call_operand.vmem [shape: f32[1,8], index: 4, kind: input, shape index: {}]
  %s5 = inlined_call_operand.vmem [shape: bf16[8,32], index: 5, kind: input, shape index: {}]
  %s6 = inlined_call_operand.vmem [shape: f32[1,32], index: 6, kind: input, shape index: {}]
  %s7 = inlined_call_operand.hbm [shape: f32[2,256,32], index: 7, kind: output, shape index: {}]
  %s8 = sld [smem:[#allocation0]]
  $region65: #{bottleneck_forward.1} parent=0
    _
  %s10 = ssub.s32 1, %s8
  %s11 = scalar_select 0, %s10, %s8
  $region1: #{bottleneck_forward.1} parent=0
    #allocation4 [shape = 'u8[262144]{0}', space=vmem, size = 0x40000, scoped, tag = 'input window, operand 0']
    #allocation5 [shape = 's32[2]{0}', space=sflag, size = 0x8, scoped, tag = 'scoped memory for bottleneck_forward.1']
    #allocation6 [shape = 's32[2]{0}', space=sflag, size = 0x8, scoped, tag = 'scoped memory for bottleneck_forward.1']
    #allocation7 [shape = 'u8[262144]{0}', space=vmem, size = 0x40000, scoped, tag = 'output window, operand 0']
    %12 = vsyncpa [#allocation5], 0
    %s13 = scalar_lea.sflag [#allocation5], 1
    %14 = vsyncpa %s13, 0
    %15 = vsyncpa [#allocation6], 0
    %s16 = scalar_lea.sflag [#allocation6], 1
    %17 = vsyncpa %s16, 0
    loop: start=0, step=1, limit=4
    $region2: #{bottleneck_forward.1} parent=1 // loop_pre_header
      _
    $region3: #{bottleneck_forward.1} parent=1 // loop_header
      %s19 = sphi 0, %s23
      %p20 = scmp.ge.s32.totalorder %s19, 4
      %s29 = sphi 0, %s31
      %s32 = sphi 0, %s29
      %s33 = sphi 0, %s32
      %s49 = sphi 0, %s33
      %s53 = sphi 0, %s53
      %s55 = sphi 0, %s53
      %s56 = sphi 0, %s55
      %s70 = sphi 0, %s56
      %s74 = sphi 0, %s74
      %s76 = sphi 0, %s74
      %s77 = sphi 0, %s76
      %s91 = sphi 0, %s77
      %s95 = sphi 0, %s95
      %s97 = sphi 0, %s95
      %s98 = sphi 0, %s97
      %s112 = sphi 0, %s98
      %s116 = sphi 0, %s116
      %s118 = sphi 0, %s116
      %s119 = sphi 0, %s118
      %s133 = sphi 0, %s119
      %s137 = sphi 0, %s137
      %s139 = sphi 0, %s137
      %s140 = sphi 0, %s139
      %s154 = sphi 0, %s140
      %s158 = sphi 0, %s158
      %s160 = sphi 0, %s158
      %s161 = sphi 0, %s160
      %s175 = sphi 0, %s161
      %s181 = sphi 0, %s183
      %s184 = sphi 0, %s181
      %s185 = sphi 0, %s184
      %s201 = sphi 0, %s185
    $region4: #{bottleneck_forward.1} parent=1 // loop_header_branch
      %22 = sbr.rel (%p20) target = $region8
    $region5: #{bottleneck_forward.1} parent=1 // loop_body
      %s24 = ssub.s32 %s19, 1
      %s25 = ssub.s32 %s19, 2
      %s26 = sadd.s32 %s19, 1
      %s27 = ssub.s32 %s19, %s26
      %p28 = scmp.eq.s32.totalorder %s27, 0
      %s30 = sadd.s32 %s29, 1
      %s31 = scalar_select %p28, %s29, %s30
      %p34 = pneg %p28
      %p35 = scmp.eq.s32.totalorder %s19, 1
      %p36 = por %p34, %p35
      %p37 = scmp.ne.s32.totalorder %s29, %s32
      %p38 = scmp.eq.s32.totalorder %s19, 0
      %p39 = por %p37, %p38
      %p40 = scmp.ne.s32.totalorder %s29, %s32
      %p41 = scmp.eq.s32.totalorder %s24, 1
      %p42 = por %p40, %p41
      %p43 = scmp.ne.s32.totalorder %s32, %s33
      %p44 = scmp.eq.s32.totalorder %s24, 0
      %p45 = por %p43, %p44
      %p46 = scmp.ne.s32.totalorder %s32, %s33
      %p47 = scmp.eq.s32.totalorder %s25, 1
      %p48 = por %p46, %p47
      %p50 = scmp.ne.s32.totalorder %s33, %s49
      %p51 = scmp.eq.s32.totalorder %s25, 0
      %p52 = por %p50, %p51
      %s54 = sadd.s32 %s53, 1
      %p57 = scmp.eq.s32.totalorder %s19, 1
      %p58 = scmp.ne.s32.totalorder %s53, %s55
      %p59 = scmp.eq.s32.totalorder %s19, 0
      %p60 = por %p58, %p59
      %p61 = scmp.ne.s32.totalorder %s53, %s55
      %p62 = scmp.eq.s32.totalorder %s24, 1
      %p63 = por %p61, %p62
      %p64 = scmp.ne.s32.totalorder %s55, %s56
      %p65 = scmp.eq.s32.totalorder %s24, 0
      %p66 = por %p64, %p65
      %p67 = scmp.ne.s32.totalorder %s55, %s56
      %p68 = scmp.eq.s32.totalorder %s25, 1
      %p69 = por %p67, %p68
      %p71 = scmp.ne.s32.totalorder %s56, %s70
      %p72 = scmp.eq.s32.totalorder %s25, 0
      %p73 = por %p71, %p72
      %s75 = sadd.s32 %s74, 1
      %p78 = scmp.eq.s32.totalorder %s19, 1
      %p79 = scmp.ne.s32.totalorder %s74, %s76
      %p80 = scmp.eq.s32.totalorder %s19, 0
      %p81 = por %p79, %p80
      %p82 = scmp.ne.s32.totalorder %s74, %s76
      %p83 = scmp.eq.s32.totalorder %s24, 1
      %p84 = por %p82, %p83
      %p85 = scmp.ne.s32.totalorder %s76, %s77
      %p86 = scmp.eq.s32.totalorder %s24, 0
      %p87 = por %p85, %p86
      %p88 = scmp.ne.s32.totalorder %s76, %s77
      %p89 = scmp.eq.s32.totalorder %s25, 1
      %p90 = por %p88, %p89
      %p92 = scmp.ne.s32.totalorder %s77, %s91
      %p93 = scmp.eq.s32.totalorder %s25, 0
      %p94 = por %p92, %p93
      %s96 = sadd.s32 %s95, 1
      %p99 = scmp.eq.s32.totalorder %s19, 1
      %p100 = scmp.ne.s32.totalorder %s95, %s97
      %p101 = scmp.eq.s32.totalorder %s19, 0
      %p102 = por %p100, %p101
      %p103 = scmp.ne.s32.totalorder %s95, %s97
      %p104 = scmp.eq.s32.totalorder %s24, 1
      %p105 = por %p103, %p104
      %p106 = scmp.ne.s32.totalorder %s97, %s98
      %p107 = scmp.eq.s32.totalorder %s24, 0
      %p108 = por %p106, %p107
      %p109 = scmp.ne.s32.totalorder %s97, %s98
      %p110 = scmp.eq.s32.totalorder %s25, 1
      %p111 = por %p109, %p110
      %p113 = scmp.ne.s32.totalorder %s98, %s112
      %p114 = scmp.eq.s32.totalorder %s25, 0
      %p115 = por %p113, %p114
      %s117 = sadd.s32 %s116, 1
      %p120 = scmp.eq.s32.totalorder %s19, 1
      %p121 = scmp.ne.s32.totalorder %s116, %s118
      %p122 = scmp.eq.s32.totalorder %s19, 0
      %p123 = por %p121, %p122
      %p124 = scmp.ne.s32.totalorder %s116, %s118
      %p125 = scmp.eq.s32.totalorder %s24, 1
      %p126 = por %p124, %p125
      %p127 = scmp.ne.s32.totalorder %s118, %s119
      %p128 = scmp.eq.s32.totalorder %s24, 0
      %p129 = por %p127, %p128
      %p130 = scmp.ne.s32.totalorder %s118, %s119
      %p131 = scmp.eq.s32.totalorder %s25, 1
      %p132 = por %p130, %p131
      %p134 = scmp.ne.s32.totalorder %s119, %s133
      %p135 = scmp.eq.s32.totalorder %s25, 0
      %p136 = por %p134, %p135
      %s138 = sadd.s32 %s137, 1
      %p141 = scmp.eq.s32.totalorder %s19, 1
      %p142 = scmp.ne.s32.totalorder %s137, %s139
      %p143 = scmp.eq.s32.totalorder %s19, 0
      %p144 = por %p142, %p143
      %p145 = scmp.ne.s32.totalorder %s137, %s139
      %p146 = scmp.eq.s32.totalorder %s24, 1
      %p147 = por %p145, %p146
      %p148 = scmp.ne.s32.totalorder %s139, %s140
      %p149 = scmp.eq.s32.totalorder %s24, 0
      %p150 = por %p148, %p149
      %p151 = scmp.ne.s32.totalorder %s139, %s140
      %p152 = scmp.eq.s32.totalorder %s25, 1
      %p153 = por %p151, %p152
      %p155 = scmp.ne.s32.totalorder %s140, %s154
      %p156 = scmp.eq.s32.totalorder %s25, 0
      %p157 = por %p155, %p156
      %s159 = sadd.s32 %s158, 1
      %p162 = scmp.eq.s32.totalorder %s19, 1
      %p163 = scmp.ne.s32.totalorder %s158, %s160
      %p164 = scmp.eq.s32.totalorder %s19, 0
      %p165 = por %p163, %p164
      %p166 = scmp.ne.s32.totalorder %s158, %s160
      %p167 = scmp.eq.s32.totalorder %s24, 1
      %p168 = por %p166, %p167
      %p169 = scmp.ne.s32.totalorder %s160, %s161
      %p170 = scmp.eq.s32.totalorder %s24, 0
      %p171 = por %p169, %p170
      %p172 = scmp.ne.s32.totalorder %s160, %s161
      %p173 = scmp.eq.s32.totalorder %s25, 1
      %p174 = por %p172, %p173
      %p176 = scmp.ne.s32.totalorder %s161, %s175
      %p177 = scmp.eq.s32.totalorder %s25, 0
      %p178 = por %p176, %p177
      %s179 = ssub.s32 %s19, %s26
      %p180 = scmp.eq.s32.totalorder %s179, 0
      %s182 = sadd.s32 %s181, 1
      %s183 = scalar_select %p180, %s181, %s182
      %p186 = pneg %p180
      %p187 = scmp.eq.s32.totalorder %s19, 1
      %p188 = por %p186, %p187
      %p189 = scmp.ne.s32.totalorder %s181, %s184
      %p190 = scmp.eq.s32.totalorder %s19, 0
      %p191 = por %p189, %p190
      %p192 = scmp.ne.s32.totalorder %s181, %s184
      %p193 = scmp.eq.s32.totalorder %s24, 1
      %p194 = por %p192, %p193
      %p195 = scmp.ne.s32.totalorder %s184, %s185
      %p196 = scmp.eq.s32.totalorder %s24, 0
      %p197 = por %p195, %p196
      %p198 = scmp.ne.s32.totalorder %s184, %s185
      %p199 = scmp.eq.s32.totalorder %s25, 1
      %p200 = por %p198, %p199
      %p202 = scmp.ne.s32.totalorder %s185, %s201
      %p203 = scmp.eq.s32.totalorder %s25, 0
      %p204 = por %p202, %p203
      %p205 = scmp.le.s32.totalorder 1, %s19
      %p206 = scmp.lt.s32.totalorder %s19, 3
      %p207 = pnand %p205, %p206
      %p208 = pneg %p207
      // Predicated region
      $region9: #{bottleneck_forward.1} parent=5 // pred_check
        _
      $region10: #{bottleneck_forward.1} parent=5 // pred_check_branch
        %210 = sbr.rel (%p207) target = $region12
      $region11: #{bottleneck_forward.1} parent=5 // pred_region
        %s211 = ssub.s32 %s19, 1
        // Predicated region
        $region13: #{bottleneck_forward.1} parent=11 // pred_check
          %p212 = pneg %p66
        $region14: #{bottleneck_forward.1} parent=11 // pred_check_branch
          %214 = sbr.rel (%p212) target = $region16
        $region15: #{bottleneck_forward.1} parent=11 // pred_region
          _
        $region16: #{bottleneck_forward.1} parent=11 // pred_fallthru
          _
        // Predicated region
        $region17: #{bottleneck_forward.1} parent=11 // pred_check
          %p215 = pneg %p87
        $region18: #{bottleneck_forward.1} parent=11 // pred_check_branch
          %217 = sbr.rel (%p215) target = $region20
        $region19: #{bottleneck_forward.1} parent=11 // pred_region
          _
        $region20: #{bottleneck_forward.1} parent=11 // pred_fallthru
          _
        // Predicated region
        $region21: #{bottleneck_forward.1} parent=11 // pred_check
          %p218 = pneg %p108
        $region22: #{bottleneck_forward.1} parent=11 // pred_check_branch
          %220 = sbr.rel (%p218) target = $region24
        $region23: #{bottleneck_forward.1} parent=11 // pred_region
          _
        $region24: #{bottleneck_forward.1} parent=11 // pred_fallthru
          _
        // Predicated region
        $region25: #{bottleneck_forward.1} parent=11 // pred_check
          %p221 = pneg %p129
        $region26: #{bottleneck_forward.1} parent=11 // pred_check_branch
          %223 = sbr.rel (%p221) target = $region28
        $region27: #{bottleneck_forward.1} parent=11 // pred_region
          _
        $region28: #{bottleneck_forward.1} parent=11 // pred_fallthru
          _
        // Predicated region
        $region29: #{bottleneck_forward.1} parent=11 // pred_check
          %p224 = pneg %p150
        $region30: #{bottleneck_forward.1} parent=11 // pred_check_branch
          %226 = sbr.rel (%p224) target = $region32
        $region31: #{bottleneck_forward.1} parent=11 // pred_region
          _
        $region32: #{bottleneck_forward.1} parent=11 // pred_fallthru
          _
        // Predicated region
        $region33: #{bottleneck_forward.1} parent=11 // pred_check
          %p227 = pneg %p171
        $region34: #{bottleneck_forward.1} parent=11 // pred_check_branch
          %229 = sbr.rel (%p227) target = $region36
        $region35: #{bottleneck_forward.1} parent=11 // pred_region
          _
        $region36: #{bottleneck_forward.1} parent=11 // pred_fallthru
          _
      $region12: #{bottleneck_forward.1} parent=5 // pred_fallthru
        _
      %p230 = scmp.lt.s32.totalorder %s19, 2
      // Predicated region
      $region37: #{bottleneck_forward.1} parent=5 // pred_check
        %p231 = pneg %p230
      $region38: #{bottleneck_forward.1} parent=5 // pred_check_branch
        %233 = sbr.rel (%p231) target = $region40
      $region39: #{bottleneck_forward.1} parent=5 // pred_region
        // Predicated region
        $region41: #{bottleneck_forward.1} parent=39 // pred_check
          %p234 = pneg %p39
        $region42: #{bottleneck_forward.1} parent=39 // pred_check_branch
          %236 = sbr.rel (%p234) target = $region44
        $region43: #{bottleneck_forward.1} parent=39 // pred_region
          %s237 = sand.u32 %s29, 1
          %s238 = scalar_lea.sflag [#allocation5], %s237
          %s239 = sand.u32 %s29, 1
          %s240 = smul.addr %s239, 256
          %s241 = scalar_lea.vmem [#allocation4], %s240
          %s243 = ssub.s32 4096, 4096
          %244 = vsyncadd %s238, %s243
          %s245 = smul.addr %s19, 32
          %s246 = smul.addr %s245, 128
          %s247 = scalar_lea.hbm %s0, %s246
          %s248 = sshll.u32 %s241, 4
          %s249 = int_to_ptr.vmem [resolvable:$true] %s248
          %254 = dma.hbm_to_vmem [thread:$0]  %s247, 4096, %s249, %s238, 128, 128, 8
        $region44: #{bottleneck_forward.1} parent=39 // pred_fallthru
          _
      $region40: #{bottleneck_forward.1} parent=5 // pred_fallthru
        _
      %p255 = scmp.le.s32.totalorder 1, %s19
      %p256 = scmp.lt.s32.totalorder %s19, 3
      %p257 = pnand %p255, %p256
      %p258 = pneg %p257
      // Predicated region
      $region45: #{bottleneck_forward.1} parent=5 // pred_check
        _
      $region46: #{bottleneck_forward.1} parent=5 // pred_check_branch
        %260 = sbr.rel (%p257) target = $region48
      $region47: #{bottleneck_forward.1} parent=5 // pred_region
        %s261 = ssub.s32 %s19, 1
        %s262 = sand.u32 %s32, 1
        %s263 = scalar_lea.sflag [#allocation5], %s262
        %s264 = sand.u32 %s32, 1
        %s265 = smul.addr %s264, 256
        %s266 = scalar_lea.vmem [#allocation4], %s265
        // Predicated region
        $region49: #{bottleneck_forward.1} parent=47 // pred_check
          %p267 = pneg %p45
        $region50: #{bottleneck_forward.1} parent=47 // pred_check_branch
          %269 = sbr.rel (%p267) target = $region52
        $region51: #{bottleneck_forward.1} parent=47 // pred_region
          %270 = dma.done %s263, 4096
        $region52: #{bottleneck_forward.1} parent=47 // pred_fallthru
          _
        %s271 = sand.u32 %s32, 1
        %s272 = scalar_lea.sflag [#allocation5], %s271
        %s273 = sand.u32 %s32, 1
        %s274 = smul.addr %s273, 256
        %s275 = scalar_lea.vmem [#allocation4], %s274
        %p276 = pneg %p45
        %p277 = pneg %p42
        %p278 = pneg %p66
        %p279 = pneg %p63
        %p280 = pneg %p87
        %p281 = pneg %p84
        %p282 = pneg %p108
        %p283 = pneg %p105
        %p284 = pneg %p129
        %p285 = pneg %p126
        %p286 = pneg %p150
        %p287 = pneg %p147
        %p288 = pneg %p171
        %p289 = pneg %p168
        %p290 = pneg %p197
        %p291 = pneg %p194
        %s292 = sand.u32 %s184, 1
        %s293 = scalar_lea.sflag [#allocation6], %s292
        %s294 = sand.u32 %s184, 1
        %s295 = smul.addr %s294, 256
        %s296 = scalar_lea.vmem [#allocation7], %s295
        %v298 = vld [vmem:[%s266] sm:$0xff]
        %v299 = vld [vmem:[%s266 + $0x8] sm:$0xff]
        %v300 = vld [vmem:[%s266 + $0x10] sm:$0xff]
        %v301 = vld [vmem:[%s266 + $0x18] sm:$0xff]
        %v302 = vld [vmem:[%s266 + $0x20] sm:$0xff]
        %v303 = vld [vmem:[%s266 + $0x28] sm:$0xff]
        %v304 = vld [vmem:[%s266 + $0x30] sm:$0xff]
        %v305 = vld [vmem:[%s266 + $0x38] sm:$0xff]
        %v306 = vld [vmem:[%s266 + $0x40] sm:$0xff]
        %v307 = vld [vmem:[%s266 + $0x48] sm:$0xff]
        %v308 = vld [vmem:[%s266 + $0x50] sm:$0xff]
        %v309 = vld [vmem:[%s266 + $0x58] sm:$0xff]
        %v310 = vld [vmem:[%s266 + $0x60] sm:$0xff]
        %v311 = vld [vmem:[%s266 + $0x68] sm:$0xff]
        %v312 = vld [vmem:[%s266 + $0x70] sm:$0xff]
        %v313 = vld [vmem:[%s266 + $0x78] sm:$0xff]
        %v314 = vld [vmem:[%s266 + $0x80] sm:$0xff]
        %v315 = vld [vmem:[%s266 + $0x88] sm:$0xff]
        %v316 = vld [vmem:[%s266 + $0x90] sm:$0xff]
        %v317 = vld [vmem:[%s266 + $0x98] sm:$0xff]
        %v318 = vld [vmem:[%s266 + $0xa0] sm:$0xff]
        %v319 = vld [vmem:[%s266 + $0xa8] sm:$0xff]
        %v320 = vld [vmem:[%s266 + $0xb0] sm:$0xff]
        %v321 = vld [vmem:[%s266 + $0xb8] sm:$0xff]
        %v322 = vld [vmem:[%s266 + $0xc0] sm:$0xff]
        %v323 = vld [vmem:[%s266 + $0xc8] sm:$0xff]
        %v324 = vld [vmem:[%s266 + $0xd0] sm:$0xff]
        %v325 = vld [vmem:[%s266 + $0xd8] sm:$0xff]
        %v326 = vld [vmem:[%s266 + $0xe0] sm:$0xff]
        %v327 = vld [vmem:[%s266 + $0xe8] sm:$0xff]
        %v328 = vld [vmem:[%s266 + $0xf0] sm:$0xff]
        %v329 = vld [vmem:[%s266 + $0xf8] sm:$0xff]
        %v330 = vpack.c.bf16 %v299, %v298
        %v331 = vpack.c.bf16 %v301, %v300
        %v332 = vpack.c.bf16 %v303, %v302
        %v333 = vpack.c.bf16 %v305, %v304
        %v334 = vpack.c.bf16 %v307, %v306
        %v335 = vpack.c.bf16 %v309, %v308
        %v336 = vpack.c.bf16 %v311, %v310
        %v337 = vpack.c.bf16 %v313, %v312
        %v338 = vpack.c.bf16 %v315, %v314
        %v339 = vpack.c.bf16 %v317, %v316
        %v340 = vpack.c.bf16 %v319, %v318
        %v341 = vpack.c.bf16 %v321, %v320
        %v342 = vpack.c.bf16 %v323, %v322
        %v343 = vpack.c.bf16 %v325, %v324
        %v344 = vpack.c.bf16 %v327, %v326
        %v345 = vpack.c.bf16 %v329, %v328
        %v346 = vld [vmem:[%s1] sm:$0xf]
        %v347 = vld [vmem:[%s1 + $0x4] sm:$0xf]
        %v348 = vld [vmem:[%s1 + $0x8] sm:$0xf]
        %v349 = vld [vmem:[%s1 + $0xc] sm:$0xf]
        %v350 = vld [vmem:[%s2] sm:$0x1]
        %v352 = vlaneseq
        %v353 = vshrl.u32 %v352, 7
        %v354 = vsub.s32 0, %v353
        %v355 = vrot.slane %v350, %v354
        %v361 = vunpack.c.l.b16 %v346
        %v362 = vunpack.c.l.b16 %v347
        %v363 = vunpack.c.l.b16 %v348
        %v364 = vunpack.c.l.b16 %v349
        %v365 = vpack.c.b16 %v362, %v361
        %v366 = vpack.c.b16 %v364, %v363
        %vm369 = vcmask 261120
        %v371 = vsel %vm369, %v330, 0
        %v374 = vsel %vm369, %v331, 0
        %v377 = vsel %vm369, %v332, 0
        %v380 = vsel %vm369, %v333, 0
        %v383 = vsel %vm369, %v334, 0
        %v386 = vsel %vm369, %v335, 0
        %v389 = vsel %vm369, %v336, 0
        %v392 = vsel %vm369, %v337, 0
        %v395 = vsel %vm369, %v338, 0
        %v398 = vsel %vm369, %v339, 0
        %v401 = vsel %vm369, %v340, 0
        %v404 = vsel %vm369, %v341, 0
        %v407 = vsel %vm369, %v342, 0
        %v410 = vsel %vm369, %v343, 0
        %v413 = vsel %vm369, %v344, 0
        %v416 = vsel %vm369, %v345, 0
        %418 = vmatprep.subr.bf16.mxu0 0
        %419 = vmatpush1.bf16.msra.mxu0 %v365
        %420 = vmatprep.subr.bf16.mxu0 0
        %421 = vmatpush1.bf16.msra.mxu0 %v366
        %422 = vmatprep.subr.bf16.mxu0 0
        %423 = vmatpush1.bf16.msra.mxu0 0
        %424 = vmatprep.subr.bf16.mxu0 0
        %425 = vmatpush1.bf16.msra.mxu0 0
        %426 = vmatprep.subr.bf16.mxu0 0
        %427 = vmatpush1.bf16.msra.mxu0 0
        %428 = vmatprep.subr.bf16.mxu0 0
        %429 = vmatpush1.bf16.msra.mxu0 0
        %430 = vmatprep.subr.bf16.mxu0 0
        %431 = vmatpush1.bf16.msra.mxu0 0
        %432 = vmatprep.subr.bf16.mxu0 0
        %433 = vmatpush1.bf16.msra.mxu0 0
        %434 = vmatprep.subr.bf16.mxu0 0
        %435 = vmatpush1.bf16.msra.mxu0 0
        %436 = vmatprep.subr.bf16.mxu0 0
        %437 = vmatpush1.bf16.msra.mxu0 0
        %438 = vmatprep.subr.bf16.mxu0 0
        %439 = vmatpush1.bf16.msra.mxu0 0
        %440 = vmatprep.subr.bf16.mxu0 0
        %441 = vmatpush1.bf16.msra.mxu0 0
        %442 = vmatprep.subr.bf16.mxu0 0
        %443 = vmatpush1.bf16.msra.mxu0 0
        %444 = vmatprep.subr.bf16.mxu0 0
        %445 = vmatpush1.bf16.msra.mxu0 0
        %446 = vmatprep.subr.bf16.mxu0 0
        %447 = vmatpush1.bf16.msra.mxu0 0
        %448 = vmatprep.subr.bf16.mxu0 0
        %449 = vmatpush1.bf16.msra.mxu0 0
        %450 = vmatprep.mubr.bf16.mxu0 0
        %451 = vmatmul.mubr.bf16.gmra.mrb[0].mxu0 %v371
        %v452 = vpop.f32.mrb[0].mxu0
        %v453 = vadd.f32 %v355, %v452
        %v454 = vpop.f32.mrb[0].mxu0
        %v455 = vpop.f32.mrb[0].mxu0
        %v456 = vadd.f32 %v355, %v455
        %v457 = vpop.f32.mrb[0].mxu0
        %458 = vmatprep.mubr.bf16.mxu0 0
        %459 = vmatmul.mubr.bf16.gmra.mrb[0].mxu0 %v374
        %v460 = vpop.f32.mrb[0].mxu0
        %v461 = vadd.f32 %v355, %v460
        %v462 = vpop.f32.mrb[0].mxu0
        %v463 = vpop.f32.mrb[0].mxu0
        %v464 = vadd.f32 %v355, %v463
        %v465 = vpop.f32.mrb[0].mxu0
        %466 = vmatprep.mubr.bf16.mxu0 0
        %467 = vmatmul.mubr.bf16.gmra.mrb[0].mxu0 %v377
        %v468 = vpop.f32.mrb[0].mxu0
        %v469 = vadd.f32 %v355, %v468
        %v470 = vpop.f32.mrb[0].mxu0
        %v471 = vpop.f32.mrb[0].mxu0
        %v472 = vadd.f32 %v355, %v471
        %v473 = vpop.f32.mrb[0].mxu0
        %474 = vmatprep.mubr.bf16.mxu0 0
        %475 = vmatmul.mubr.bf16.gmra.mrb[0].mxu0 %v380
        %v476 = vpop.f32.mrb[0].mxu0
        %v477 = vadd.f32 %v355, %v476
        %v478 = vpop.f32.mrb[0].mxu0
        %v479 = vpop.f32.mrb[0].mxu0
        %v480 = vadd.f32 %v355, %v479
        %v481 = vpop.f32.mrb[0].mxu0
        %482 = vmatprep.mubr.bf16.mxu0 0
        %483 = vmatmul.mubr.bf16.gmra.mrb[0].mxu0 %v383
        %v484 = vpop.f32.mrb[0].mxu0
        %v485 = vadd.f32 %v355, %v484
        %v486 = vpop.f32.mrb[0].mxu0
        %v487 = vpop.f32.mrb[0].mxu0
        %v488 = vadd.f32 %v355, %v487
        %v489 = vpop.f32.mrb[0].mxu0
        %490 = vmatprep.mubr.bf16.mxu0 0
        %491 = vmatmul.mubr.bf16.gmra.mrb[0].mxu0 %v386
        %v492 = vpop.f32.mrb[0].mxu0
        %v493 = vadd.f32 %v355, %v492
        %v494 = vpop.f32.mrb[0].mxu0
        %v495 = vpop.f32.mrb[0].mxu0
        %v496 = vadd.f32 %v355, %v495
        %v497 = vpop.f32.mrb[0].mxu0
        %498 = vmatprep.mubr.bf16.mxu0 0
        %499 = vmatmul.mubr.bf16.gmra.mrb[0].mxu0 %v389
        %v500 = vpop.f32.mrb[0].mxu0
        %v501 = vadd.f32 %v355, %v500
        %v502 = vpop.f32.mrb[0].mxu0
        %v503 = vpop.f32.mrb[0].mxu0
        %v504 = vadd.f32 %v355, %v503
        %v505 = vpop.f32.mrb[0].mxu0
        %506 = vmatprep.mubr.bf16.mxu0 0
        %507 = vmatmul.mubr.bf16.gmra.mrb[0].mxu0 %v392
        %v508 = vpop.f32.mrb[0].mxu0
        %v509 = vadd.f32 %v355, %v508
        %v510 = vpop.f32.mrb[0].mxu0
        %v511 = vpop.f32.mrb[0].mxu0
        %v512 = vadd.f32 %v355, %v511
        %v513 = vpop.f32.mrb[0].mxu0
        %514 = vmatprep.mubr.bf16.mxu0 0
        %515 = vmatmul.mubr.bf16.gmra.mrb[0].mxu0 %v395
        %v516 = vpop.f32.mrb[0].mxu0
        %v517 = vadd.f32 %v355, %v516
        %v518 = vpop.f32.mrb[0].mxu0
        %v519 = vpop.f32.mrb[0].mxu0
        %v520 = vadd.f32 %v355, %v519
        %v521 = vpop.f32.mrb[0].mxu0
        %522 = vmatprep.mubr.bf16.mxu0 0
        %523 = vmatmul.mubr.bf16.gmra.mrb[0].mxu0 %v398
        %v524 = vpop.f32.mrb[0].mxu0
        %v525 = vadd.f32 %v355, %v524
        %v526 = vpop.f32.mrb[0].mxu0
        %v527 = vpop.f32.mrb[0].mxu0
        %v528 = vadd.f32 %v355, %v527
        %v529 = vpop.f32.mrb[0].mxu0
        %530 = vmatprep.mubr.bf16.mxu0 0
        %531 = vmatmul.mubr.bf16.gmra.mrb[0].mxu0 %v401
        %v532 = vpop.f32.mrb[0].mxu0
        %v533 = vadd.f32 %v355, %v532
        %v534 = vpop.f32.mrb[0].mxu0
        %v535 = vpop.f32.mrb[0].mxu0
        %v536 = vadd.f32 %v355, %v535
        %v537 = vpop.f32.mrb[0].mxu0
        %538 = vmatprep.mubr.bf16.mxu0 0
        %539 = vmatmul.mubr.bf16.gmra.mrb[0].mxu0 %v404
        %v540 = vpop.f32.mrb[0].mxu0
        %v541 = vadd.f32 %v355, %v540
        %v542 = vpop.f32.mrb[0].mxu0
        %v543 = vpop.f32.mrb[0].mxu0
        %v544 = vadd.f32 %v355, %v543
        %v545 = vpop.f32.mrb[0].mxu0
        %546 = vmatprep.mubr.bf16.mxu0 0
        %547 = vmatmul.mubr.bf16.gmra.mrb[0].mxu0 %v407
        %v548 = vpop.f32.mrb[0].mxu0
        %v549 = vadd.f32 %v355, %v548
        %v550 = vpop.f32.mrb[0].mxu0
        %v551 = vpop.f32.mrb[0].mxu0
        %v552 = vadd.f32 %v355, %v551
        %v553 = vpop.f32.mrb[0].mxu0
        %554 = vmatprep.mubr.bf16.mxu0 0
        %555 = vmatmul.mubr.bf16.gmra.mrb[0].mxu0 %v410
        %v556 = vpop.f32.mrb[0].mxu0
        %v557 = vadd.f32 %v355, %v556
        %v558 = vpop.f32.mrb[0].mxu0
        %v559 = vpop.f32.mrb[0].mxu0
        %v560 = vadd.f32 %v355, %v559
        %v561 = vpop.f32.mrb[0].mxu0
        %562 = vmatprep.mubr.bf16.mxu0 0
        %563 = vmatmul.mubr.bf16.gmra.mrb[0].mxu0 %v413
        %v564 = vpop.f32.mrb[0].mxu0
        %v565 = vadd.f32 %v355, %v564
        %v566 = vpop.f32.mrb[0].mxu0
        %v567 = vpop.f32.mrb[0].mxu0
        %v568 = vadd.f32 %v355, %v567
        %v569 = vpop.f32.mrb[0].mxu0
        %570 = vmatprep.mubr.bf16.mxu0 0
        %571 = vmatmul.mubr.bf16.gmra.mrb[0].mxu0 %v416
        %v572 = vpop.f32.mrb[0].mxu0
        %v573 = vadd.f32 %v355, %v572
        %v574 = vpop.f32.mrb[0].mxu0
        %v575 = vpop.f32.mrb[0].mxu0
        %v576 = vadd.f32 %v355, %v575
        %v577 = vpop.f32.mrb[0].mxu0
        %578 = vdwg.mxu0
        %v579 = vmax.f32 %v453, 0.0
        %v580 = vmax.f32 %v456, 0.0
        %v581 = vmax.f32 %v461, 0.0
        %v582 = vmax.f32 %v464, 0.0
        %v583 = vmax.f32 %v469, 0.0
        %v584 = vmax.f32 %v472, 0.0
        %v585 = vmax.f32 %v477, 0.0
        %v586 = vmax.f32 %v480, 0.0
        %v587 = vmax.f32 %v485, 0.0
        %v588 = vmax.f32 %v488, 0.0
        %v589 = vmax.f32 %v493, 0.0
        %v590 = vmax.f32 %v496, 0.0
        %v591 = vmax.f32 %v501, 0.0
        %v592 = vmax.f32 %v504, 0.0
        %v593 = vmax.f32 %v509, 0.0
        %v594 = vmax.f32 %v512, 0.0
        %v595 = vmax.f32 %v517, 0.0
        %v596 = vmax.f32 %v520, 0.0
        %v597 = vmax.f32 %v525, 0.0
        %v598 = vmax.f32 %v528, 0.0
        %v599 = vmax.f32 %v533, 0.0
        %v600 = vmax.f32 %v536, 0.0
        %v601 = vmax.f32 %v541, 0.0
        %v602 = vmax.f32 %v544, 0.0
        %v603 = vmax.f32 %v549, 0.0
        %v604 = vmax.f32 %v552, 0.0
        %v605 = vmax.f32 %v557, 0.0
        %v606 = vmax.f32 %v560, 0.0
        %v607 = vmax.f32 %v565, 0.0
        %v608 = vmax.f32 %v568, 0.0
        %v609 = vmax.f32 %v573, 0.0
        %v610 = vmax.f32 %v576, 0.0
        %vm611 = vcmask 64512
        %612 = vst.msk [vmem:[#allocation2] sm:$0xff] %vm611, 0.0
        %613 = vst.msk [vmem:[#allocation2 + $0x8] sm:$0xff] %vm611, 0.0
        %614 = vst.msk [vmem:[#allocation2 + $0x10] sm:$0xff] %vm611, 0.0
        %615 = vst.msk [vmem:[#allocation2 + $0x18] sm:$0xff] %vm611, 0.0
        %s616 = scalar_lea.vmem [#allocation2], 544
        %617 = vst.msk [vmem:[%s616] sm:$0xff] %vm611, 0.0
        %618 = vst.msk [vmem:[%s616 + $0x8] sm:$0xff] %vm611, 0.0
        %619 = vst.msk [vmem:[%s616 + $0x10] sm:$0xff] %vm611, 0.0
        %620 = vst.msk [vmem:[%s616 + $0x18] sm:$0xff] %vm611, 0.0
        %621 = vst.msk [vmem:[#allocation2] sm:$0xff] %vm611, 0.0
        %622 = vst.msk [vmem:[#allocation2 + $0x20] sm:$0xff] %vm611, 0.0
        %623 = vst.msk [vmem:[#allocation2 + $0x40] sm:$0xff] %vm611, 0.0
        %624 = vst.msk [vmem:[#allocation2 + $0x60] sm:$0xff] %vm611, 0.0
        %625 = vst.msk [vmem:[#allocation2 + $0x80] sm:$0xff] %vm611, 0.0
        %626 = vst.msk [vmem:[#allocation2 + $0xa0] sm:$0xff] %vm611, 0.0
        %627 = vst.msk [vmem:[#allocation2 + $0xc0] sm:$0xff] %vm611, 0.0
        %628 = vst.msk [vmem:[#allocation2 + $0xe0] sm:$0xff] %vm611, 0.0
        %629 = vst.msk [vmem:[#allocation2 + $0x100] sm:$0xff] %vm611, 0.0
        %630 = vst.msk [vmem:[#allocation2 + $0x120] sm:$0xff] %vm611, 0.0
        %631 = vst.msk [vmem:[#allocation2 + $0x140] sm:$0xff] %vm611, 0.0
        %632 = vst.msk [vmem:[#allocation2 + $0x160] sm:$0xff] %vm611, 0.0
        %633 = vst.msk [vmem:[#allocation2 + $0x180] sm:$0xff] %vm611, 0.0
        %634 = vst.msk [vmem:[#allocation2 + $0x1a0] sm:$0xff] %vm611, 0.0
        %635 = vst.msk [vmem:[#allocation2 + $0x1c0] sm:$0xff] %vm611, 0.0
        %636 = vst.msk [vmem:[#allocation2 + $0x1e0] sm:$0xff] %vm611, 0.0
        %637 = vst.msk [vmem:[#allocation2 + $0x200] sm:$0xff] %vm611, 0.0
        %638 = vst.msk [vmem:[#allocation2 + $0x220] sm:$0xff] %vm611, 0.0
        %639 = vst.msk [vmem:[#allocation2 + $0x18] sm:$0xff] %vm611, 0.0
        %640 = vst.msk [vmem:[#allocation2 + $0x38] sm:$0xff] %vm611, 0.0
        %641 = vst.msk [vmem:[#allocation2 + $0x58] sm:$0xff] %vm611, 0.0
        %642 = vst.msk [vmem:[#allocation2 + $0x78] sm:$0xff] %vm611, 0.0
        %643 = vst.msk [vmem:[#allocation2 + $0x98] sm:$0xff] %vm611, 0.0
        %644 = vst.msk [vmem:[#allocation2 + $0xb8] sm:$0xff] %vm611, 0.0
        %645 = vst.msk [vmem:[#allocation2 + $0xd8] sm:$0xff] %vm611, 0.0
        %646 = vst.msk [vmem:[#allocation2 + $0xf8] sm:$0xff] %vm611, 0.0
        %647 = vst.msk [vmem:[#allocation2 + $0x118] sm:$0xff] %vm611, 0.0
        %648 = vst.msk [vmem:[#allocation2 + $0x138] sm:$0xff] %vm611, 0.0
        %649 = vst.msk [vmem:[#allocation2 + $0x158] sm:$0xff] %vm611, 0.0
        %650 = vst.msk [vmem:[#allocation2 + $0x178] sm:$0xff] %vm611, 0.0
        %651 = vst.msk [vmem:[#allocation2 + $0x198] sm:$0xff] %vm611, 0.0
        %652 = vst.msk [vmem:[#allocation2 + $0x1b8] sm:$0xff] %vm611, 0.0
        %653 = vst.msk [vmem:[#allocation2 + $0x1d8] sm:$0xff] %vm611, 0.0
        %654 = vst.msk [vmem:[#allocation2 + $0x1f8] sm:$0xff] %vm611, 0.0
        %655 = vst.msk [vmem:[#allocation2 + $0x218] sm:$0xff] %vm611, 0.0
        %656 = vst.msk [vmem:[#allocation2 + $0x238] sm:$0xff] %vm611, 0.0
        %s657 = scalar_lea.vmem [#allocation2], 32
        %658 = vst.msk [vmem:[%s657 + $0x8] sm:$0xff] %vm611, %v579
        %659 = vst.msk [vmem:[%s657 + $0x10] sm:$0xff] %vm611, %v580
        %660 = vst.msk [vmem:[%s657 + $0x28] sm:$0xff] %vm611, %v581
        %661 = vst.msk [vmem:[%s657 + $0x30] sm:$0xff] %vm611, %v582
        %662 = vst.msk [vmem:[%s657 + $0x48] sm:$0xff] %vm611, %v583
        %663 = vst.msk [vmem:[%s657 + $0x50] sm:$0xff] %vm611, %v584
        %664 = vst.msk [vmem:[%s657 + $0x68] sm:$0xff] %vm611, %v585
        %665 = vst.msk [vmem:[%s657 + $0x70] sm:$0xff] %vm611, %v586
        %666 = vst.msk [vmem:[%s657 + $0x88] sm:$0xff] %vm611, %v587
        %667 = vst.msk [vmem:[%s657 + $0x90] sm:$0xff] %vm611, %v588
        %668 = vst.msk [vmem:[%s657 + $0xa8] sm:$0xff] %vm611, %v589
        %669 = vst.msk [vmem:[%s657 + $0xb0] sm:$0xff] %vm611, %v590
        %670 = vst.msk [vmem:[%s657 + $0xc8] sm:$0xff] %vm611, %v591
        %671 = vst.msk [vmem:[%s657 + $0xd0] sm:$0xff] %vm611, %v592
        %672 = vst.msk [vmem:[%s657 + $0xe8] sm:$0xff] %vm611, %v593
        %673 = vst.msk [vmem:[%s657 + $0xf0] sm:$0xff] %vm611, %v594
        %674 = vst.msk [vmem:[%s657 + $0x108] sm:$0xff] %vm611, %v595
        %675 = vst.msk [vmem:[%s657 + $0x110] sm:$0xff] %vm611, %v596
        %676 = vst.msk [vmem:[%s657 + $0x128] sm:$0xff] %vm611, %v597
        %677 = vst.msk [vmem:[%s657 + $0x130] sm:$0xff] %vm611, %v598
        %678 = vst.msk [vmem:[%s657 + $0x148] sm:$0xff] %vm611, %v599
        %679 = vst.msk [vmem:[%s657 + $0x150] sm:$0xff] %vm611, %v600
        %680 = vst.msk [vmem:[%s657 + $0x168] sm:$0xff] %vm611, %v601
        %681 = vst.msk [vmem:[%s657 + $0x170] sm:$0xff] %vm611, %v602
        %682 = vst.msk [vmem:[%s657 + $0x188] sm:$0xff] %vm611, %v603
        %683 = vst.msk [vmem:[%s657 + $0x190] sm:$0xff] %vm611, %v604
        %684 = vst.msk [vmem:[%s657 + $0x1a8] sm:$0xff] %vm611, %v605
        %685 = vst.msk [vmem:[%s657 + $0x1b0] sm:$0xff] %vm611, %v606
        %686 = vst.msk [vmem:[%s657 + $0x1c8] sm:$0xff] %vm611, %v607
        %687 = vst.msk [vmem:[%s657 + $0x1d0] sm:$0xff] %vm611, %v608
        %688 = vst.msk [vmem:[%s657 + $0x1e8] sm:$0xff] %vm611, %v609
        %689 = vst.msk [vmem:[%s657 + $0x1f0] sm:$0xff] %vm611, %v610
        %v690 = vld [vmem:[#allocation2 + $0x7] sm:$0xff]
        %v691 = vld [vmem:[#allocation2 + $0xf] sm:$0xff]
        %v692 = vld [vmem:[#allocation2 + $0x27] sm:$0xff]
        %v693 = vld [vmem:[#allocation2 + $0x2f] sm:$0xff]
        %v694 = vld [vmem:[#allocation2 + $0x47] sm:$0xff]
        %v695 = vld [vmem:[#allocation2 + $0x4f] sm:$0xff]
        %v696 = vld [vmem:[#allocation2 + $0x67] sm:$0xff]
        %v697 = vld [vmem:[#allocation2 + $0x6f] sm:$0xff]
        %v698 = vld [vmem:[#allocation2 + $0x87] sm:$0xff]
        %v699 = vld [vmem:[#allocation2 + $0x8f] sm:$0xff]
        %v700 = vld [vmem:[#allocation2 + $0xa7] sm:$0xff]
        %v701 = vld [vmem:[#allocation2 + $0xaf] sm:$0xff]
        %v702 = vld [vmem:[#allocation2 + $0xc7] sm:$0xff]
        %v703 = vld [vmem:[#allocation2 + $0xcf] sm:$0xff]
        %v704 = vld [vmem:[#allocation2 + $0xe7] sm:$0xff]
        %v705 = vld [vmem:[#allocation2 + $0xef] sm:$0xff]
        %v706 = vld [vmem:[#allocation2 + $0x107] sm:$0xff]
        %v707 = vld [vmem:[#allocation2 + $0x10f] sm:$0xff]
        %v708 = vld [vmem:[#allocation2 + $0x127] sm:$0xff]
        %v709 = vld [vmem:[#allocation2 + $0x12f] sm:$0xff]
        %v710 = vld [vmem:[#allocation2 + $0x147] sm:$0xff]
        %v711 = vld [vmem:[#allocation2 + $0x14f] sm:$0xff]
        %v712 = vld [vmem:[#allocation2 + $0x167] sm:$0xff]
        %v713 = vld [vmem:[#allocation2 + $0x16f] sm:$0xff]
        %v714 = vld [vmem:[#allocation2 + $0x187] sm:$0xff]
        %v715 = vld [vmem:[#allocation2 + $0x18f] sm:$0xff]
        %v716 = vld [vmem:[#allocation2 + $0x1a7] sm:$0xff]
        %v717 = vld [vmem:[#allocation2 + $0x1af] sm:$0xff]
        %v718 = vld [vmem:[#allocation2 + $0x1c7] sm:$0xff]
        %v719 = vld [vmem:[#allocation2 + $0x1cf] sm:$0xff]
        %v720 = vld [vmem:[#allocation2 + $0x1e7] sm:$0xff]
        %v721 = vld [vmem:[#allocation2 + $0x1ef] sm:$0xff]
        %v722 = vpack.c.bf16 %v691, %v690
        %v723 = vpack.c.bf16 %v693, %v692
        %v724 = vpack.c.bf16 %v695, %v694
        %v725 = vpack.c.bf16 %v697, %v696
        %v726 = vpack.c.bf16 %v699, %v698
        %v727 = vpack.c.bf16 %v701, %v700
        %v728 = vpack.c.bf16 %v703, %v702
        %v729 = vpack.c.bf16 %v705, %v704
        %v730 = vpack.c.bf16 %v707, %v706
        %v731 = vpack.c.bf16 %v709, %v708
        %v732 = vpack.c.bf16 %v711, %v710
        %v733 = vpack.c.bf16 %v713, %v712
        %v734 = vpack.c.bf16 %v715, %v714
        %v735 = vpack.c.bf16 %v717, %v716
        %v736 = vpack.c.bf16 %v719, %v718
        %v737 = vpack.c.bf16 %v721, %v720
        %v738 = vld [vmem:[%s3] sm:$0xf]
        %v740 = vsel %vm611, %v722, 0
        %v743 = vsel %vm611, %v723, 0
        %v746 = vsel %vm611, %v724, 0
        %v749 = vsel %vm611, %v725, 0
        %v752 = vsel %vm611, %v726, 0
        %v755 = vsel %vm611, %v727, 0
        %v758 = vsel %vm611, %v728, 0
        %v761 = vsel %vm611, %v729, 0
        %v764 = vsel %vm611, %v730, 0
        %v767 = vsel %vm611, %v731, 0
        %v770 = vsel %vm611, %v732, 0
        %v773 = vsel %vm611, %v733, 0
        %v776 = vsel %vm611, %v734, 0
        %v779 = vsel %vm611, %v735, 0
        %v782 = vsel %vm611, %v736, 0
        %v785 = vsel %vm611, %v737, 0
        %vm787 = vcmask 1043456
        %v789 = vsel %vm787, %v738, 0
        %791 = vmatprep.subr.bf16.mxu0 0
        %792 = vmatpush1.bf16.msra.mxu0 %v789
        %793 = vmatprep.subr.bf16.mxu0 0
        %794 = vmatpush1.bf16.msra.mxu0 0
        %795 = vmatprep.subr.bf16.mxu0 0
        %796 = vmatpush1.bf16.msra.mxu0 0
        %797 = vmatprep.subr.bf16.mxu0 0
        %798 = vmatpush1.bf16.msra.mxu0 0
        %799 = vmatprep.subr.bf16.mxu0 0
        %800 = vmatpush1.bf16.msra.mxu0 0
        %801 = vmatprep.subr.bf16.mxu0 0
        %802 = vmatpush1.bf16.msra.mxu0 0
        %803 = vmatprep.subr.bf16.mxu0 0
        %804 = vmatpush1.bf16.msra.mxu0 0
        %805 = vmatprep.subr.bf16.mxu0 0
        %806 = vmatpush1.bf16.msra.mxu0 0
        %807 = vmatprep.subr.bf16.mxu0 0
        %808 = vmatpush1.bf16.msra.mxu0 0
        %809 = vmatprep.subr.bf16.mxu0 0
        %810 = vmatpush1.bf16.msra.mxu0 0
        %811 = vmatprep.subr.bf16.mxu0 0
        %812 = vmatpush1.bf16.msra.mxu0 0
        %813 = vmatprep.subr.bf16.mxu0 0
        %814 = vmatpush1.bf16.msra.mxu0 0
        %815 = vmatprep.subr.bf16.mxu0 0
        %816 = vmatpush1.bf16.msra.mxu0 0
        %817 = vmatprep.subr.bf16.mxu0 0
        %818 = vmatpush1.bf16.msra.mxu0 0
        %819 = vmatprep.subr.bf16.mxu0 0
        %820 = vmatpush1.bf16.msra.mxu0 0
        %821 = vmatprep.subr.bf16.mxu0 0
        %822 = vmatpush1.bf16.msra.mxu0 0
        %823 = vmatprep.mubr.bf16.mxu0 0
        %824 = vmatmul.mubr.bf16.gmra.mrb[0].mxu0 %v740
        %v825 = vpop.f32.mrb[0].mxu0
        %v826 = vadd.f32 0.0, %v825
        %v827 = vpop.f32.mrb[0].mxu0
        %v828 = vpop.f32.mrb[0].mxu0
        %v829 = vadd.f32 0.0, %v828
        %v830 = vpop.f32.mrb[0].mxu0
        %831 = vmatprep.mubr.bf16.mxu0 0
        %832 = vmatmul.mubr.bf16.gmra.mrb[0].mxu0 %v743
        %v833 = vpop.f32.mrb[0].mxu0
        %v834 = vadd.f32 0.0, %v833
        %v835 = vpop.f32.mrb[0].mxu0
        %v836 = vpop.f32.mrb[0].mxu0
        %v837 = vadd.f32 0.0, %v836
        %v838 = vpop.f32.mrb[0].mxu0
        %839 = vmatprep.mubr.bf16.mxu0 0
        %840 = vmatmul.mubr.bf16.gmra.mrb[0].mxu0 %v746
        %v841 = vpop.f32.mrb[0].mxu0
        %v842 = vadd.f32 0.0, %v841
        %v843 = vpop.f32.mrb[0].mxu0
        %v844 = vpop.f32.mrb[0].mxu0
        %v845 = vadd.f32 0.0, %v844
        %v846 = vpop.f32.mrb[0].mxu0
        %847 = vmatprep.mubr.bf16.mxu0 0
        %848 = vmatmul.mubr.bf16.gmra.mrb[0].mxu0 %v749
        %v849 = vpop.f32.mrb[0].mxu0
        %v850 = vadd.f32 0.0, %v849
        %v851 = vpop.f32.mrb[0].mxu0
        %v852 = vpop.f32.mrb[0].mxu0
        %v853 = vadd.f32 0.0, %v852
        %v854 = vpop.f32.mrb[0].mxu0
        %855 = vmatprep.mubr.bf16.mxu0 0
        %856 = vmatmul.mubr.bf16.gmra.mrb[0].mxu0 %v752
        %v857 = vpop.f32.mrb[0].mxu0
        %v858 = vadd.f32 0.0, %v857
        %v859 = vpop.f32.mrb[0].mxu0
        %v860 = vpop.f32.mrb[0].mxu0
        %v861 = vadd.f32 0.0, %v860
        %v862 = vpop.f32.mrb[0].mxu0
        %863 = vmatprep.mubr.bf16.mxu0 0
        %864 = vmatmul.mubr.bf16.gmra.mrb[0].mxu0 %v755
        %v865 = vpop.f32.mrb[0].mxu0
        %v866 = vadd.f32 0.0, %v865
        %v867 = vpop.f32.mrb[0].mxu0
        %v868 = vpop.f32.mrb[0].mxu0
        %v869 = vadd.f32 0.0, %v868
        %v870 = vpop.f32.mrb[0].mxu0
        %871 = vmatprep.mubr.bf16.mxu0 0
        %872 = vmatmul.mubr.bf16.gmra.mrb[0].mxu0 %v758
        %v873 = vpop.f32.mrb[0].mxu0
        %v874 = vadd.f32 0.0, %v873
        %v875 = vpop.f32.mrb[0].mxu0
        %v876 = vpop.f32.mrb[0].mxu0
        %v877 = vadd.f32 0.0, %v876
        %v878 = vpop.f32.mrb[0].mxu0
        %879 = vmatprep.mubr.bf16.mxu0 0
        %880 = vmatmul.mubr.bf16.gmra.mrb[0].mxu0 %v761
        %v881 = vpop.f32.mrb[0].mxu0
        %v882 = vadd.f32 0.0, %v881
        %v883 = vpop.f32.mrb[0].mxu0
        %v884 = vpop.f32.mrb[0].mxu0
        %v885 = vadd.f32 0.0, %v884
        %v886 = vpop.f32.mrb[0].mxu0
        %887 = vmatprep.mubr.bf16.mxu0 0
        %888 = vmatmul.mubr.bf16.gmra.mrb[0].mxu0 %v764
        %v889 = vpop.f32.mrb[0].mxu0
        %v890 = vadd.f32 0.0, %v889
        %v891 = vpop.f32.mrb[0].mxu0
        %v892 = vpop.f32.mrb[0].mxu0
        %v893 = vadd.f32 0.0, %v892
        %v894 = vpop.f32.mrb[0].mxu0
        %895 = vmatprep.mubr.bf16.mxu0 0
        %896 = vmatmul.mubr.bf16.gmra.mrb[0].mxu0 %v767
        %v897 = vpop.f32.mrb[0].mxu0
        %v898 = vadd.f32 0.0, %v897
        %v899 = vpop.f32.mrb[0].mxu0
        %v900 = vpop.f32.mrb[0].mxu0
        %v901 = vadd.f32 0.0, %v900
        %v902 = vpop.f32.mrb[0].mxu0
        %903 = vmatprep.mubr.bf16.mxu0 0
        %904 = vmatmul.mubr.bf16.gmra.mrb[0].mxu0 %v770
        %v905 = vpop.f32.mrb[0].mxu0
        %v906 = vadd.f32 0.0, %v905
        %v907 = vpop.f32.mrb[0].mxu0
        %v908 = vpop.f32.mrb[0].mxu0
        %v909 = vadd.f32 0.0, %v908
        %v910 = vpop.f32.mrb[0].mxu0
        %911 = vmatprep.mubr.bf16.mxu0 0
        %912 = vmatmul.mubr.bf16.gmra.mrb[0].mxu0 %v773
        %v913 = vpop.f32.mrb[0].mxu0
        %v914 = vadd.f32 0.0, %v913
        %v915 = vpop.f32.mrb[0].mxu0
        %v916 = vpop.f32.mrb[0].mxu0
        %v917 = vadd.f32 0.0, %v916
        %v918 = vpop.f32.mrb[0].mxu0
        %919 = vmatprep.mubr.bf16.mxu0 0
        %920 = vmatmul.mubr.bf16.gmra.mrb[0].mxu0 %v776
        %v921 = vpop.f32.mrb[0].mxu0
        %v922 = vadd.f32 0.0, %v921
        %v923 = vpop.f32.mrb[0].mxu0
        %v924 = vpop.f32.mrb[0].mxu0
        %v925 = vadd.f32 0.0, %v924
        %v926 = vpop.f32.mrb[0].mxu0
        %927 = vmatprep.mubr.bf16.mxu0 0
        %928 = vmatmul.mubr.bf16.gmra.mrb[0].mxu0 %v779
        %v929 = vpop.f32.mrb[0].mxu0
        %v930 = vadd.f32 0.0, %v929
        %v931 = vpop.f32.mrb[0].mxu0
        %v932 = vpop.f32.mrb[0].mxu0
        %v933 = vadd.f32 0.0, %v932
        %v934 = vpop.f32.mrb[0].mxu0
        %935 = vmatprep.mubr.bf16.mxu0 0
        %936 = vmatmul.mubr.bf16.gmra.mrb[0].mxu0 %v782
        %v937 = vpop.f32.mrb[0].mxu0
        %v938 = vadd.f32 0.0, %v937
        %v939 = vpop.f32.mrb[0].mxu0
        %v940 = vpop.f32.mrb[0].mxu0
        %v941 = vadd.f32 0.0, %v940
        %v942 = vpop.f32.mrb[0].mxu0
        %943 = vmatprep.mubr.bf16.mxu0 0
        %944 = vmatmul.mubr.bf16.gmra.mrb[0].mxu0 %v785
        %v945 = vpop.f32.mrb[0].mxu0
        %v946 = vadd.f32 0.0, %v945
        %v947 = vpop.f32.mrb[0].mxu0
        %v948 = vpop.f32.mrb[0].mxu0
        %v949 = vadd.f32 0.0, %v948
        %v950 = vpop.f32.mrb[0].mxu0
        %951 = vdwg.mxu0
        %952 = vst.msk [vmem:[#allocation3] sm:$0xff] %vm611, %v826
        %953 = vst.msk [vmem:[#allocation3 + $0x8] sm:$0xff] %vm611, %v829
        %954 = vst.msk [vmem:[#allocation3 + $0x10] sm:$0xff] %vm611, %v834
        %955 = vst.msk [vmem:[#allocation3 + $0x18] sm:$0xff] %vm611, %v837
        %956 = vst.msk [vmem:[#allocation3 + $0x20] sm:$0xff] %vm611, %v842
        %957 = vst.msk [vmem:[#allocation3 + $0x28] sm:$0xff] %vm611, %v845
        %958 = vst.msk [vmem:[#allocation3 + $0x30] sm:$0xff] %vm611, %v850
        %959 = vst.msk [vmem:[#allocation3 + $0x38] sm:$0xff] %vm611, %v853
        %960 = vst.msk [vmem:[#allocation3 + $0x40] sm:$0xff] %vm611, %v858
        %961 = vst.msk [vmem:[#allocation3 + $0x48] sm:$0xff] %vm611, %v861
        %962 = vst.msk [vmem:[#allocation3 + $0x50] sm:$0xff] %vm611, %v866
        %963 = vst.msk [vmem:[#allocation3 + $0x58] sm:$0xff] %vm611, %v869
        %964 = vst.msk [vmem:[#allocation3 + $0x60] sm:$0xff] %vm611, %v874
        %965 = vst.msk [vmem:[#allocation3 + $0x68] sm:$0xff] %vm611, %v877
        %966 = vst.msk [vmem:[#allocation3 + $0x70] sm:$0xff] %vm611, %v882
        %967 = vst.msk [vmem:[#allocation3 + $0x78] sm:$0xff] %vm611, %v885
        %968 = vst.msk [vmem:[#allocation3 + $0x80] sm:$0xff] %vm611, %v890
        %969 = vst.msk [vmem:[#allocation3 + $0x88] sm:$0xff] %vm611, %v893
        %970 = vst.msk [vmem:[#allocation3 + $0x90] sm:$0xff] %vm611, %v898
        %971 = vst.msk [vmem:[#allocation3 + $0x98] sm:$0xff] %vm611, %v901
        %972 = vst.msk [vmem:[#allocation3 + $0xa0] sm:$0xff] %vm611, %v906
        %973 = vst.msk [vmem:[#allocation3 + $0xa8] sm:$0xff] %vm611, %v909
        %974 = vst.msk [vmem:[#allocation3 + $0xb0] sm:$0xff] %vm611, %v914
        %975 = vst.msk [vmem:[#allocation3 + $0xb8] sm:$0xff] %vm611, %v917
        %976 = vst.msk [vmem:[#allocation3 + $0xc0] sm:$0xff] %vm611, %v922
        %977 = vst.msk [vmem:[#allocation3 + $0xc8] sm:$0xff] %vm611, %v925
        %978 = vst.msk [vmem:[#allocation3 + $0xd0] sm:$0xff] %vm611, %v930
        %979 = vst.msk [vmem:[#allocation3 + $0xd8] sm:$0xff] %vm611, %v933
        %980 = vst.msk [vmem:[#allocation3 + $0xe0] sm:$0xff] %vm611, %v938
        %981 = vst.msk [vmem:[#allocation3 + $0xe8] sm:$0xff] %vm611, %v941
        %982 = vst.msk [vmem:[#allocation3 + $0xf0] sm:$0xff] %vm611, %v946
        %983 = vst.msk [vmem:[#allocation3 + $0xf8] sm:$0xff] %vm611, %v949
        %v984 = vld [vmem:[#allocation2 + $0x8] sm:$0xff]
        %v985 = vld [vmem:[#allocation2 + $0x10] sm:$0xff]
        %v986 = vld [vmem:[#allocation2 + $0x28] sm:$0xff]
        %v987 = vld [vmem:[#allocation2 + $0x30] sm:$0xff]
        %v988 = vld [vmem:[#allocation2 + $0x48] sm:$0xff]
        %v989 = vld [vmem:[#allocation2 + $0x50] sm:$0xff]
        %v990 = vld [vmem:[#allocation2 + $0x68] sm:$0xff]
        %v991 = vld [vmem:[#allocation2 + $0x70] sm:$0xff]
        %v992 = vld [vmem:[#allocation2 + $0x88] sm:$0xff]
        %v993 = vld [vmem:[#allocation2 + $0x90] sm:$0xff]
        %v994 = vld [vmem:[#allocation2 + $0xa8] sm:$0xff]
        %v995 = vld [vmem:[#allocation2 + $0xb0] sm:$0xff]
        %v996 = vld [vmem:[#allocation2 + $0xc8] sm:$0xff]
        %v997 = vld [vmem:[#allocation2 + $0xd0] sm:$0xff]
        %v998 = vld [vmem:[#allocation2 + $0xe8] sm:$0xff]
        %v999 = vld [vmem:[#allocation2 + $0xf0] sm:$0xff]
        %v1000 = vld [vmem:[#allocation2 + $0x108] sm:$0xff]
        %v1001 = vld [vmem:[#allocation2 + $0x110] sm:$0xff]
        %v1002 = vld [vmem:[#allocation2 + $0x128] sm:$0xff]
        %v1003 = vld [vmem:[#allocation2 + $0x130] sm:$0xff]
        %v1004 = vld [vmem:[#allocation2 + $0x148] sm:$0xff]
        %v1005 = vld [vmem:[#allocation2 + $0x150] sm:$0xff]
        %v1006 = vld [vmem:[#allocation2 + $0x168] sm:$0xff]
        %v1007 = vld [vmem:[#allocation2 + $0x170] sm:$0xff]
        %v1008 = vld [vmem:[#allocation2 + $0x188] sm:$0xff]
        %v1009 = vld [vmem:[#allocation2 + $0x190] sm:$0xff]
        %v1010 = vld [vmem:[#allocation2 + $0x1a8] sm:$0xff]
        %v1011 = vld [vmem:[#allocation2 + $0x1b0] sm:$0xff]
        %v1012 = vld [vmem:[#allocation2 + $0x1c8] sm:$0xff]
        %v1013 = vld [vmem:[#allocation2 + $0x1d0] sm:$0xff]
        %v1014 = vld [vmem:[#allocation2 + $0x1e8] sm:$0xff]
        %v1015 = vld [vmem:[#allocation2 + $0x1f0] sm:$0xff]
        %v1016 = vpack.c.bf16 %v985, %v984
        %v1017 = vpack.c.bf16 %v987, %v986
        %v1018 = vpack.c.bf16 %v989, %v988
        %v1019 = vpack.c.bf16 %v991, %v990
        %v1020 = vpack.c.bf16 %v993, %v992
        %v1021 = vpack.c.bf16 %v995, %v994
        %v1022 = vpack.c.bf16 %v997, %v996
        %v1023 = vpack.c.bf16 %v999, %v998
        %v1024 = vpack.c.bf16 %v1001, %v1000
        %v1025 = vpack.c.bf16 %v1003, %v1002
        %v1026 = vpack.c.bf16 %v1005, %v1004
        %v1027 = vpack.c.bf16 %v1007, %v1006
        %v1028 = vpack.c.bf16 %v1009, %v1008
        %v1029 = vpack.c.bf16 %v1011, %v1010
        %v1030 = vpack.c.bf16 %v1013, %v1012
        %v1031 = vpack.c.bf16 %v1015, %v1014
        %s1032 = scalar_lea.vmem %s3, 4
        %v1033 = vld [vmem:[%s1032] sm:$0xf]
        %v1035 = vsel %vm611, %v1016, 0
        %v1038 = vsel %vm611, %v1017, 0
        %v1041 = vsel %vm611, %v1018, 0
        %v1044 = vsel %vm611, %v1019, 0
        %v1047 = vsel %vm611, %v1020, 0
        %v1050 = vsel %vm611, %v1021, 0
        %v1053 = vsel %vm611, %v1022, 0
        %v1056 = vsel %vm611, %v1023, 0
        %v1059 = vsel %vm611, %v1024, 0
        %v1062 = vsel %vm611, %v1025, 0
        %v1065 = vsel %vm611, %v1026, 0
        %v1068 = vsel %vm611, %v1027, 0
        %v1071 = vsel %vm611, %v1028, 0
        %v1074 = vsel %vm611, %v1029, 0
        %v1077 = vsel %vm611, %v1030, 0
        %v1080 = vsel %vm611, %v1031, 0
        %v1083 = vsel %vm787, %v1033, 0
        %1085 = vmatprep.subr.bf16.mxu0 0
        %1086 = vmatpush1.bf16.msra.mxu0 %v1083
        %1087 = vmatprep.subr.bf16.mxu0 0
        %1088 = vmatpush1.bf16.msra.mxu0 0
        %1089 = vmatprep.subr.bf16.mxu0 0
        %1090 = vmatpush1.bf16.msra.mxu0 0
        %1091 = vmatprep.subr.bf16.mxu0 0
        %1092 = vmatpush1.bf16.msra.mxu0 0
        %1093 = vmatprep.subr.bf16.mxu0 0
        %1094 = vmatpush1.bf16.msra.mxu0 0
        %1095 = vmatprep.subr.bf16.mxu0 0
        %1096 = vmatpush1.bf16.msra.mxu0 0
        %1097 = vmatprep.subr.bf16.mxu0 0
        %1098 = vmatpush1.bf16.msra.mxu0 0
        %1099 = vmatprep.subr.bf16.mxu0 0
        %1100 = vmatpush1.bf16.msra.mxu0 0
        %1101 = vmatprep.subr.bf16.mxu0 0
        %1102 = vmatpush1.bf16.msra.mxu0 0
        %1103 = vmatprep.subr.bf16.mxu0 0
        %1104 = vmatpush1.bf16.msra.mxu0 0
        %1105 = vmatprep.subr.bf16.mxu0 0
        %1106 = vmatpush1.bf16.msra.mxu0 0
        %1107 = vmatprep.subr.bf16.mxu0 0
        %1108 = vmatpush1.bf16.msra.mxu0 0
        %1109 = vmatprep.subr.bf16.mxu0 0
        %1110 = vmatpush1.bf16.msra.mxu0 0
        %1111 = vmatprep.subr.bf16.mxu0 0
        %1112 = vmatpush1.bf16.msra.mxu0 0
        %1113 = vmatprep.subr.bf16.mxu0 0
        %1114 = vmatpush1.bf16.msra.mxu0 0
        %1115 = vmatprep.subr.bf16.mxu0 0
        %1116 = vmatpush1.bf16.msra.mxu0 0
        %1117 = vmatprep.mubr.bf16.mxu0 0
        %1118 = vmatmul.mubr.bf16.gmra.mrb[0].mxu0 %v1035
        %v1119 = vpop.f32.mrb[0].mxu0
        %v1120 = vadd.f32 0.0, %v1119
        %v1121 = vpop.f32.mrb[0].mxu0
        %v1122 = vpop.f32.mrb[0].mxu0
        %v1123 = vadd.f32 0.0, %v1122
        %v1124 = vpop.f32.mrb[0].mxu0
        %1125 = vmatprep.mubr.bf16.mxu0 0
        %1126 = vmatmul.mubr.bf16.gmra.mrb[0].mxu0 %v1038
        %v1127 = vpop.f32.mrb[0].mxu0
        %v1128 = vadd.f32 0.0, %v1127
        %v1129 = vpop.f32.mrb[0].mxu0
        %v1130 = vpop.f32.mrb[0].mxu0
        %v1131 = vadd.f32 0.0, %v1130
        %v1132 = vpop.f32.mrb[0].mxu0
        %1133 = vmatprep.mubr.bf16.mxu0 0
        %1134 = vmatmul.mubr.bf16.gmra.mrb[0].mxu0 %v1041
        %v1135 = vpop.f32.mrb[0].mxu0
        %v1136 = vadd.f32 0.0, %v1135
        %v1137 = vpop.f32.mrb[0].mxu0
        %v1138 = vpop.f32.mrb[0].mxu0
        %v1139 = vadd.f32 0.0, %v1138
        %v1140 = vpop.f32.mrb[0].mxu0
        %1141 = vmatprep.mubr.bf16.mxu0 0
        %1142 = vmatmul.mubr.bf16.gmra.mrb[0].mxu0 %v1044
        %v1143 = vpop.f32.mrb[0].mxu0
        %v1144 = vadd.f32 0.0, %v1143
        %v1145 = vpop.f32.mrb[0].mxu0
        %v1146 = vpop.f32.mrb[0].mxu0
        %v1147 = vadd.f32 0.0, %v1146
        %v1148 = vpop.f32.mrb[0].mxu0
        %1149 = vmatprep.mubr.bf16.mxu0 0
        %1150 = vmatmul.mubr.bf16.gmra.mrb[0].mxu0 %v1047
        %v1151 = vpop.f32.mrb[0].mxu0
        %v1152 = vadd.f32 0.0, %v1151
        %v1153 = vpop.f32.mrb[0].mxu0
        %v1154 = vpop.f32.mrb[0].mxu0
        %v1155 = vadd.f32 0.0, %v1154
        %v1156 = vpop.f32.mrb[0].mxu0
        %1157 = vmatprep.mubr.bf16.mxu0 0
        %1158 = vmatmul.mubr.bf16.gmra.mrb[0].mxu0 %v1050
        %v1159 = vpop.f32.mrb[0].mxu0
        %v1160 = vadd.f32 0.0, %v1159
        %v1161 = vpop.f32.mrb[0].mxu0
        %v1162 = vpop.f32.mrb[0].mxu0
        %v1163 = vadd.f32 0.0, %v1162
        %v1164 = vpop.f32.mrb[0].mxu0
        %1165 = vmatprep.mubr.bf16.mxu0 0
        %1166 = vmatmul.mubr.bf16.gmra.mrb[0].mxu0 %v1053
        %v1167 = vpop.f32.mrb[0].mxu0
        %v1168 = vadd.f32 0.0, %v1167
        %v1169 = vpop.f32.mrb[0].mxu0
        %v1170 = vpop.f32.mrb[0].mxu0
        %v1171 = vadd.f32 0.0, %v1170
        %v1172 = vpop.f32.mrb[0].mxu0
        %1173 = vmatprep.mubr.bf16.mxu0 0
        %1174 = vmatmul.mubr.bf16.gmra.mrb[0].mxu0 %v1056
        %v1175 = vpop.f32.mrb[0].mxu0
        %v1176 = vadd.f32 0.0, %v1175
        %v1177 = vpop.f32.mrb[0].mxu0
        %v1178 = vpop.f32.mrb[0].mxu0
        %v1179 = vadd.f32 0.0, %v1178
        %v1180 = vpop.f32.mrb[0].mxu0
        %1181 = vmatprep.mubr.bf16.mxu0 0
        %1182 = vmatmul.mubr.bf16.gmra.mrb[0].mxu0 %v1059
        %v1183 = vpop.f32.mrb[0].mxu0
        %v1184 = vadd.f32 0.0, %v1183
        %v1185 = vpop.f32.mrb[0].mxu0
        %v1186 = vpop.f32.mrb[0].mxu0
        %v1187 = vadd.f32 0.0, %v1186
        %v1188 = vpop.f32.mrb[0].mxu0
        %1189 = vmatprep.mubr.bf16.mxu0 0
        %1190 = vmatmul.mubr.bf16.gmra.mrb[0].mxu0 %v1062
        %v1191 = vpop.f32.mrb[0].mxu0
        %v1192 = vadd.f32 0.0, %v1191
        %v1193 = vpop.f32.mrb[0].mxu0
        %v1194 = vpop.f32.mrb[0].mxu0
        %v1195 = vadd.f32 0.0, %v1194
        %v1196 = vpop.f32.mrb[0].mxu0
        %1197 = vmatprep.mubr.bf16.mxu0 0
        %1198 = vmatmul.mubr.bf16.gmra.mrb[0].mxu0 %v1065
        %v1199 = vpop.f32.mrb[0].mxu0
        %v1200 = vadd.f32 0.0, %v1199
        %v1201 = vpop.f32.mrb[0].mxu0
        %v1202 = vpop.f32.mrb[0].mxu0
        %v1203 = vadd.f32 0.0, %v1202
        %v1204 = vpop.f32.mrb[0].mxu0
        %1205 = vmatprep.mubr.bf16.mxu0 0
        %1206 = vmatmul.mubr.bf16.gmra.mrb[0].mxu0 %v1068
        %v1207 = vpop.f32.mrb[0].mxu0
        %v1208 = vadd.f32 0.0, %v1207
        %v1209 = vpop.f32.mrb[0].mxu0
        %v1210 = vpop.f32.mrb[0].mxu0
        %v1211 = vadd.f32 0.0, %v1210
        %v1212 = vpop.f32.mrb[0].mxu0
        %1213 = vmatprep.mubr.bf16.mxu0 0
        %1214 = vmatmul.mubr.bf16.gmra.mrb[0].mxu0 %v1071
        %v1215 = vpop.f32.mrb[0].mxu0
        %v1216 = vadd.f32 0.0, %v1215
        %v1217 = vpop.f32.mrb[0].mxu0
        %v1218 = vpop.f32.mrb[0].mxu0
        %v1219 = vadd.f32 0.0, %v1218
        %v1220 = vpop.f32.mrb[0].mxu0
        %1221 = vmatprep.mubr.bf16.mxu0 0
        %1222 = vmatmul.mubr.bf16.gmra.mrb[0].mxu0 %v1074
        %v1223 = vpop.f32.mrb[0].mxu0
        %v1224 = vadd.f32 0.0, %v1223
        %v1225 = vpop.f32.mrb[0].mxu0
        %v1226 = vpop.f32.mrb[0].mxu0
        %v1227 = vadd.f32 0.0, %v1226
        %v1228 = vpop.f32.mrb[0].mxu0
        %1229 = vmatprep.mubr.bf16.mxu0 0
        %1230 = vmatmul.mubr.bf16.gmra.mrb[0].mxu0 %v1077
        %v1231 = vpop.f32.mrb[0].mxu0
        %v1232 = vadd.f32 0.0, %v1231
        %v1233 = vpop.f32.mrb[0].mxu0
        %v1234 = vpop.f32.mrb[0].mxu0
        %v1235 = vadd.f32 0.0, %v1234
        %v1236 = vpop.f32.mrb[0].mxu0
        %1237 = vmatprep.mubr.bf16.mxu0 0
        %1238 = vmatmul.mubr.bf16.gmra.mrb[0].mxu0 %v1080
        %v1239 = vpop.f32.mrb[0].mxu0
        %v1240 = vadd.f32 0.0, %v1239
        %v1241 = vpop.f32.mrb[0].mxu0
        %v1242 = vpop.f32.mrb[0].mxu0
        %v1243 = vadd.f32 0.0, %v1242
        %v1244 = vpop.f32.mrb[0].mxu0
        %1245 = vdwg.mxu0
        %v1246 = vld [vmem:[#allocation3] sm:$0xff]
        %v1247 = vld [vmem:[#allocation3 + $0x8] sm:$0xff]
        %v1248 = vld [vmem:[#allocation3 + $0x10] sm:$0xff]
        %v1249 = vld [vmem:[#allocation3 + $0x18] sm:$0xff]
        %v1250 = vld [vmem:[#allocation3 + $0x20] sm:$0xff]
        %v1251 = vld [vmem:[#allocation3 + $0x28] sm:$0xff]
        %v1252 = vld [vmem:[#allocation3 + $0x30] sm:$0xff]
        %v1253 = vld [vmem:[#allocation3 + $0x38] sm:$0xff]
        %v1254 = vld [vmem:[#allocation3 + $0x40] sm:$0xff]
        %v1255 = vld [vmem:[#allocation3 + $0x48] sm:$0xff]
        %v1256 = vld [vmem:[#allocation3 + $0x50] sm:$0xff]
        %v1257 = vld [vmem:[#allocation3 + $0x58] sm:$0xff]
        %v1258 = vld [vmem:[#allocation3 + $0x60] sm:$0xff]
        %v1259 = vld [vmem:[#allocation3 + $0x68] sm:$0xff]
        %v1260 = vld [vmem:[#allocation3 + $0x70] sm:$0xff]
        %v1261 = vld [vmem:[#allocation3 + $0x78] sm:$0xff]
        %v1262 = vld [vmem:[#allocation3 + $0x80] sm:$0xff]
        %v1263 = vld [vmem:[#allocation3 + $0x88] sm:$0xff]
        %v1264 = vld [vmem:[#allocation3 + $0x90] sm:$0xff]
        %v1265 = vld [vmem:[#allocation3 + $0x98] sm:$0xff]
        %v1266 = vld [vmem:[#allocation3 + $0xa0] sm:$0xff]
        %v1267 = vld [vmem:[#allocation3 + $0xa8] sm:$0xff]
        %v1268 = vld [vmem:[#allocation3 + $0xb0] sm:$0xff]
        %v1269 = vld [vmem:[#allocation3 + $0xb8] sm:$0xff]
        %v1270 = vld [vmem:[#allocation3 + $0xc0] sm:$0xff]
        %v1271 = vld [vmem:[#allocation3 + $0xc8] sm:$0xff]
        %v1272 = vld [vmem:[#allocation3 + $0xd0] sm:$0xff]
        %v1273 = vld [vmem:[#allocation3 + $0xd8] sm:$0xff]
        %v1274 = vld [vmem:[#allocation3 + $0xe0] sm:$0xff]
        %v1275 = vld [vmem:[#allocation3 + $0xe8] sm:$0xff]
        %v1276 = vld [vmem:[#allocation3 + $0xf0] sm:$0xff]
        %v1277 = vld [vmem:[#allocation3 + $0xf8] sm:$0xff]
        %v1278 = vadd.f32 %v1246, %v1120
        %v1279 = vadd.f32 %v1247, %v1123
        %v1280 = vadd.f32 %v1248, %v1128
        %v1281 = vadd.f32 %v1249, %v1131
        %v1282 = vadd.f32 %v1250, %v1136
        %v1283 = vadd.f32 %v1251, %v1139
        %v1284 = vadd.f32 %v1252, %v1144
        %v1285 = vadd.f32 %v1253, %v1147
        %v1286 = vadd.f32 %v1254, %v1152
        %v1287 = vadd.f32 %v1255, %v1155
        %v1288 = vadd.f32 %v1256, %v1160
        %v1289 = vadd.f32 %v1257, %v1163
        %v1290 = vadd.f32 %v1258, %v1168
        %v1291 = vadd.f32 %v1259, %v1171
        %v1292 = vadd.f32 %v1260, %v1176
        %v1293 = vadd.f32 %v1261, %v1179
        %v1294 = vadd.f32 %v1262, %v1184
        %v1295 = vadd.f32 %v1263, %v1187
        %v1296 = vadd.f32 %v1264, %v1192
        %v1297 = vadd.f32 %v1265, %v1195
        %v1298 = vadd.f32 %v1266, %v1200
        %v1299 = vadd.f32 %v1267, %v1203
        %v1300 = vadd.f32 %v1268, %v1208
        %v1301 = vadd.f32 %v1269, %v1211
        %v1302 = vadd.f32 %v1270, %v1216
        %v1303 = vadd.f32 %v1271, %v1219
        %v1304 = vadd.f32 %v1272, %v1224
        %v1305 = vadd.f32 %v1273, %v1227
        %v1306 = vadd.f32 %v1274, %v1232
        %v1307 = vadd.f32 %v1275, %v1235
        %v1308 = vadd.f32 %v1276, %v1240
        %v1309 = vadd.f32 %v1277, %v1243
        %1310 = vst.msk [vmem:[#allocation3] sm:$0xff] %vm611, %v1278
        %1311 = vst.msk [vmem:[#allocation3 + $0x8] sm:$0xff] %vm611, %v1279
        %1312 = vst.msk [vmem:[#allocation3 + $0x10] sm:$0xff] %vm611, %v1280
        %1313 = vst.msk [vmem:[#allocation3 + $0x18] sm:$0xff] %vm611, %v1281
        %1314 = vst.msk [vmem:[#allocation3 + $0x20] sm:$0xff] %vm611, %v1282
        %1315 = vst.msk [vmem:[#allocation3 + $0x28] sm:$0xff] %vm611, %v1283
        %1316 = vst.msk [vmem:[#allocation3 + $0x30] sm:$0xff] %vm611, %v1284
        %1317 = vst.msk [vmem:[#allocation3 + $0x38] sm:$0xff] %vm611, %v1285
        %1318 = vst.msk [vmem:[#allocation3 + $0x40] sm:$0xff] %vm611, %v1286
        %1319 = vst.msk [vmem:[#allocation3 + $0x48] sm:$0xff] %vm611, %v1287
        %1320 = vst.msk [vmem:[#allocation3 + $0x50] sm:$0xff] %vm611, %v1288
        %1321 = vst.msk [vmem:[#allocation3 + $0x58] sm:$0xff] %vm611, %v1289
        %1322 = vst.msk [vmem:[#allocation3 + $0x60] sm:$0xff] %vm611, %v1290
        %1323 = vst.msk [vmem:[#allocation3 + $0x68] sm:$0xff] %vm611, %v1291
        %1324 = vst.msk [vmem:[#allocation3 + $0x70] sm:$0xff] %vm611, %v1292
        %1325 = vst.msk [vmem:[#allocation3 + $0x78] sm:$0xff] %vm611, %v1293
        %1326 = vst.msk [vmem:[#allocation3 + $0x80] sm:$0xff] %vm611, %v1294
        %1327 = vst.msk [vmem:[#allocation3 + $0x88] sm:$0xff] %vm611, %v1295
        %1328 = vst.msk [vmem:[#allocation3 + $0x90] sm:$0xff] %vm611, %v1296
        %1329 = vst.msk [vmem:[#allocation3 + $0x98] sm:$0xff] %vm611, %v1297
        %1330 = vst.msk [vmem:[#allocation3 + $0xa0] sm:$0xff] %vm611, %v1298
        %1331 = vst.msk [vmem:[#allocation3 + $0xa8] sm:$0xff] %vm611, %v1299
        %1332 = vst.msk [vmem:[#allocation3 + $0xb0] sm:$0xff] %vm611, %v1300
        %1333 = vst.msk [vmem:[#allocation3 + $0xb8] sm:$0xff] %vm611, %v1301
        %1334 = vst.msk [vmem:[#allocation3 + $0xc0] sm:$0xff] %vm611, %v1302
        %1335 = vst.msk [vmem:[#allocation3 + $0xc8] sm:$0xff] %vm611, %v1303
        %1336 = vst.msk [vmem:[#allocation3 + $0xd0] sm:$0xff] %vm611, %v1304
        %1337 = vst.msk [vmem:[#allocation3 + $0xd8] sm:$0xff] %vm611, %v1305
        %1338 = vst.msk [vmem:[#allocation3 + $0xe0] sm:$0xff] %vm611, %v1306
        %1339 = vst.msk [vmem:[#allocation3 + $0xe8] sm:$0xff] %vm611, %v1307
        %1340 = vst.msk [vmem:[#allocation3 + $0xf0] sm:$0xff] %vm611, %v1308
        %1341 = vst.msk [vmem:[#allocation3 + $0xf8] sm:$0xff] %vm611, %v1309
        %v1342 = vld [vmem:[#allocation2 + $0x9] sm:$0xff]
        %v1343 = vld [vmem:[#allocation2 + $0x11] sm:$0xff]
        %v1344 = vld [vmem:[#allocation2 + $0x29] sm:$0xff]
        %v1345 = vld [vmem:[#allocation2 + $0x31] sm:$0xff]
        %v1346 = vld [vmem:[#allocation2 + $0x49] sm:$0xff]
        %v1347 = vld [vmem:[#allocation2 + $0x51] sm:$0xff]
        %v1348 = vld [vmem:[#allocation2 + $0x69] sm:$0xff]
        %v1349 = vld [vmem:[#allocation2 + $0x71] sm:$0xff]
        %v1350 = vld [vmem:[#allocation2 + $0x89] sm:$0xff]
        %v1351 = vld [vmem:[#allocation2 + $0x91] sm:$0xff]
        %v1352 = vld [vmem:[#allocation2 + $0xa9] sm:$0xff]
        %v1353 = vld [vmem:[#allocation2 + $0xb1] sm:$0xff]
        %v1354 = vld [vmem:[#allocation2 + $0xc9] sm:$0xff]
        %v1355 = vld [vmem:[#allocation2 + $0xd1] sm:$0xff]
        %v1356 = vld [vmem:[#allocation2 + $0xe9] sm:$0xff]
        %v1357 = vld [vmem:[#allocation2 + $0xf1] sm:$0xff]
        %v1358 = vld [vmem:[#allocation2 + $0x109] sm:$0xff]
        %v1359 = vld [vmem:[#allocation2 + $0x111] sm:$0xff]
        %v1360 = vld [vmem:[#allocation2 + $0x129] sm:$0xff]
        %v1361 = vld [vmem:[#allocation2 + $0x131] sm:$0xff]
        %v1362 = vld [vmem:[#allocation2 + $0x149] sm:$0xff]
        %v1363 = vld [vmem:[#allocation2 + $0x151] sm:$0xff]
        %v1364 = vld [vmem:[#allocation2 + $0x169] sm:$0xff]
        %v1365 = vld [vmem:[#allocation2 + $0x171] sm:$0xff]
        %v1366 = vld [vmem:[#allocation2 + $0x189] sm:$0xff]
        %v1367 = vld [vmem:[#allocation2 + $0x191] sm:$0xff]
        %v1368 = vld [vmem:[#allocation2 + $0x1a9] sm:$0xff]
        %v1369 = vld [vmem:[#allocation2 + $0x1b1] sm:$0xff]
        %v1370 = vld [vmem:[#allocation2 + $0x1c9] sm:$0xff]
        %v1371 = vld [vmem:[#allocation2 + $0x1d1] sm:$0xff]
        %v1372 = vld [vmem:[#allocation2 + $0x1e9] sm:$0xff]
        %v1373 = vld [vmem:[#allocation2 + $0x1f1] sm:$0xff]
        %v1374 = vpack.c.bf16 %v1343, %v1342
        %v1375 = vpack.c.bf16 %v1345, %v1344
        %v1376 = vpack.c.bf16 %v1347, %v1346
        %v1377 = vpack.c.bf16 %v1349, %v1348
        %v1378 = vpack.c.bf16 %v1351, %v1350
        %v1379 = vpack.c.bf16 %v1353, %v1352
        %v1380 = vpack.c.bf16 %v1355, %v1354
        %v1381 = vpack.c.bf16 %v1357, %v1356
        %v1382 = vpack.c.bf16 %v1359, %v1358
        %v1383 = vpack.c.bf16 %v1361, %v1360
        %v1384 = vpack.c.bf16 %v1363, %v1362
        %v1385 = vpack.c.bf16 %v1365, %v1364
        %v1386 = vpack.c.bf16 %v1367, %v1366
        %v1387 = vpack.c.bf16 %v1369, %v1368
        %v1388 = vpack.c.bf16 %v1371, %v1370
        %v1389 = vpack.c.bf16 %v1373, %v1372
        %s1390 = scalar_lea.vmem %s3, 8
        %v1391 = vld [vmem:[%s1390] sm:$0xf]
        %v1393 = vsel %vm611, %v1374, 0
        %v1396 = vsel %vm611, %v1375, 0
        %v1399 = vsel %vm611, %v1376, 0
        %v1402 = vsel %vm611, %v1377, 0
        %v1405 = vsel %vm611, %v1378, 0
        %v1408 = vsel %vm611, %v1379, 0
        %v1411 = vsel %vm611, %v1380, 0
        %v1414 = vsel %vm611, %v1381, 0
        %v1417 = vsel %vm611, %v1382, 0
        %v1420 = vsel %vm611, %v1383, 0
        %v1423 = vsel %vm611, %v1384, 0
        %v1426 = vsel %vm611, %v1385, 0
        %v1429 = vsel %vm611, %v1386, 0
        %v1432 = vsel %vm611, %v1387, 0
        %v1435 = vsel %vm611, %v1388, 0
        %v1438 = vsel %vm611, %v1389, 0
        %v1441 = vsel %vm787, %v1391, 0
        %1443 = vmatprep.subr.bf16.mxu0 0
        %1444 = vmatpush1.bf16.msra.mxu0 %v1441
        %1445 = vmatprep.subr.bf16.mxu0 0
        %1446 = vmatpush1.bf16.msra.mxu0 0
        %1447 = vmatprep.subr.bf16.mxu0 0
        %1448 = vmatpush1.bf16.msra.mxu0 0
        %1449 = vmatprep.subr.bf16.mxu0 0
        %1450 = vmatpush1.bf16.msra.mxu0 0
        %1451 = vmatprep.subr.bf16.mxu0 0
        %1452 = vmatpush1.bf16.msra.mxu0 0
        %1453 = vmatprep.subr.bf16.mxu0 0
        %1454 = vmatpush1.bf16.msra.mxu0 0
        %1455 = vmatprep.subr.bf16.mxu0 0
        %1456 = vmatpush1.bf16.msra.mxu0 0
        %1457 = vmatprep.subr.bf16.mxu0 0
        %1458 = vmatpush1.bf16.msra.mxu0 0
        %1459 = vmatprep.subr.bf16.mxu0 0
        %1460 = vmatpush1.bf16.msra.mxu0 0
        %1461 = vmatprep.subr.bf16.mxu0 0
        %1462 = vmatpush1.bf16.msra.mxu0 0
        %1463 = vmatprep.subr.bf16.mxu0 0
        %1464 = vmatpush1.bf16.msra.mxu0 0
        %1465 = vmatprep.subr.bf16.mxu0 0
        %1466 = vmatpush1.bf16.msra.mxu0 0
        %1467 = vmatprep.subr.bf16.mxu0 0
        %1468 = vmatpush1.bf16.msra.mxu0 0
        %1469 = vmatprep.subr.bf16.mxu0 0
        %1470 = vmatpush1.bf16.msra.mxu0 0
        %1471 = vmatprep.subr.bf16.mxu0 0
        %1472 = vmatpush1.bf16.msra.mxu0 0
        %1473 = vmatprep.subr.bf16.mxu0 0
        %1474 = vmatpush1.bf16.msra.mxu0 0
        %1475 = vmatprep.mubr.bf16.mxu0 0
        %1476 = vmatmul.mubr.bf16.gmra.mrb[0].mxu0 %v1393
        %v1477 = vpop.f32.mrb[0].mxu0
        %v1478 = vadd.f32 0.0, %v1477
        %v1479 = vpop.f32.mrb[0].mxu0
        %v1480 = vpop.f32.mrb[0].mxu0
        %v1481 = vadd.f32 0.0, %v1480
        %v1482 = vpop.f32.mrb[0].mxu0
        %1483 = vmatprep.mubr.bf16.mxu0 0
        %1484 = vmatmul.mubr.bf16.gmra.mrb[0].mxu0 %v1396
        %v1485 = vpop.f32.mrb[0].mxu0
        %v1486 = vadd.f32 0.0, %v1485
        %v1487 = vpop.f32.mrb[0].mxu0
        %v1488 = vpop.f32.mrb[0].mxu0
        %v1489 = vadd.f32 0.0, %v1488
        %v1490 = vpop.f32.mrb[0].mxu0
        %1491 = vmatprep.mubr.bf16.mxu0 0
        %1492 = vmatmul.mubr.bf16.gmra.mrb[0].mxu0 %v1399
        %v1493 = vpop.f32.mrb[0].mxu0
        %v1494 = vadd.f32 0.0, %v1493
        %v1495 = vpop.f32.mrb[0].mxu0
        %v1496 = vpop.f32.mrb[0].mxu0
        %v1497 = vadd.f32 0.0, %v1496
        %v1498 = vpop.f32.mrb[0].mxu0
        %1499 = vmatprep.mubr.bf16.mxu0 0
        %1500 = vmatmul.mubr.bf16.gmra.mrb[0].mxu0 %v1402
        %v1501 = vpop.f32.mrb[0].mxu0
        %v1502 = vadd.f32 0.0, %v1501
        %v1503 = vpop.f32.mrb[0].mxu0
        %v1504 = vpop.f32.mrb[0].mxu0
        %v1505 = vadd.f32 0.0, %v1504
        %v1506 = vpop.f32.mrb[0].mxu0
        %1507 = vmatprep.mubr.bf16.mxu0 0
        %1508 = vmatmul.mubr.bf16.gmra.mrb[0].mxu0 %v1405
        %v1509 = vpop.f32.mrb[0].mxu0
        %v1510 = vadd.f32 0.0, %v1509
        %v1511 = vpop.f32.mrb[0].mxu0
        %v1512 = vpop.f32.mrb[0].mxu0
        %v1513 = vadd.f32 0.0, %v1512
        %v1514 = vpop.f32.mrb[0].mxu0
        %1515 = vmatprep.mubr.bf16.mxu0 0
        %1516 = vmatmul.mubr.bf16.gmra.mrb[0].mxu0 %v1408
        %v1517 = vpop.f32.mrb[0].mxu0
        %v1518 = vadd.f32 0.0, %v1517
        %v1519 = vpop.f32.mrb[0].mxu0
        %v1520 = vpop.f32.mrb[0].mxu0
        %v1521 = vadd.f32 0.0, %v1520
        %v1522 = vpop.f32.mrb[0].mxu0
        %1523 = vmatprep.mubr.bf16.mxu0 0
        %1524 = vmatmul.mubr.bf16.gmra.mrb[0].mxu0 %v1411
        %v1525 = vpop.f32.mrb[0].mxu0
        %v1526 = vadd.f32 0.0, %v1525
        %v1527 = vpop.f32.mrb[0].mxu0
        %v1528 = vpop.f32.mrb[0].mxu0
        %v1529 = vadd.f32 0.0, %v1528
        %v1530 = vpop.f32.mrb[0].mxu0
        %1531 = vmatprep.mubr.bf16.mxu0 0
        %1532 = vmatmul.mubr.bf16.gmra.mrb[0].mxu0 %v1414
        %v1533 = vpop.f32.mrb[0].mxu0
        %v1534 = vadd.f32 0.0, %v1533
        %v1535 = vpop.f32.mrb[0].mxu0
        %v1536 = vpop.f32.mrb[0].mxu0
        %v1537 = vadd.f32 0.0, %v1536
        %v1538 = vpop.f32.mrb[0].mxu0
        %1539 = vmatprep.mubr.bf16.mxu0 0
        %1540 = vmatmul.mubr.bf16.gmra.mrb[0].mxu0 %v1417
        %v1541 = vpop.f32.mrb[0].mxu0
        %v1542 = vadd.f32 0.0, %v1541
        %v1543 = vpop.f32.mrb[0].mxu0
        %v1544 = vpop.f32.mrb[0].mxu0
        %v1545 = vadd.f32 0.0, %v1544
        %v1546 = vpop.f32.mrb[0].mxu0
        %1547 = vmatprep.mubr.bf16.mxu0 0
        %1548 = vmatmul.mubr.bf16.gmra.mrb[0].mxu0 %v1420
        %v1549 = vpop.f32.mrb[0].mxu0
        %v1550 = vadd.f32 0.0, %v1549
        %v1551 = vpop.f32.mrb[0].mxu0
        %v1552 = vpop.f32.mrb[0].mxu0
        %v1553 = vadd.f32 0.0, %v1552
        %v1554 = vpop.f32.mrb[0].mxu0
        %1555 = vmatprep.mubr.bf16.mxu0 0
        %1556 = vmatmul.mubr.bf16.gmra.mrb[0].mxu0 %v1423
        %v1557 = vpop.f32.mrb[0].mxu0
        %v1558 = vadd.f32 0.0, %v1557
        %v1559 = vpop.f32.mrb[0].mxu0
        %v1560 = vpop.f32.mrb[0].mxu0
        %v1561 = vadd.f32 0.0, %v1560
        %v1562 = vpop.f32.mrb[0].mxu0
        %1563 = vmatprep.mubr.bf16.mxu0 0
        %1564 = vmatmul.mubr.bf16.gmra.mrb[0].mxu0 %v1426
        %v1565 = vpop.f32.mrb[0].mxu0
        %v1566 = vadd.f32 0.0, %v1565
        %v1567 = vpop.f32.mrb[0].mxu0
        %v1568 = vpop.f32.mrb[0].mxu0
        %v1569 = vadd.f32 0.0, %v1568
        %v1570 = vpop.f32.mrb[0].mxu0
        %1571 = vmatprep.mubr.bf16.mxu0 0
        %1572 = vmatmul.mubr.bf16.gmra.mrb[0].mxu0 %v1429
        %v1573 = vpop.f32.mrb[0].mxu0
        %v1574 = vadd.f32 0.0, %v1573
        %v1575 = vpop.f32.mrb[0].mxu0
        %v1576 = vpop.f32.mrb[0].mxu0
        %v1577 = vadd.f32 0.0, %v1576
        %v1578 = vpop.f32.mrb[0].mxu0
        %1579 = vmatprep.mubr.bf16.mxu0 0
        %1580 = vmatmul.mubr.bf16.gmra.mrb[0].mxu0 %v1432
        %v1581 = vpop.f32.mrb[0].mxu0
        %v1582 = vadd.f32 0.0, %v1581
        %v1583 = vpop.f32.mrb[0].mxu0
        %v1584 = vpop.f32.mrb[0].mxu0
        %v1585 = vadd.f32 0.0, %v1584
        %v1586 = vpop.f32.mrb[0].mxu0
        %1587 = vmatprep.mubr.bf16.mxu0 0
        %1588 = vmatmul.mubr.bf16.gmra.mrb[0].mxu0 %v1435
        %v1589 = vpop.f32.mrb[0].mxu0
        %v1590 = vadd.f32 0.0, %v1589
        %v1591 = vpop.f32.mrb[0].mxu0
        %v1592 = vpop.f32.mrb[0].mxu0
        %v1593 = vadd.f32 0.0, %v1592
        %v1594 = vpop.f32.mrb[0].mxu0
        %1595 = vmatprep.mubr.bf16.mxu0 0
        %1596 = vmatmul.mubr.bf16.gmra.mrb[0].mxu0 %v1438
        %v1597 = vpop.f32.mrb[0].mxu0
        %v1598 = vadd.f32 0.0, %v1597
        %v1599 = vpop.f32.mrb[0].mxu0
        %v1600 = vpop.f32.mrb[0].mxu0
        %v1601 = vadd.f32 0.0, %v1600
        %v1602 = vpop.f32.mrb[0].mxu0
        %1603 = vdwg.mxu0
        %v1604 = vld [vmem:[#allocation3] sm:$0xff]
        %v1605 = vld [vmem:[#allocation3 + $0x8] sm:$0xff]
        %v1606 = vld [vmem:[#allocation3 + $0x10] sm:$0xff]
        %v1607 = vld [vmem:[#allocation3 + $0x18] sm:$0xff]
        %v1608 = vld [vmem:[#allocation3 + $0x20] sm:$0xff]
        %v1609 = vld [vmem:[#allocation3 + $0x28] sm:$0xff]
        %v1610 = vld [vmem:[#allocation3 + $0x30] sm:$0xff]
        %v1611 = vld [vmem:[#allocation3 + $0x38] sm:$0xff]
        %v1612 = vld [vmem:[#allocation3 + $0x40] sm:$0xff]
        %v1613 = vld [vmem:[#allocation3 + $0x48] sm:$0xff]
        %v1614 = vld [vmem:[#allocation3 + $0x50] sm:$0xff]
        %v1615 = vld [vmem:[#allocation3 + $0x58] sm:$0xff]
        %v1616 = vld [vmem:[#allocation3 + $0x60] sm:$0xff]
        %v1617 = vld [vmem:[#allocation3 + $0x68] sm:$0xff]
        %v1618 = vld [vmem:[#allocation3 + $0x70] sm:$0xff]
        %v1619 = vld [vmem:[#allocation3 + $0x78] sm:$0xff]
        %v1620 = vld [vmem:[#allocation3 + $0x80] sm:$0xff]
        %v1621 = vld [vmem:[#allocation3 + $0x88] sm:$0xff]
        %v1622 = vld [vmem:[#allocation3 + $0x90] sm:$0xff]
        %v1623 = vld [vmem:[#allocation3 + $0x98] sm:$0xff]
        %v1624 = vld [vmem:[#allocation3 + $0xa0] sm:$0xff]
        %v1625 = vld [vmem:[#allocation3 + $0xa8] sm:$0xff]
        %v1626 = vld [vmem:[#allocation3 + $0xb0] sm:$0xff]
        %v1627 = vld [vmem:[#allocation3 + $0xb8] sm:$0xff]
        %v1628 = vld [vmem:[#allocation3 + $0xc0] sm:$0xff]
        %v1629 = vld [vmem:[#allocation3 + $0xc8] sm:$0xff]
        %v1630 = vld [vmem:[#allocation3 + $0xd0] sm:$0xff]
        %v1631 = vld [vmem:[#allocation3 + $0xd8] sm:$0xff]
        %v1632 = vld [vmem:[#allocation3 + $0xe0] sm:$0xff]
        %v1633 = vld [vmem:[#allocation3 + $0xe8] sm:$0xff]
        %v1634 = vld [vmem:[#allocation3 + $0xf0] sm:$0xff]
        %v1635 = vld [vmem:[#allocation3 + $0xf8] sm:$0xff]
        %v1636 = vadd.f32 %v1604, %v1478
        %v1637 = vadd.f32 %v1605, %v1481
        %v1638 = vadd.f32 %v1606, %v1486
        %v1639 = vadd.f32 %v1607, %v1489
        %v1640 = vadd.f32 %v1608, %v1494
        %v1641 = vadd.f32 %v1609, %v1497
        %v1642 = vadd.f32 %v1610, %v1502
        %v1643 = vadd.f32 %v1611, %v1505
        %v1644 = vadd.f32 %v1612, %v1510
        %v1645 = vadd.f32 %v1613, %v1513
        %v1646 = vadd.f32 %v1614, %v1518
        %v1647 = vadd.f32 %v1615, %v1521
        %v1648 = vadd.f32 %v1616, %v1526
        %v1649 = vadd.f32 %v1617, %v1529
        %v1650 = vadd.f32 %v1618, %v1534
        %v1651 = vadd.f32 %v1619, %v1537
        %v1652 = vadd.f32 %v1620, %v1542
        %v1653 = vadd.f32 %v1621, %v1545
        %v1654 = vadd.f32 %v1622, %v1550
        %v1655 = vadd.f32 %v1623, %v1553
        %v1656 = vadd.f32 %v1624, %v1558
        %v1657 = vadd.f32 %v1625, %v1561
        %v1658 = vadd.f32 %v1626, %v1566
        %v1659 = vadd.f32 %v1627, %v1569
        %v1660 = vadd.f32 %v1628, %v1574
        %v1661 = vadd.f32 %v1629, %v1577
        %v1662 = vadd.f32 %v1630, %v1582
        %v1663 = vadd.f32 %v1631, %v1585
        %v1664 = vadd.f32 %v1632, %v1590
        %v1665 = vadd.f32 %v1633, %v1593
        %v1666 = vadd.f32 %v1634, %v1598
        %v1667 = vadd.f32 %v1635, %v1601
        %1668 = vst.msk [vmem:[#allocation3] sm:$0xff] %vm611, %v1636
        %1669 = vst.msk [vmem:[#allocation3 + $0x8] sm:$0xff] %vm611, %v1637
        %1670 = vst.msk [vmem:[#allocation3 + $0x10] sm:$0xff] %vm611, %v1638
        %1671 = vst.msk [vmem:[#allocation3 + $0x18] sm:$0xff] %vm611, %v1639
        %1672 = vst.msk [vmem:[#allocation3 + $0x20] sm:$0xff] %vm611, %v1640
        %1673 = vst.msk [vmem:[#allocation3 + $0x28] sm:$0xff] %vm611, %v1641
        %1674 = vst.msk [vmem:[#allocation3 + $0x30] sm:$0xff] %vm611, %v1642
        %1675 = vst.msk [vmem:[#allocation3 + $0x38] sm:$0xff] %vm611, %v1643
        %1676 = vst.msk [vmem:[#allocation3 + $0x40] sm:$0xff] %vm611, %v1644
        %1677 = vst.msk [vmem:[#allocation3 + $0x48] sm:$0xff] %vm611, %v1645
        %1678 = vst.msk [vmem:[#allocation3 + $0x50] sm:$0xff] %vm611, %v1646
        %1679 = vst.msk [vmem:[#allocation3 + $0x58] sm:$0xff] %vm611, %v1647
        %1680 = vst.msk [vmem:[#allocation3 + $0x60] sm:$0xff] %vm611, %v1648
        %1681 = vst.msk [vmem:[#allocation3 + $0x68] sm:$0xff] %vm611, %v1649
        %1682 = vst.msk [vmem:[#allocation3 + $0x70] sm:$0xff] %vm611, %v1650
        %1683 = vst.msk [vmem:[#allocation3 + $0x78] sm:$0xff] %vm611, %v1651
        %1684 = vst.msk [vmem:[#allocation3 + $0x80] sm:$0xff] %vm611, %v1652
        %1685 = vst.msk [vmem:[#allocation3 + $0x88] sm:$0xff] %vm611, %v1653
        %1686 = vst.msk [vmem:[#allocation3 + $0x90] sm:$0xff] %vm611, %v1654
        %1687 = vst.msk [vmem:[#allocation3 + $0x98] sm:$0xff] %vm611, %v1655
        %1688 = vst.msk [vmem:[#allocation3 + $0xa0] sm:$0xff] %vm611, %v1656
        %1689 = vst.msk [vmem:[#allocation3 + $0xa8] sm:$0xff] %vm611, %v1657
        %1690 = vst.msk [vmem:[#allocation3 + $0xb0] sm:$0xff] %vm611, %v1658
        %1691 = vst.msk [vmem:[#allocation3 + $0xb8] sm:$0xff] %vm611, %v1659
        %1692 = vst.msk [vmem:[#allocation3 + $0xc0] sm:$0xff] %vm611, %v1660
        %1693 = vst.msk [vmem:[#allocation3 + $0xc8] sm:$0xff] %vm611, %v1661
        %1694 = vst.msk [vmem:[#allocation3 + $0xd0] sm:$0xff] %vm611, %v1662
        %1695 = vst.msk [vmem:[#allocation3 + $0xd8] sm:$0xff] %vm611, %v1663
        %1696 = vst.msk [vmem:[#allocation3 + $0xe0] sm:$0xff] %vm611, %v1664
        %1697 = vst.msk [vmem:[#allocation3 + $0xe8] sm:$0xff] %vm611, %v1665
        %1698 = vst.msk [vmem:[#allocation3 + $0xf0] sm:$0xff] %vm611, %v1666
        %1699 = vst.msk [vmem:[#allocation3 + $0xf8] sm:$0xff] %vm611, %v1667
        %v1700 = vld [vmem:[%s657 + $0x7] sm:$0xff]
        %v1701 = vld [vmem:[%s657 + $0xf] sm:$0xff]
        %v1702 = vld [vmem:[%s657 + $0x27] sm:$0xff]
        %v1703 = vld [vmem:[%s657 + $0x2f] sm:$0xff]
        %v1704 = vld [vmem:[%s657 + $0x47] sm:$0xff]
        %v1705 = vld [vmem:[%s657 + $0x4f] sm:$0xff]
        %v1706 = vld [vmem:[%s657 + $0x67] sm:$0xff]
        %v1707 = vld [vmem:[%s657 + $0x6f] sm:$0xff]
        %v1708 = vld [vmem:[%s657 + $0x87] sm:$0xff]
        %v1709 = vld [vmem:[%s657 + $0x8f] sm:$0xff]
        %v1710 = vld [vmem:[%s657 + $0xa7] sm:$0xff]
        %v1711 = vld [vmem:[%s657 + $0xaf] sm:$0xff]
        %v1712 = vld [vmem:[%s657 + $0xc7] sm:$0xff]
        %v1713 = vld [vmem:[%s657 + $0xcf] sm:$0xff]
        %v1714 = vld [vmem:[%s657 + $0xe7] sm:$0xff]
        %v1715 = vld [vmem:[%s657 + $0xef] sm:$0xff]
        %v1716 = vld [vmem:[%s657 + $0x107] sm:$0xff]
        %v1717 = vld [vmem:[%s657 + $0x10f] sm:$0xff]
        %v1718 = vld [vmem:[%s657 + $0x127] sm:$0xff]
        %v1719 = vld [vmem:[%s657 + $0x12f] sm:$0xff]
        %v1720 = vld [vmem:[%s657 + $0x147] sm:$0xff]
        %v1721 = vld [vmem:[%s657 + $0x14f] sm:$0xff]
        %v1722 = vld [vmem:[%s657 + $0x167] sm:$0xff]
        %v1723 = vld [vmem:[%s657 + $0x16f] sm:$0xff]
        %v1724 = vld [vmem:[%s657 + $0x187] sm:$0xff]
        %v1725 = vld [vmem:[%s657 + $0x18f] sm:$0xff]
        %v1726 = vld [vmem:[%s657 + $0x1a7] sm:$0xff]
        %v1727 = vld [vmem:[%s657 + $0x1af] sm:$0xff]
        %v1728 = vld [vmem:[%s657 + $0x1c7] sm:$0xff]
        %v1729 = vld [vmem:[%s657 + $0x1cf] sm:$0xff]
        %v1730 = vld [vmem:[%s657 + $0x1e7] sm:$0xff]
        %v1731 = vld [vmem:[%s657 + $0x1ef] sm:$0xff]
        %v1732 = vpack.c.bf16 %v1701, %v1700
        %v1733 = vpack.c.bf16 %v1703, %v1702
        %v1734 = vpack.c.bf16 %v1705, %v1704
        %v1735 = vpack.c.bf16 %v1707, %v1706
        %v1736 = vpack.c.bf16 %v1709, %v1708
        %v1737 = vpack.c.bf16 %v1711, %v1710
        %v1738 = vpack.c.bf16 %v1713, %v1712
        %v1739 = vpack.c.bf16 %v1715, %v1714
        %v1740 = vpack.c.bf16 %v1717, %v1716
        %v1741 = vpack.c.bf16 %v1719, %v1718
        %v1742 = vpack.c.bf16 %v1721, %v1720
        %v1743 = vpack.c.bf16 %v1723, %v1722
        %v1744 = vpack.c.bf16 %v1725, %v1724
        %v1745 = vpack.c.bf16 %v1727, %v1726
        %v1746 = vpack.c.bf16 %v1729, %v1728
        %v1747 = vpack.c.bf16 %v1731, %v1730
        %s1748 = scalar_lea.vmem %s3, 12
        %v1749 = vld [vmem:[%s1748] sm:$0xf]
        %v1751 = vsel %vm611, %v1732, 0
        %v1754 = vsel %vm611, %v1733, 0
        %v1757 = vsel %vm611, %v1734, 0
        %v1760 = vsel %vm611, %v1735, 0
        %v1763 = vsel %vm611, %v1736, 0
        %v1766 = vsel %vm611, %v1737, 0
        %v1769 = vsel %vm611, %v1738, 0
        %v1772 = vsel %vm611, %v1739, 0
        %v1775 = vsel %vm611, %v1740, 0
        %v1778 = vsel %vm611, %v1741, 0
        %v1781 = vsel %vm611, %v1742, 0
        %v1784 = vsel %vm611, %v1743, 0
        %v1787 = vsel %vm611, %v1744, 0
        %v1790 = vsel %vm611, %v1745, 0
        %v1793 = vsel %vm611, %v1746, 0
        %v1796 = vsel %vm611, %v1747, 0
        %v1799 = vsel %vm787, %v1749, 0
        %1801 = vmatprep.subr.bf16.mxu0 0
        %1802 = vmatpush1.bf16.msra.mxu0 %v1799
        %1803 = vmatprep.subr.bf16.mxu0 0
        %1804 = vmatpush1.bf16.msra.mxu0 0
        %1805 = vmatprep.subr.bf16.mxu0 0
        %1806 = vmatpush1.bf16.msra.mxu0 0
        %1807 = vmatprep.subr.bf16.mxu0 0
        %1808 = vmatpush1.bf16.msra.mxu0 0
        %1809 = vmatprep.subr.bf16.mxu0 0
        %1810 = vmatpush1.bf16.msra.mxu0 0
        %1811 = vmatprep.subr.bf16.mxu0 0
        %1812 = vmatpush1.bf16.msra.mxu0 0
        %1813 = vmatprep.subr.bf16.mxu0 0
        %1814 = vmatpush1.bf16.msra.mxu0 0
        %1815 = vmatprep.subr.bf16.mxu0 0
        %1816 = vmatpush1.bf16.msra.mxu0 0
        %1817 = vmatprep.subr.bf16.mxu0 0
        %1818 = vmatpush1.bf16.msra.mxu0 0
        %1819 = vmatprep.subr.bf16.mxu0 0
        %1820 = vmatpush1.bf16.msra.mxu0 0
        %1821 = vmatprep.subr.bf16.mxu0 0
        %1822 = vmatpush1.bf16.msra.mxu0 0
        %1823 = vmatprep.subr.bf16.mxu0 0
        %1824 = vmatpush1.bf16.msra.mxu0 0
        %1825 = vmatprep.subr.bf16.mxu0 0
        %1826 = vmatpush1.bf16.msra.mxu0 0
        %1827 = vmatprep.subr.bf16.mxu0 0
        %1828 = vmatpush1.bf16.msra.mxu0 0
        %1829 = vmatprep.subr.bf16.mxu0 0
        %1830 = vmatpush1.bf16.msra.mxu0 0
        %1831 = vmatprep.subr.bf16.mxu0 0
        %1832 = vmatpush1.bf16.msra.mxu0 0
        %1833 = vmatprep.mubr.bf16.mxu0 0
        %1834 = vmatmul.mubr.bf16.gmra.mrb[0].mxu0 %v1751
        %v1835 = vpop.f32.mrb[0].mxu0
        %v1836 = vadd.f32 0.0, %v1835
        %v1837 = vpop.f32.mrb[0].mxu0
        %v1838 = vpop.f32.mrb[0].mxu0
        %v1839 = vadd.f32 0.0, %v1838
        %v1840 = vpop.f32.mrb[0].mxu0
        %1841 = vmatprep.mubr.bf16.mxu0 0
        %1842 = vmatmul.mubr.bf16.gmra.mrb[0].mxu0 %v1754
        %v1843 = vpop.f32.mrb[0].mxu0
        %v1844 = vadd.f32 0.0, %v1843
        %v1845 = vpop.f32.mrb[0].mxu0
        %v1846 = vpop.f32.mrb[0].mxu0
        %v1847 = vadd.f32 0.0, %v1846
        %v1848 = vpop.f32.mrb[0].mxu0
        %1849 = vmatprep.mubr.bf16.mxu0 0
        %1850 = vmatmul.mubr.bf16.gmra.mrb[0].mxu0 %v1757
        %v1851 = vpop.f32.mrb[0].mxu0
        %v1852 = vadd.f32 0.0, %v1851
        %v1853 = vpop.f32.mrb[0].mxu0
        %v1854 = vpop.f32.mrb[0].mxu0
        %v1855 = vadd.f32 0.0, %v1854
        %v1856 = vpop.f32.mrb[0].mxu0
        %1857 = vmatprep.mubr.bf16.mxu0 0
        %1858 = vmatmul.mubr.bf16.gmra.mrb[0].mxu0 %v1760
        %v1859 = vpop.f32.mrb[0].mxu0
        %v1860 = vadd.f32 0.0, %v1859
        %v1861 = vpop.f32.mrb[0].mxu0
        %v1862 = vpop.f32.mrb[0].mxu0
        %v1863 = vadd.f32 0.0, %v1862
        %v1864 = vpop.f32.mrb[0].mxu0
        %1865 = vmatprep.mubr.bf16.mxu0 0
        %1866 = vmatmul.mubr.bf16.gmra.mrb[0].mxu0 %v1763
        %v1867 = vpop.f32.mrb[0].mxu0
        %v1868 = vadd.f32 0.0, %v1867
        %v1869 = vpop.f32.mrb[0].mxu0
        %v1870 = vpop.f32.mrb[0].mxu0
        %v1871 = vadd.f32 0.0, %v1870
        %v1872 = vpop.f32.mrb[0].mxu0
        %1873 = vmatprep.mubr.bf16.mxu0 0
        %1874 = vmatmul.mubr.bf16.gmra.mrb[0].mxu0 %v1766
        %v1875 = vpop.f32.mrb[0].mxu0
        %v1876 = vadd.f32 0.0, %v1875
        %v1877 = vpop.f32.mrb[0].mxu0
        %v1878 = vpop.f32.mrb[0].mxu0
        %v1879 = vadd.f32 0.0, %v1878
        %v1880 = vpop.f32.mrb[0].mxu0
        %1881 = vmatprep.mubr.bf16.mxu0 0
        %1882 = vmatmul.mubr.bf16.gmra.mrb[0].mxu0 %v1769
        %v1883 = vpop.f32.mrb[0].mxu0
        %v1884 = vadd.f32 0.0, %v1883
        %v1885 = vpop.f32.mrb[0].mxu0
        %v1886 = vpop.f32.mrb[0].mxu0
        %v1887 = vadd.f32 0.0, %v1886
        %v1888 = vpop.f32.mrb[0].mxu0
        %1889 = vmatprep.mubr.bf16.mxu0 0
        %1890 = vmatmul.mubr.bf16.gmra.mrb[0].mxu0 %v1772
        %v1891 = vpop.f32.mrb[0].mxu0
        %v1892 = vadd.f32 0.0, %v1891
        %v1893 = vpop.f32.mrb[0].mxu0
        %v1894 = vpop.f32.mrb[0].mxu0
        %v1895 = vadd.f32 0.0, %v1894
        %v1896 = vpop.f32.mrb[0].mxu0
        %1897 = vmatprep.mubr.bf16.mxu0 0
        %1898 = vmatmul.mubr.bf16.gmra.mrb[0].mxu0 %v1775
        %v1899 = vpop.f32.mrb[0].mxu0
        %v1900 = vadd.f32 0.0, %v1899
        %v1901 = vpop.f32.mrb[0].mxu0
        %v1902 = vpop.f32.mrb[0].mxu0
        %v1903 = vadd.f32 0.0, %v1902
        %v1904 = vpop.f32.mrb[0].mxu0
        %1905 = vmatprep.mubr.bf16.mxu0 0
        %1906 = vmatmul.mubr.bf16.gmra.mrb[0].mxu0 %v1778
        %v1907 = vpop.f32.mrb[0].mxu0
        %v1908 = vadd.f32 0.0, %v1907
        %v1909 = vpop.f32.mrb[0].mxu0
        %v1910 = vpop.f32.mrb[0].mxu0
        %v1911 = vadd.f32 0.0, %v1910
        %v1912 = vpop.f32.mrb[0].mxu0
        %1913 = vmatprep.mubr.bf16.mxu0 0
        %1914 = vmatmul.mubr.bf16.gmra.mrb[0].mxu0 %v1781
        %v1915 = vpop.f32.mrb[0].mxu0
        %v1916 = vadd.f32 0.0, %v1915
        %v1917 = vpop.f32.mrb[0].mxu0
        %v1918 = vpop.f32.mrb[0].mxu0
        %v1919 = vadd.f32 0.0, %v1918
        %v1920 = vpop.f32.mrb[0].mxu0
        %1921 = vmatprep.mubr.bf16.mxu0 0
        %1922 = vmatmul.mubr.bf16.gmra.mrb[0].mxu0 %v1784
        %v1923 = vpop.f32.mrb[0].mxu0
        %v1924 = vadd.f32 0.0, %v1923
        %v1925 = vpop.f32.mrb[0].mxu0
        %v1926 = vpop.f32.mrb[0].mxu0
        %v1927 = vadd.f32 0.0, %v1926
        %v1928 = vpop.f32.mrb[0].mxu0
        %1929 = vmatprep.mubr.bf16.mxu0 0
        %1930 = vmatmul.mubr.bf16.gmra.mrb[0].mxu0 %v1787
        %v1931 = vpop.f32.mrb[0].mxu0
        %v1932 = vadd.f32 0.0, %v1931
        %v1933 = vpop.f32.mrb[0].mxu0
        %v1934 = vpop.f32.mrb[0].mxu0
        %v1935 = vadd.f32 0.0, %v1934
        %v1936 = vpop.f32.mrb[0].mxu0
        %1937 = vmatprep.mubr.bf16.mxu0 0
        %1938 = vmatmul.mubr.bf16.gmra.mrb[0].mxu0 %v1790
        %v1939 = vpop.f32.mrb[0].mxu0
        %v1940 = vadd.f32 0.0, %v1939
        %v1941 = vpop.f32.mrb[0].mxu0
        %v1942 = vpop.f32.mrb[0].mxu0
        %v1943 = vadd.f32 0.0, %v1942
        %v1944 = vpop.f32.mrb[0].mxu0
        %1945 = vmatprep.mubr.bf16.mxu0 0
        %1946 = vmatmul.mubr.bf16.gmra.mrb[0].mxu0 %v1793
        %v1947 = vpop.f32.mrb[0].mxu0
        %v1948 = vadd.f32 0.0, %v1947
        %v1949 = vpop.f32.mrb[0].mxu0
        %v1950 = vpop.f32.mrb[0].mxu0
        %v1951 = vadd.f32 0.0, %v1950
        %v1952 = vpop.f32.mrb[0].mxu0
        %1953 = vmatprep.mubr.bf16.mxu0 0
        %1954 = vmatmul.mubr.bf16.gmra.mrb[0].mxu0 %v1796
        %v1955 = vpop.f32.mrb[0].mxu0
        %v1956 = vadd.f32 0.0, %v1955
        %v1957 = vpop.f32.mrb[0].mxu0
        %v1958 = vpop.f32.mrb[0].mxu0
        %v1959 = vadd.f32 0.0, %v1958
        %v1960 = vpop.f32.mrb[0].mxu0
        %1961 = vdwg.mxu0
        %v1962 = vld [vmem:[#allocation3] sm:$0xff]
        %v1963 = vld [vmem:[#allocation3 + $0x8] sm:$0xff]
        %v1964 = vld [vmem:[#allocation3 + $0x10] sm:$0xff]
        %v1965 = vld [vmem:[#allocation3 + $0x18] sm:$0xff]
        %v1966 = vld [vmem:[#allocation3 + $0x20] sm:$0xff]
        %v1967 = vld [vmem:[#allocation3 + $0x28] sm:$0xff]
        %v1968 = vld [vmem:[#allocation3 + $0x30] sm:$0xff]
        %v1969 = vld [vmem:[#allocation3 + $0x38] sm:$0xff]
        %v1970 = vld [vmem:[#allocation3 + $0x40] sm:$0xff]
        %v1971 = vld [vmem:[#allocation3 + $0x48] sm:$0xff]
        %v1972 = vld [vmem:[#allocation3 + $0x50] sm:$0xff]
        %v1973 = vld [vmem:[#allocation3 + $0x58] sm:$0xff]
        %v1974 = vld [vmem:[#allocation3 + $0x60] sm:$0xff]
        %v1975 = vld [vmem:[#allocation3 + $0x68] sm:$0xff]
        %v1976 = vld [vmem:[#allocation3 + $0x70] sm:$0xff]
        %v1977 = vld [vmem:[#allocation3 + $0x78] sm:$0xff]
        %v1978 = vld [vmem:[#allocation3 + $0x80] sm:$0xff]
        %v1979 = vld [vmem:[#allocation3 + $0x88] sm:$0xff]
        %v1980 = vld [vmem:[#allocation3 + $0x90] sm:$0xff]
        %v1981 = vld [vmem:[#allocation3 + $0x98] sm:$0xff]
        %v1982 = vld [vmem:[#allocation3 + $0xa0] sm:$0xff]
        %v1983 = vld [vmem:[#allocation3 + $0xa8] sm:$0xff]
        %v1984 = vld [vmem:[#allocation3 + $0xb0] sm:$0xff]
        %v1985 = vld [vmem:[#allocation3 + $0xb8] sm:$0xff]
        %v1986 = vld [vmem:[#allocation3 + $0xc0] sm:$0xff]
        %v1987 = vld [vmem:[#allocation3 + $0xc8] sm:$0xff]
        %v1988 = vld [vmem:[#allocation3 + $0xd0] sm:$0xff]
        %v1989 = vld [vmem:[#allocation3 + $0xd8] sm:$0xff]
        %v1990 = vld [vmem:[#allocation3 + $0xe0] sm:$0xff]
        %v1991 = vld [vmem:[#allocation3 + $0xe8] sm:$0xff]
        %v1992 = vld [vmem:[#allocation3 + $0xf0] sm:$0xff]
        %v1993 = vld [vmem:[#allocation3 + $0xf8] sm:$0xff]
        %v1994 = vadd.f32 %v1962, %v1836
        %v1995 = vadd.f32 %v1963, %v1839
        %v1996 = vadd.f32 %v1964, %v1844
        %v1997 = vadd.f32 %v1965, %v1847
        %v1998 = vadd.f32 %v1966, %v1852
        %v1999 = vadd.f32 %v1967, %v1855
        %v2000 = vadd.f32 %v1968, %v1860
        %v2001 = vadd.f32 %v1969, %v1863
        %v2002 = vadd.f32 %v1970, %v1868
        %v2003 = vadd.f32 %v1971, %v1871
        %v2004 = vadd.f32 %v1972, %v1876
        %v2005 = vadd.f32 %v1973, %v1879
        %v2006 = vadd.f32 %v1974, %v1884
        %v2007 = vadd.f32 %v1975, %v1887
        %v2008 = vadd.f32 %v1976, %v1892
        %v2009 = vadd.f32 %v1977, %v1895
        %v2010 = vadd.f32 %v1978, %v1900
        %v2011 = vadd.f32 %v1979, %v1903
        %v2012 = vadd.f32 %v1980, %v1908
        %v2013 = vadd.f32 %v1981, %v1911
        %v2014 = vadd.f32 %v1982, %v1916
        %v2015 = vadd.f32 %v1983, %v1919
        %v2016 = vadd.f32 %v1984, %v1924
        %v2017 = vadd.f32 %v1985, %v1927
        %v2018 = vadd.f32 %v1986, %v1932
        %v2019 = vadd.f32 %v1987, %v1935
        %v2020 = vadd.f32 %v1988, %v1940
        %v2021 = vadd.f32 %v1989, %v1943
        %v2022 = vadd.f32 %v1990, %v1948
        %v2023 = vadd.f32 %v1991, %v1951
        %v2024 = vadd.f32 %v1992, %v1956
        %v2025 = vadd.f32 %v1993, %v1959
        %2026 = vst.msk [vmem:[#allocation3] sm:$0xff] %vm611, %v1994
        %2027 = vst.msk [vmem:[#allocation3 + $0x8] sm:$0xff] %vm611, %v1995
        %2028 = vst.msk [vmem:[#allocation3 + $0x10] sm:$0xff] %vm611, %v1996
        %2029 = vst.msk [vmem:[#allocation3 + $0x18] sm:$0xff] %vm611, %v1997
        %2030 = vst.msk [vmem:[#allocation3 + $0x20] sm:$0xff] %vm611, %v1998
        %2031 = vst.msk [vmem:[#allocation3 + $0x28] sm:$0xff] %vm611, %v1999
        %2032 = vst.msk [vmem:[#allocation3 + $0x30] sm:$0xff] %vm611, %v2000
        %2033 = vst.msk [vmem:[#allocation3 + $0x38] sm:$0xff] %vm611, %v2001
        %2034 = vst.msk [vmem:[#allocation3 + $0x40] sm:$0xff] %vm611, %v2002
        %2035 = vst.msk [vmem:[#allocation3 + $0x48] sm:$0xff] %vm611, %v2003
        %2036 = vst.msk [vmem:[#allocation3 + $0x50] sm:$0xff] %vm611, %v2004
        %2037 = vst.msk [vmem:[#allocation3 + $0x58] sm:$0xff] %vm611, %v2005
        %2038 = vst.msk [vmem:[#allocation3 + $0x60] sm:$0xff] %vm611, %v2006
        %2039 = vst.msk [vmem:[#allocation3 + $0x68] sm:$0xff] %vm611, %v2007
        %2040 = vst.msk [vmem:[#allocation3 + $0x70] sm:$0xff] %vm611, %v2008
        %2041 = vst.msk [vmem:[#allocation3 + $0x78] sm:$0xff] %vm611, %v2009
        %2042 = vst.msk [vmem:[#allocation3 + $0x80] sm:$0xff] %vm611, %v2010
        %2043 = vst.msk [vmem:[#allocation3 + $0x88] sm:$0xff] %vm611, %v2011
        %2044 = vst.msk [vmem:[#allocation3 + $0x90] sm:$0xff] %vm611, %v2012
        %2045 = vst.msk [vmem:[#allocation3 + $0x98] sm:$0xff] %vm611, %v2013
        %2046 = vst.msk [vmem:[#allocation3 + $0xa0] sm:$0xff] %vm611, %v2014
        %2047 = vst.msk [vmem:[#allocation3 + $0xa8] sm:$0xff] %vm611, %v2015
        %2048 = vst.msk [vmem:[#allocation3 + $0xb0] sm:$0xff] %vm611, %v2016
        %2049 = vst.msk [vmem:[#allocation3 + $0xb8] sm:$0xff] %vm611, %v2017
        %2050 = vst.msk [vmem:[#allocation3 + $0xc0] sm:$0xff] %vm611, %v2018
        %2051 = vst.msk [vmem:[#allocation3 + $0xc8] sm:$0xff] %vm611, %v2019
        %2052 = vst.msk [vmem:[#allocation3 + $0xd0] sm:$0xff] %vm611, %v2020
        %2053 = vst.msk [vmem:[#allocation3 + $0xd8] sm:$0xff] %vm611, %v2021
        %2054 = vst.msk [vmem:[#allocation3 + $0xe0] sm:$0xff] %vm611, %v2022
        %2055 = vst.msk [vmem:[#allocation3 + $0xe8] sm:$0xff] %vm611, %v2023
        %2056 = vst.msk [vmem:[#allocation3 + $0xf0] sm:$0xff] %vm611, %v2024
        %2057 = vst.msk [vmem:[#allocation3 + $0xf8] sm:$0xff] %vm611, %v2025
        %v2058 = vld [vmem:[%s657 + $0x8] sm:$0xff]
        %v2059 = vld [vmem:[%s657 + $0x10] sm:$0xff]
        %v2060 = vld [vmem:[%s657 + $0x28] sm:$0xff]
        %v2061 = vld [vmem:[%s657 + $0x30] sm:$0xff]
        %v2062 = vld [vmem:[%s657 + $0x48] sm:$0xff]
        %v2063 = vld [vmem:[%s657 + $0x50] sm:$0xff]
        %v2064 = vld [vmem:[%s657 + $0x68] sm:$0xff]
        %v2065 = vld [vmem:[%s657 + $0x70] sm:$0xff]
        %v2066 = vld [vmem:[%s657 + $0x88] sm:$0xff]
        %v2067 = vld [vmem:[%s657 + $0x90] sm:$0xff]
        %v2068 = vld [vmem:[%s657 + $0xa8] sm:$0xff]
        %v2069 = vld [vmem:[%s657 + $0xb0] sm:$0xff]
        %v2070 = vld [vmem:[%s657 + $0xc8] sm:$0xff]
        %v2071 = vld [vmem:[%s657 + $0xd0] sm:$0xff]
        %v2072 = vld [vmem:[%s657 + $0xe8] sm:$0xff]
        %v2073 = vld [vmem:[%s657 + $0xf0] sm:$0xff]
        %v2074 = vld [vmem:[%s657 + $0x108] sm:$0xff]
        %v2075 = vld [vmem:[%s657 + $0x110] sm:$0xff]
        %v2076 = vld [vmem:[%s657 + $0x128] sm:$0xff]
        %v2077 = vld [vmem:[%s657 + $0x130] sm:$0xff]
        %v2078 = vld [vmem:[%s657 + $0x148] sm:$0xff]
        %v2079 = vld [vmem:[%s657 + $0x150] sm:$0xff]
        %v2080 = vld [vmem:[%s657 + $0x168] sm:$0xff]
        %v2081 = vld [vmem:[%s657 + $0x170] sm:$0xff]
        %v2082 = vld [vmem:[%s657 + $0x188] sm:$0xff]
        %v2083 = vld [vmem:[%s657 + $0x190] sm:$0xff]
        %v2084 = vld [vmem:[%s657 + $0x1a8] sm:$0xff]
        %v2085 = vld [vmem:[%s657 + $0x1b0] sm:$0xff]
        %v2086 = vld [vmem:[%s657 + $0x1c8] sm:$0xff]
        %v2087 = vld [vmem:[%s657 + $0x1d0] sm:$0xff]
        %v2088 = vld [vmem:[%s657 + $0x1e8] sm:$0xff]
        %v2089 = vld [vmem:[%s657 + $0x1f0] sm:$0xff]
        %v2090 = vpack.c.bf16 %v2059, %v2058
        %v2091 = vpack.c.bf16 %v2061, %v2060
        %v2092 = vpack.c.bf16 %v2063, %v2062
        %v2093 = vpack.c.bf16 %v2065, %v2064
        %v2094 = vpack.c.bf16 %v2067, %v2066
        %v2095 = vpack.c.bf16 %v2069, %v2068
        %v2096 = vpack.c.bf16 %v2071, %v2070
        %v2097 = vpack.c.bf16 %v2073, %v2072
        %v2098 = vpack.c.bf16 %v2075, %v2074
        %v2099 = vpack.c.bf16 %v2077, %v2076
        %v2100 = vpack.c.bf16 %v2079, %v2078
        %v2101 = vpack.c.bf16 %v2081, %v2080
        %v2102 = vpack.c.bf16 %v2083, %v2082
        %v2103 = vpack.c.bf16 %v2085, %v2084
        %v2104 = vpack.c.bf16 %v2087, %v2086
        %v2105 = vpack.c.bf16 %v2089, %v2088
        %s2106 = scalar_lea.vmem %s3, 16
        %v2107 = vld [vmem:[%s2106] sm:$0xf]
        %v2109 = vsel %vm611, %v2090, 0
        %v2112 = vsel %vm611, %v2091, 0
        %v2115 = vsel %vm611, %v2092, 0
        %v2118 = vsel %vm611, %v2093, 0
        %v2121 = vsel %vm611, %v2094, 0
        %v2124 = vsel %vm611, %v2095, 0
        %v2127 = vsel %vm611, %v2096, 0
        %v2130 = vsel %vm611, %v2097, 0
        %v2133 = vsel %vm611, %v2098, 0
        %v2136 = vsel %vm611, %v2099, 0
        %v2139 = vsel %vm611, %v2100, 0
        %v2142 = vsel %vm611, %v2101, 0
        %v2145 = vsel %vm611, %v2102, 0
        %v2148 = vsel %vm611, %v2103, 0
        %v2151 = vsel %vm611, %v2104, 0
        %v2154 = vsel %vm611, %v2105, 0
        %v2157 = vsel %vm787, %v2107, 0
        %2159 = vmatprep.subr.bf16.mxu0 0
        %2160 = vmatpush1.bf16.msra.mxu0 %v2157
        %2161 = vmatprep.subr.bf16.mxu0 0
        %2162 = vmatpush1.bf16.msra.mxu0 0
        %2163 = vmatprep.subr.bf16.mxu0 0
        %2164 = vmatpush1.bf16.msra.mxu0 0
        %2165 = vmatprep.subr.bf16.mxu0 0
        %2166 = vmatpush1.bf16.msra.mxu0 0
        %2167 = vmatprep.subr.bf16.mxu0 0
        %2168 = vmatpush1.bf16.msra.mxu0 0
        %2169 = vmatprep.subr.bf16.mxu0 0
        %2170 = vmatpush1.bf16.msra.mxu0 0
        %2171 = vmatprep.subr.bf16.mxu0 0
        %2172 = vmatpush1.bf16.msra.mxu0 0
        %2173 = vmatprep.subr.bf16.mxu0 0
        %2174 = vmatpush1.bf16.msra.mxu0 0
        %2175 = vmatprep.subr.bf16.mxu0 0
        %2176 = vmatpush1.bf16.msra.mxu0 0
        %2177 = vmatprep.subr.bf16.mxu0 0
        %2178 = vmatpush1.bf16.msra.mxu0 0
        %2179 = vmatprep.subr.bf16.mxu0 0
        %2180 = vmatpush1.bf16.msra.mxu0 0
        %2181 = vmatprep.subr.bf16.mxu0 0
        %2182 = vmatpush1.bf16.msra.mxu0 0
        %2183 = vmatprep.subr.bf16.mxu0 0
        %2184 = vmatpush1.bf16.msra.mxu0 0
        %2185 = vmatprep.subr.bf16.mxu0 0
        %2186 = vmatpush1.bf16.msra.mxu0 0
        %2187 = vmatprep.subr.bf16.mxu0 0
        %2188 = vmatpush1.bf16.msra.mxu0 0
        %2189 = vmatprep.subr.bf16.mxu0 0
        %2190 = vmatpush1.bf16.msra.mxu0 0
        %2191 = vmatprep.mubr.bf16.mxu0 0
        %2192 = vmatmul.mubr.bf16.gmra.mrb[0].mxu0 %v2109
        %v2193 = vpop.f32.mrb[0].mxu0
        %v2194 = vadd.f32 0.0, %v2193
        %v2195 = vpop.f32.mrb[0].mxu0
        %v2196 = vpop.f32.mrb[0].mxu0
        %v2197 = vadd.f32 0.0, %v2196
        %v2198 = vpop.f32.mrb[0].mxu0
        %2199 = vmatprep.mubr.bf16.mxu0 0
        %2200 = vmatmul.mubr.bf16.gmra.mrb[0].mxu0 %v2112
        %v2201 = vpop.f32.mrb[0].mxu0
        %v2202 = vadd.f32 0.0, %v2201
        %v2203 = vpop.f32.mrb[0].mxu0
        %v2204 = vpop.f32.mrb[0].mxu0
        %v2205 = vadd.f32 0.0, %v2204
        %v2206 = vpop.f32.mrb[0].mxu0
        %2207 = vmatprep.mubr.bf16.mxu0 0
        %2208 = vmatmul.mubr.bf16.gmra.mrb[0].mxu0 %v2115
        %v2209 = vpop.f32.mrb[0].mxu0
        %v2210 = vadd.f32 0.0, %v2209
        %v2211 = vpop.f32.mrb[0].mxu0
        %v2212 = vpop.f32.mrb[0].mxu0
        %v2213 = vadd.f32 0.0, %v2212
        %v2214 = vpop.f32.mrb[0].mxu0
        %2215 = vmatprep.mubr.bf16.mxu0 0
        %2216 = vmatmul.mubr.bf16.gmra.mrb[0].mxu0 %v2118
        %v2217 = vpop.f32.mrb[0].mxu0
        %v2218 = vadd.f32 0.0, %v2217
        %v2219 = vpop.f32.mrb[0].mxu0
        %v2220 = vpop.f32.mrb[0].mxu0
        %v2221 = vadd.f32 0.0, %v2220
        %v2222 = vpop.f32.mrb[0].mxu0
        %2223 = vmatprep.mubr.bf16.mxu0 0
        %2224 = vmatmul.mubr.bf16.gmra.mrb[0].mxu0 %v2121
        %v2225 = vpop.f32.mrb[0].mxu0
        %v2226 = vadd.f32 0.0, %v2225
        %v2227 = vpop.f32.mrb[0].mxu0
        %v2228 = vpop.f32.mrb[0].mxu0
        %v2229 = vadd.f32 0.0, %v2228
        %v2230 = vpop.f32.mrb[0].mxu0
        %2231 = vmatprep.mubr.bf16.mxu0 0
        %2232 = vmatmul.mubr.bf16.gmra.mrb[0].mxu0 %v2124
        %v2233 = vpop.f32.mrb[0].mxu0
        %v2234 = vadd.f32 0.0, %v2233
        %v2235 = vpop.f32.mrb[0].mxu0
        %v2236 = vpop.f32.mrb[0].mxu0
        %v2237 = vadd.f32 0.0, %v2236
        %v2238 = vpop.f32.mrb[0].mxu0
        %2239 = vmatprep.mubr.bf16.mxu0 0
        %2240 = vmatmul.mubr.bf16.gmra.mrb[0].mxu0 %v2127
        %v2241 = vpop.f32.mrb[0].mxu0
        %v2242 = vadd.f32 0.0, %v2241
        %v2243 = vpop.f32.mrb[0].mxu0
        %v2244 = vpop.f32.mrb[0].mxu0
        %v2245 = vadd.f32 0.0, %v2244
        %v2246 = vpop.f32.mrb[0].mxu0
        %2247 = vmatprep.mubr.bf16.mxu0 0
        %2248 = vmatmul.mubr.bf16.gmra.mrb[0].mxu0 %v2130
        %v2249 = vpop.f32.mrb[0].mxu0
        %v2250 = vadd.f32 0.0, %v2249
        %v2251 = vpop.f32.mrb[0].mxu0
        %v2252 = vpop.f32.mrb[0].mxu0
        %v2253 = vadd.f32 0.0, %v2252
        %v2254 = vpop.f32.mrb[0].mxu0
        %2255 = vmatprep.mubr.bf16.mxu0 0
        %2256 = vmatmul.mubr.bf16.gmra.mrb[0].mxu0 %v2133
        %v2257 = vpop.f32.mrb[0].mxu0
        %v2258 = vadd.f32 0.0, %v2257
        %v2259 = vpop.f32.mrb[0].mxu0
        %v2260 = vpop.f32.mrb[0].mxu0
        %v2261 = vadd.f32 0.0, %v2260
        %v2262 = vpop.f32.mrb[0].mxu0
        %2263 = vmatprep.mubr.bf16.mxu0 0
        %2264 = vmatmul.mubr.bf16.gmra.mrb[0].mxu0 %v2136
        %v2265 = vpop.f32.mrb[0].mxu0
        %v2266 = vadd.f32 0.0, %v2265
        %v2267 = vpop.f32.mrb[0].mxu0
        %v2268 = vpop.f32.mrb[0].mxu0
        %v2269 = vadd.f32 0.0, %v2268
        %v2270 = vpop.f32.mrb[0].mxu0
        %2271 = vmatprep.mubr.bf16.mxu0 0
        %2272 = vmatmul.mubr.bf16.gmra.mrb[0].mxu0 %v2139
        %v2273 = vpop.f32.mrb[0].mxu0
        %v2274 = vadd.f32 0.0, %v2273
        %v2275 = vpop.f32.mrb[0].mxu0
        %v2276 = vpop.f32.mrb[0].mxu0
        %v2277 = vadd.f32 0.0, %v2276
        %v2278 = vpop.f32.mrb[0].mxu0
        %2279 = vmatprep.mubr.bf16.mxu0 0
        %2280 = vmatmul.mubr.bf16.gmra.mrb[0].mxu0 %v2142
        %v2281 = vpop.f32.mrb[0].mxu0
        %v2282 = vadd.f32 0.0, %v2281
        %v2283 = vpop.f32.mrb[0].mxu0
        %v2284 = vpop.f32.mrb[0].mxu0
        %v2285 = vadd.f32 0.0, %v2284
        %v2286 = vpop.f32.mrb[0].mxu0
        %2287 = vmatprep.mubr.bf16.mxu0 0
        %2288 = vmatmul.mubr.bf16.gmra.mrb[0].mxu0 %v2145
        %v2289 = vpop.f32.mrb[0].mxu0
        %v2290 = vadd.f32 0.0, %v2289
        %v2291 = vpop.f32.mrb[0].mxu0
        %v2292 = vpop.f32.mrb[0].mxu0
        %v2293 = vadd.f32 0.0, %v2292
        %v2294 = vpop.f32.mrb[0].mxu0
        %2295 = vmatprep.mubr.bf16.mxu0 0
        %2296 = vmatmul.mubr.bf16.gmra.mrb[0].mxu0 %v2148
        %v2297 = vpop.f32.mrb[0].mxu0
        %v2298 = vadd.f32 0.0, %v2297
        %v2299 = vpop.f32.mrb[0].mxu0
        %v2300 = vpop.f32.mrb[0].mxu0
        %v2301 = vadd.f32 0.0, %v2300
        %v2302 = vpop.f32.mrb[0].mxu0
        %2303 = vmatprep.mubr.bf16.mxu0 0
        %2304 = vmatmul.mubr.bf16.gmra.mrb[0].mxu0 %v2151
        %v2305 = vpop.f32.mrb[0].mxu0
        %v2306 = vadd.f32 0.0, %v2305
        %v2307 = vpop.f32.mrb[0].mxu0
        %v2308 = vpop.f32.mrb[0].mxu0
        %v2309 = vadd.f32 0.0, %v2308
        %v2310 = vpop.f32.mrb[0].mxu0
        %2311 = vmatprep.mubr.bf16.mxu0 0
        %2312 = vmatmul.mubr.bf16.gmra.mrb[0].mxu0 %v2154
        %v2313 = vpop.f32.mrb[0].mxu0
        %v2314 = vadd.f32 0.0, %v2313
        %v2315 = vpop.f32.mrb[0].mxu0
        %v2316 = vpop.f32.mrb[0].mxu0
        %v2317 = vadd.f32 0.0, %v2316
        %v2318 = vpop.f32.mrb[0].mxu0
        %2319 = vdwg.mxu0
        %v2320 = vld [vmem:[#allocation3] sm:$0xff]
        %v2321 = vld [vmem:[#allocation3 + $0x8] sm:$0xff]
        %v2322 = vld [vmem:[#allocation3 + $0x10] sm:$0xff]
        %v2323 = vld [vmem:[#allocation3 + $0x18] sm:$0xff]
        %v2324 = vld [vmem:[#allocation3 + $0x20] sm:$0xff]
        %v2325 = vld [vmem:[#allocation3 + $0x28] sm:$0xff]
        %v2326 = vld [vmem:[#allocation3 + $0x30] sm:$0xff]
        %v2327 = vld [vmem:[#allocation3 + $0x38] sm:$0xff]
        %v2328 = vld [vmem:[#allocation3 + $0x40] sm:$0xff]
        %v2329 = vld [vmem:[#allocation3 + $0x48] sm:$0xff]
        %v2330 = vld [vmem:[#allocation3 + $0x50] sm:$0xff]
        %v2331 = vld [vmem:[#allocation3 + $0x58] sm:$0xff]
        %v2332 = vld [vmem:[#allocation3 + $0x60] sm:$0xff]
        %v2333 = vld [vmem:[#allocation3 + $0x68] sm:$0xff]
        %v2334 = vld [vmem:[#allocation3 + $0x70] sm:$0xff]
        %v2335 = vld [vmem:[#allocation3 + $0x78] sm:$0xff]
        %v2336 = vld [vmem:[#allocation3 + $0x80] sm:$0xff]
        %v2337 = vld [vmem:[#allocation3 + $0x88] sm:$0xff]
        %v2338 = vld [vmem:[#allocation3 + $0x90] sm:$0xff]
        %v2339 = vld [vmem:[#allocation3 + $0x98] sm:$0xff]
        %v2340 = vld [vmem:[#allocation3 + $0xa0] sm:$0xff]
        %v2341 = vld [vmem:[#allocation3 + $0xa8] sm:$0xff]
        %v2342 = vld [vmem:[#allocation3 + $0xb0] sm:$0xff]
        %v2343 = vld [vmem:[#allocation3 + $0xb8] sm:$0xff]
        %v2344 = vld [vmem:[#allocation3 + $0xc0] sm:$0xff]
        %v2345 = vld [vmem:[#allocation3 + $0xc8] sm:$0xff]
        %v2346 = vld [vmem:[#allocation3 + $0xd0] sm:$0xff]
        %v2347 = vld [vmem:[#allocation3 + $0xd8] sm:$0xff]
        %v2348 = vld [vmem:[#allocation3 + $0xe0] sm:$0xff]
        %v2349 = vld [vmem:[#allocation3 + $0xe8] sm:$0xff]
        %v2350 = vld [vmem:[#allocation3 + $0xf0] sm:$0xff]
        %v2351 = vld [vmem:[#allocation3 + $0xf8] sm:$0xff]
        %v2352 = vadd.f32 %v2320, %v2194
        %v2353 = vadd.f32 %v2321, %v2197
        %v2354 = vadd.f32 %v2322, %v2202
        %v2355 = vadd.f32 %v2323, %v2205
        %v2356 = vadd.f32 %v2324, %v2210
        %v2357 = vadd.f32 %v2325, %v2213
        %v2358 = vadd.f32 %v2326, %v2218
        %v2359 = vadd.f32 %v2327, %v2221
        %v2360 = vadd.f32 %v2328, %v2226
        %v2361 = vadd.f32 %v2329, %v2229
        %v2362 = vadd.f32 %v2330, %v2234
        %v2363 = vadd.f32 %v2331, %v2237
        %v2364 = vadd.f32 %v2332, %v2242
        %v2365 = vadd.f32 %v2333, %v2245
        %v2366 = vadd.f32 %v2334, %v2250
        %v2367 = vadd.f32 %v2335, %v2253
        %v2368 = vadd.f32 %v2336, %v2258
        %v2369 = vadd.f32 %v2337, %v2261
        %v2370 = vadd.f32 %v2338, %v2266
        %v2371 = vadd.f32 %v2339, %v2269
        %v2372 = vadd.f32 %v2340, %v2274
        %v2373 = vadd.f32 %v2341, %v2277
        %v2374 = vadd.f32 %v2342, %v2282
        %v2375 = vadd.f32 %v2343, %v2285
        %v2376 = vadd.f32 %v2344, %v2290
        %v2377 = vadd.f32 %v2345, %v2293
        %v2378 = vadd.f32 %v2346, %v2298
        %v2379 = vadd.f32 %v2347, %v2301
        %v2380 = vadd.f32 %v2348, %v2306
        %v2381 = vadd.f32 %v2349, %v2309
        %v2382 = vadd.f32 %v2350, %v2314
        %v2383 = vadd.f32 %v2351, %v2317
        %2384 = vst.msk [vmem:[#allocation3] sm:$0xff] %vm611, %v2352
        %2385 = vst.msk [vmem:[#allocation3 + $0x8] sm:$0xff] %vm611, %v2353
        %2386 = vst.msk [vmem:[#allocation3 + $0x10] sm:$0xff] %vm611, %v2354
        %2387 = vst.msk [vmem:[#allocation3 + $0x18] sm:$0xff] %vm611, %v2355
        %2388 = vst.msk [vmem:[#allocation3 + $0x20] sm:$0xff] %vm611, %v2356
        %2389 = vst.msk [vmem:[#allocation3 + $0x28] sm:$0xff] %vm611, %v2357
        %2390 = vst.msk [vmem:[#allocation3 + $0x30] sm:$0xff] %vm611, %v2358
        %2391 = vst.msk [vmem:[#allocation3 + $0x38] sm:$0xff] %vm611, %v2359
        %2392 = vst.msk [vmem:[#allocation3 + $0x40] sm:$0xff] %vm611, %v2360
        %2393 = vst.msk [vmem:[#allocation3 + $0x48] sm:$0xff] %vm611, %v2361
        %2394 = vst.msk [vmem:[#allocation3 + $0x50] sm:$0xff] %vm611, %v2362
        %2395 = vst.msk [vmem:[#allocation3 + $0x58] sm:$0xff] %vm611, %v2363
        %2396 = vst.msk [vmem:[#allocation3 + $0x60] sm:$0xff] %vm611, %v2364
        %2397 = vst.msk [vmem:[#allocation3 + $0x68] sm:$0xff] %vm611, %v2365
        %2398 = vst.msk [vmem:[#allocation3 + $0x70] sm:$0xff] %vm611, %v2366
        %2399 = vst.msk [vmem:[#allocation3 + $0x78] sm:$0xff] %vm611, %v2367
        %2400 = vst.msk [vmem:[#allocation3 + $0x80] sm:$0xff] %vm611, %v2368
        %2401 = vst.msk [vmem:[#allocation3 + $0x88] sm:$0xff] %vm611, %v2369
        %2402 = vst.msk [vmem:[#allocation3 + $0x90] sm:$0xff] %vm611, %v2370
        %2403 = vst.msk [vmem:[#allocation3 + $0x98] sm:$0xff] %vm611, %v2371
        %2404 = vst.msk [vmem:[#allocation3 + $0xa0] sm:$0xff] %vm611, %v2372
        %2405 = vst.msk [vmem:[#allocation3 + $0xa8] sm:$0xff] %vm611, %v2373
        %2406 = vst.msk [vmem:[#allocation3 + $0xb0] sm:$0xff] %vm611, %v2374
        %2407 = vst.msk [vmem:[#allocation3 + $0xb8] sm:$0xff] %vm611, %v2375
        %2408 = vst.msk [vmem:[#allocation3 + $0xc0] sm:$0xff] %vm611, %v2376
        %2409 = vst.msk [vmem:[#allocation3 + $0xc8] sm:$0xff] %vm611, %v2377
        %2410 = vst.msk [vmem:[#allocation3 + $0xd0] sm:$0xff] %vm611, %v2378
        %2411 = vst.msk [vmem:[#allocation3 + $0xd8] sm:$0xff] %vm611, %v2379
        %2412 = vst.msk [vmem:[#allocation3 + $0xe0] sm:$0xff] %vm611, %v2380
        %2413 = vst.msk [vmem:[#allocation3 + $0xe8] sm:$0xff] %vm611, %v2381
        %2414 = vst.msk [vmem:[#allocation3 + $0xf0] sm:$0xff] %vm611, %v2382
        %2415 = vst.msk [vmem:[#allocation3 + $0xf8] sm:$0xff] %vm611, %v2383
        %v2416 = vld [vmem:[%s657 + $0x9] sm:$0xff]
        %v2417 = vld [vmem:[%s657 + $0x11] sm:$0xff]
        %v2418 = vld [vmem:[%s657 + $0x29] sm:$0xff]
        %v2419 = vld [vmem:[%s657 + $0x31] sm:$0xff]
        %v2420 = vld [vmem:[%s657 + $0x49] sm:$0xff]
        %v2421 = vld [vmem:[%s657 + $0x51] sm:$0xff]
        %v2422 = vld [vmem:[%s657 + $0x69] sm:$0xff]
        %v2423 = vld [vmem:[%s657 + $0x71] sm:$0xff]
        %v2424 = vld [vmem:[%s657 + $0x89] sm:$0xff]
        %v2425 = vld [vmem:[%s657 + $0x91] sm:$0xff]
        %v2426 = vld [vmem:[%s657 + $0xa9] sm:$0xff]
        %v2427 = vld [vmem:[%s657 + $0xb1] sm:$0xff]
        %v2428 = vld [vmem:[%s657 + $0xc9] sm:$0xff]
        %v2429 = vld [vmem:[%s657 + $0xd1] sm:$0xff]
        %v2430 = vld [vmem:[%s657 + $0xe9] sm:$0xff]
        %v2431 = vld [vmem:[%s657 + $0xf1] sm:$0xff]
        %v2432 = vld [vmem:[%s657 + $0x109] sm:$0xff]
        %v2433 = vld [vmem:[%s657 + $0x111] sm:$0xff]
        %v2434 = vld [vmem:[%s657 + $0x129] sm:$0xff]
        %v2435 = vld [vmem:[%s657 + $0x131] sm:$0xff]
        %v2436 = vld [vmem:[%s657 + $0x149] sm:$0xff]
        %v2437 = vld [vmem:[%s657 + $0x151] sm:$0xff]
        %v2438 = vld [vmem:[%s657 + $0x169] sm:$0xff]
        %v2439 = vld [vmem:[%s657 + $0x171] sm:$0xff]
        %v2440 = vld [vmem:[%s657 + $0x189] sm:$0xff]
        %v2441 = vld [vmem:[%s657 + $0x191] sm:$0xff]
        %v2442 = vld [vmem:[%s657 + $0x1a9] sm:$0xff]
        %v2443 = vld [vmem:[%s657 + $0x1b1] sm:$0xff]
        %v2444 = vld [vmem:[%s657 + $0x1c9] sm:$0xff]
        %v2445 = vld [vmem:[%s657 + $0x1d1] sm:$0xff]
        %v2446 = vld [vmem:[%s657 + $0x1e9] sm:$0xff]
        %v2447 = vld [vmem:[%s657 + $0x1f1] sm:$0xff]
        %v2448 = vpack.c.bf16 %v2417, %v2416
        %v2449 = vpack.c.bf16 %v2419, %v2418
        %v2450 = vpack.c.bf16 %v2421, %v2420
        %v2451 = vpack.c.bf16 %v2423, %v2422
        %v2452 = vpack.c.bf16 %v2425, %v2424
        %v2453 = vpack.c.bf16 %v2427, %v2426
        %v2454 = vpack.c.bf16 %v2429, %v2428
        %v2455 = vpack.c.bf16 %v2431, %v2430
        %v2456 = vpack.c.bf16 %v2433, %v2432
        %v2457 = vpack.c.bf16 %v2435, %v2434
        %v2458 = vpack.c.bf16 %v2437, %v2436
        %v2459 = vpack.c.bf16 %v2439, %v2438
        %v2460 = vpack.c.bf16 %v2441, %v2440
        %v2461 = vpack.c.bf16 %v2443, %v2442
        %v2462 = vpack.c.bf16 %v2445, %v2444
        %v2463 = vpack.c.bf16 %v2447, %v2446
        %s2464 = scalar_lea.vmem %s3, 20
        %v2465 = vld [vmem:[%s2464] sm:$0xf]
        %v2467 = vsel %vm611, %v2448, 0
        %v2470 = vsel %vm611, %v2449, 0
        %v2473 = vsel %vm611, %v2450, 0
        %v2476 = vsel %vm611, %v2451, 0
        %v2479 = vsel %vm611, %v2452, 0
        %v2482 = vsel %vm611, %v2453, 0
        %v2485 = vsel %vm611, %v2454, 0
        %v2488 = vsel %vm611, %v2455, 0
        %v2491 = vsel %vm611, %v2456, 0
        %v2494 = vsel %vm611, %v2457, 0
        %v2497 = vsel %vm611, %v2458, 0
        %v2500 = vsel %vm611, %v2459, 0
        %v2503 = vsel %vm611, %v2460, 0
        %v2506 = vsel %vm611, %v2461, 0
        %v2509 = vsel %vm611, %v2462, 0
        %v2512 = vsel %vm611, %v2463, 0
        %v2515 = vsel %vm787, %v2465, 0
        %2517 = vmatprep.subr.bf16.mxu0 0
        %2518 = vmatpush1.bf16.msra.mxu0 %v2515
        %2519 = vmatprep.subr.bf16.mxu0 0
        %2520 = vmatpush1.bf16.msra.mxu0 0
        %2521 = vmatprep.subr.bf16.mxu0 0
        %2522 = vmatpush1.bf16.msra.mxu0 0
        %2523 = vmatprep.subr.bf16.mxu0 0
        %2524 = vmatpush1.bf16.msra.mxu0 0
        %2525 = vmatprep.subr.bf16.mxu0 0
        %2526 = vmatpush1.bf16.msra.mxu0 0
        %2527 = vmatprep.subr.bf16.mxu0 0
        %2528 = vmatpush1.bf16.msra.mxu0 0
        %2529 = vmatprep.subr.bf16.mxu0 0
        %2530 = vmatpush1.bf16.msra.mxu0 0
        %2531 = vmatprep.subr.bf16.mxu0 0
        %2532 = vmatpush1.bf16.msra.mxu0 0
        %2533 = vmatprep.subr.bf16.mxu0 0
        %2534 = vmatpush1.bf16.msra.mxu0 0
        %2535 = vmatprep.subr.bf16.mxu0 0
        %2536 = vmatpush1.bf16.msra.mxu0 0
        %2537 = vmatprep.subr.bf16.mxu0 0
        %2538 = vmatpush1.bf16.msra.mxu0 0
        %2539 = vmatprep.subr.bf16.mxu0 0
        %2540 = vmatpush1.bf16.msra.mxu0 0
        %2541 = vmatprep.subr.bf16.mxu0 0
        %2542 = vmatpush1.bf16.msra.mxu0 0
        %2543 = vmatprep.subr.bf16.mxu0 0
        %2544 = vmatpush1.bf16.msra.mxu0 0
        %2545 = vmatprep.subr.bf16.mxu0 0
        %2546 = vmatpush1.bf16.msra.mxu0 0
        %2547 = vmatprep.subr.bf16.mxu0 0
        %2548 = vmatpush1.bf16.msra.mxu0 0
        %2549 = vmatprep.mubr.bf16.mxu0 0
        %2550 = vmatmul.mubr.bf16.gmra.mrb[0].mxu0 %v2467
        %v2551 = vpop.f32.mrb[0].mxu0
        %v2552 = vadd.f32 0.0, %v2551
        %v2553 = vpop.f32.mrb[0].mxu0
        %v2554 = vpop.f32.mrb[0].mxu0
        %v2555 = vadd.f32 0.0, %v2554
        %v2556 = vpop.f32.mrb[0].mxu0
        %2557 = vmatprep.mubr.bf16.mxu0 0
        %2558 = vmatmul.mubr.bf16.gmra.mrb[0].mxu0 %v2470
        %v2559 = vpop.f32.mrb[0].mxu0
        %v2560 = vadd.f32 0.0, %v2559
        %v2561 = vpop.f32.mrb[0].mxu0
        %v2562 = vpop.f32.mrb[0].mxu0
        %v2563 = vadd.f32 0.0, %v2562
        %v2564 = vpop.f32.mrb[0].mxu0
        %2565 = vmatprep.mubr.bf16.mxu0 0
        %2566 = vmatmul.mubr.bf16.gmra.mrb[0].mxu0 %v2473
        %v2567 = vpop.f32.mrb[0].mxu0
        %v2568 = vadd.f32 0.0, %v2567
        %v2569 = vpop.f32.mrb[0].mxu0
        %v2570 = vpop.f32.mrb[0].mxu0
        %v2571 = vadd.f32 0.0, %v2570
        %v2572 = vpop.f32.mrb[0].mxu0
        %2573 = vmatprep.mubr.bf16.mxu0 0
        %2574 = vmatmul.mubr.bf16.gmra.mrb[0].mxu0 %v2476
        %v2575 = vpop.f32.mrb[0].mxu0
        %v2576 = vadd.f32 0.0, %v2575
        %v2577 = vpop.f32.mrb[0].mxu0
        %v2578 = vpop.f32.mrb[0].mxu0
        %v2579 = vadd.f32 0.0, %v2578
        %v2580 = vpop.f32.mrb[0].mxu0
        %2581 = vmatprep.mubr.bf16.mxu0 0
        %2582 = vmatmul.mubr.bf16.gmra.mrb[0].mxu0 %v2479
        %v2583 = vpop.f32.mrb[0].mxu0
        %v2584 = vadd.f32 0.0, %v2583
        %v2585 = vpop.f32.mrb[0].mxu0
        %v2586 = vpop.f32.mrb[0].mxu0
        %v2587 = vadd.f32 0.0, %v2586
        %v2588 = vpop.f32.mrb[0].mxu0
        %2589 = vmatprep.mubr.bf16.mxu0 0
        %2590 = vmatmul.mubr.bf16.gmra.mrb[0].mxu0 %v2482
        %v2591 = vpop.f32.mrb[0].mxu0
        %v2592 = vadd.f32 0.0, %v2591
        %v2593 = vpop.f32.mrb[0].mxu0
        %v2594 = vpop.f32.mrb[0].mxu0
        %v2595 = vadd.f32 0.0, %v2594
        %v2596 = vpop.f32.mrb[0].mxu0
        %2597 = vmatprep.mubr.bf16.mxu0 0
        %2598 = vmatmul.mubr.bf16.gmra.mrb[0].mxu0 %v2485
        %v2599 = vpop.f32.mrb[0].mxu0
        %v2600 = vadd.f32 0.0, %v2599
        %v2601 = vpop.f32.mrb[0].mxu0
        %v2602 = vpop.f32.mrb[0].mxu0
        %v2603 = vadd.f32 0.0, %v2602
        %v2604 = vpop.f32.mrb[0].mxu0
        %2605 = vmatprep.mubr.bf16.mxu0 0
        %2606 = vmatmul.mubr.bf16.gmra.mrb[0].mxu0 %v2488
        %v2607 = vpop.f32.mrb[0].mxu0
        %v2608 = vadd.f32 0.0, %v2607
        %v2609 = vpop.f32.mrb[0].mxu0
        %v2610 = vpop.f32.mrb[0].mxu0
        %v2611 = vadd.f32 0.0, %v2610
        %v2612 = vpop.f32.mrb[0].mxu0
        %2613 = vmatprep.mubr.bf16.mxu0 0
        %2614 = vmatmul.mubr.bf16.gmra.mrb[0].mxu0 %v2491
        %v2615 = vpop.f32.mrb[0].mxu0
        %v2616 = vadd.f32 0.0, %v2615
        %v2617 = vpop.f32.mrb[0].mxu0
        %v2618 = vpop.f32.mrb[0].mxu0
        %v2619 = vadd.f32 0.0, %v2618
        %v2620 = vpop.f32.mrb[0].mxu0
        %2621 = vmatprep.mubr.bf16.mxu0 0
        %2622 = vmatmul.mubr.bf16.gmra.mrb[0].mxu0 %v2494
        %v2623 = vpop.f32.mrb[0].mxu0
        %v2624 = vadd.f32 0.0, %v2623
        %v2625 = vpop.f32.mrb[0].mxu0
        %v2626 = vpop.f32.mrb[0].mxu0
        %v2627 = vadd.f32 0.0, %v2626
        %v2628 = vpop.f32.mrb[0].mxu0
        %2629 = vmatprep.mubr.bf16.mxu0 0
        %2630 = vmatmul.mubr.bf16.gmra.mrb[0].mxu0 %v2497
        %v2631 = vpop.f32.mrb[0].mxu0
        %v2632 = vadd.f32 0.0, %v2631
        %v2633 = vpop.f32.mrb[0].mxu0
        %v2634 = vpop.f32.mrb[0].mxu0
        %v2635 = vadd.f32 0.0, %v2634
        %v2636 = vpop.f32.mrb[0].mxu0
        %2637 = vmatprep.mubr.bf16.mxu0 0
        %2638 = vmatmul.mubr.bf16.gmra.mrb[0].mxu0 %v2500
        %v2639 = vpop.f32.mrb[0].mxu0
        %v2640 = vadd.f32 0.0, %v2639
        %v2641 = vpop.f32.mrb[0].mxu0
        %v2642 = vpop.f32.mrb[0].mxu0
        %v2643 = vadd.f32 0.0, %v2642
        %v2644 = vpop.f32.mrb[0].mxu0
        %2645 = vmatprep.mubr.bf16.mxu0 0
        %2646 = vmatmul.mubr.bf16.gmra.mrb[0].mxu0 %v2503
        %v2647 = vpop.f32.mrb[0].mxu0
        %v2648 = vadd.f32 0.0, %v2647
        %v2649 = vpop.f32.mrb[0].mxu0
        %v2650 = vpop.f32.mrb[0].mxu0
        %v2651 = vadd.f32 0.0, %v2650
        %v2652 = vpop.f32.mrb[0].mxu0
        %2653 = vmatprep.mubr.bf16.mxu0 0
        %2654 = vmatmul.mubr.bf16.gmra.mrb[0].mxu0 %v2506
        %v2655 = vpop.f32.mrb[0].mxu0
        %v2656 = vadd.f32 0.0, %v2655
        %v2657 = vpop.f32.mrb[0].mxu0
        %v2658 = vpop.f32.mrb[0].mxu0
        %v2659 = vadd.f32 0.0, %v2658
        %v2660 = vpop.f32.mrb[0].mxu0
        %2661 = vmatprep.mubr.bf16.mxu0 0
        %2662 = vmatmul.mubr.bf16.gmra.mrb[0].mxu0 %v2509
        %v2663 = vpop.f32.mrb[0].mxu0
        %v2664 = vadd.f32 0.0, %v2663
        %v2665 = vpop.f32.mrb[0].mxu0
        %v2666 = vpop.f32.mrb[0].mxu0
        %v2667 = vadd.f32 0.0, %v2666
        %v2668 = vpop.f32.mrb[0].mxu0
        %2669 = vmatprep.mubr.bf16.mxu0 0
        %2670 = vmatmul.mubr.bf16.gmra.mrb[0].mxu0 %v2512
        %v2671 = vpop.f32.mrb[0].mxu0
        %v2672 = vadd.f32 0.0, %v2671
        %v2673 = vpop.f32.mrb[0].mxu0
        %v2674 = vpop.f32.mrb[0].mxu0
        %v2675 = vadd.f32 0.0, %v2674
        %v2676 = vpop.f32.mrb[0].mxu0
        %2677 = vdwg.mxu0
        %v2678 = vld [vmem:[#allocation3] sm:$0xff]
        %v2679 = vld [vmem:[#allocation3 + $0x8] sm:$0xff]
        %v2680 = vld [vmem:[#allocation3 + $0x10] sm:$0xff]
        %v2681 = vld [vmem:[#allocation3 + $0x18] sm:$0xff]
        %v2682 = vld [vmem:[#allocation3 + $0x20] sm:$0xff]
        %v2683 = vld [vmem:[#allocation3 + $0x28] sm:$0xff]
        %v2684 = vld [vmem:[#allocation3 + $0x30] sm:$0xff]
        %v2685 = vld [vmem:[#allocation3 + $0x38] sm:$0xff]
        %v2686 = vld [vmem:[#allocation3 + $0x40] sm:$0xff]
        %v2687 = vld [vmem:[#allocation3 + $0x48] sm:$0xff]
        %v2688 = vld [vmem:[#allocation3 + $0x50] sm:$0xff]
        %v2689 = vld [vmem:[#allocation3 + $0x58] sm:$0xff]
        %v2690 = vld [vmem:[#allocation3 + $0x60] sm:$0xff]
        %v2691 = vld [vmem:[#allocation3 + $0x68] sm:$0xff]
        %v2692 = vld [vmem:[#allocation3 + $0x70] sm:$0xff]
        %v2693 = vld [vmem:[#allocation3 + $0x78] sm:$0xff]
        %v2694 = vld [vmem:[#allocation3 + $0x80] sm:$0xff]
        %v2695 = vld [vmem:[#allocation3 + $0x88] sm:$0xff]
        %v2696 = vld [vmem:[#allocation3 + $0x90] sm:$0xff]
        %v2697 = vld [vmem:[#allocation3 + $0x98] sm:$0xff]
        %v2698 = vld [vmem:[#allocation3 + $0xa0] sm:$0xff]
        %v2699 = vld [vmem:[#allocation3 + $0xa8] sm:$0xff]
        %v2700 = vld [vmem:[#allocation3 + $0xb0] sm:$0xff]
        %v2701 = vld [vmem:[#allocation3 + $0xb8] sm:$0xff]
        %v2702 = vld [vmem:[#allocation3 + $0xc0] sm:$0xff]
        %v2703 = vld [vmem:[#allocation3 + $0xc8] sm:$0xff]
        %v2704 = vld [vmem:[#allocation3 + $0xd0] sm:$0xff]
        %v2705 = vld [vmem:[#allocation3 + $0xd8] sm:$0xff]
        %v2706 = vld [vmem:[#allocation3 + $0xe0] sm:$0xff]
        %v2707 = vld [vmem:[#allocation3 + $0xe8] sm:$0xff]
        %v2708 = vld [vmem:[#allocation3 + $0xf0] sm:$0xff]
        %v2709 = vld [vmem:[#allocation3 + $0xf8] sm:$0xff]
        %v2710 = vadd.f32 %v2678, %v2552
        %v2711 = vadd.f32 %v2679, %v2555
        %v2712 = vadd.f32 %v2680, %v2560
        %v2713 = vadd.f32 %v2681, %v2563
        %v2714 = vadd.f32 %v2682, %v2568
        %v2715 = vadd.f32 %v2683, %v2571
        %v2716 = vadd.f32 %v2684, %v2576
        %v2717 = vadd.f32 %v2685, %v2579
        %v2718 = vadd.f32 %v2686, %v2584
        %v2719 = vadd.f32 %v2687, %v2587
        %v2720 = vadd.f32 %v2688, %v2592
        %v2721 = vadd.f32 %v2689, %v2595
        %v2722 = vadd.f32 %v2690, %v2600
        %v2723 = vadd.f32 %v2691, %v2603
        %v2724 = vadd.f32 %v2692, %v2608
        %v2725 = vadd.f32 %v2693, %v2611
        %v2726 = vadd.f32 %v2694, %v2616
        %v2727 = vadd.f32 %v2695, %v2619
        %v2728 = vadd.f32 %v2696, %v2624
        %v2729 = vadd.f32 %v2697, %v2627
        %v2730 = vadd.f32 %v2698, %v2632
        %v2731 = vadd.f32 %v2699, %v2635
        %v2732 = vadd.f32 %v2700, %v2640
        %v2733 = vadd.f32 %v2701, %v2643
        %v2734 = vadd.f32 %v2702, %v2648
        %v2735 = vadd.f32 %v2703, %v2651
        %v2736 = vadd.f32 %v2704, %v2656
        %v2737 = vadd.f32 %v2705, %v2659
        %v2738 = vadd.f32 %v2706, %v2664
        %v2739 = vadd.f32 %v2707, %v2667
        %v2740 = vadd.f32 %v2708, %v2672
        %v2741 = vadd.f32 %v2709, %v2675
        %2742 = vst.msk [vmem:[#allocation3] sm:$0xff] %vm611, %v2710
        %2743 = vst.msk [vmem:[#allocation3 + $0x8] sm:$0xff] %vm611, %v2711
        %2744 = vst.msk [vmem:[#allocation3 + $0x10] sm:$0xff] %vm611, %v2712
        %2745 = vst.msk [vmem:[#allocation3 + $0x18] sm:$0xff] %vm611, %v2713
        %2746 = vst.msk [vmem:[#allocation3 + $0x20] sm:$0xff] %vm611, %v2714
        %2747 = vst.msk [vmem:[#allocation3 + $0x28] sm:$0xff] %vm611, %v2715
        %2748 = vst.msk [vmem:[#allocation3 + $0x30] sm:$0xff] %vm611, %v2716
        %2749 = vst.msk [vmem:[#allocation3 + $0x38] sm:$0xff] %vm611, %v2717
        %2750 = vst.msk [vmem:[#allocation3 + $0x40] sm:$0xff] %vm611, %v2718
        %2751 = vst.msk [vmem:[#allocation3 + $0x48] sm:$0xff] %vm611, %v2719
        %2752 = vst.msk [vmem:[#allocation3 + $0x50] sm:$0xff] %vm611, %v2720
        %2753 = vst.msk [vmem:[#allocation3 + $0x58] sm:$0xff] %vm611, %v2721
        %2754 = vst.msk [vmem:[#allocation3 + $0x60] sm:$0xff] %vm611, %v2722
        %2755 = vst.msk [vmem:[#allocation3 + $0x68] sm:$0xff] %vm611, %v2723
        %2756 = vst.msk [vmem:[#allocation3 + $0x70] sm:$0xff] %vm611, %v2724
        %2757 = vst.msk [vmem:[#allocation3 + $0x78] sm:$0xff] %vm611, %v2725
        %2758 = vst.msk [vmem:[#allocation3 + $0x80] sm:$0xff] %vm611, %v2726
        %2759 = vst.msk [vmem:[#allocation3 + $0x88] sm:$0xff] %vm611, %v2727
        %2760 = vst.msk [vmem:[#allocation3 + $0x90] sm:$0xff] %vm611, %v2728
        %2761 = vst.msk [vmem:[#allocation3 + $0x98] sm:$0xff] %vm611, %v2729
        %2762 = vst.msk [vmem:[#allocation3 + $0xa0] sm:$0xff] %vm611, %v2730
        %2763 = vst.msk [vmem:[#allocation3 + $0xa8] sm:$0xff] %vm611, %v2731
        %2764 = vst.msk [vmem:[#allocation3 + $0xb0] sm:$0xff] %vm611, %v2732
        %2765 = vst.msk [vmem:[#allocation3 + $0xb8] sm:$0xff] %vm611, %v2733
        %2766 = vst.msk [vmem:[#allocation3 + $0xc0] sm:$0xff] %vm611, %v2734
        %2767 = vst.msk [vmem:[#allocation3 + $0xc8] sm:$0xff] %vm611, %v2735
        %2768 = vst.msk [vmem:[#allocation3 + $0xd0] sm:$0xff] %vm611, %v2736
        %2769 = vst.msk [vmem:[#allocation3 + $0xd8] sm:$0xff] %vm611, %v2737
        %2770 = vst.msk [vmem:[#allocation3 + $0xe0] sm:$0xff] %vm611, %v2738
        %2771 = vst.msk [vmem:[#allocation3 + $0xe8] sm:$0xff] %vm611, %v2739
        %2772 = vst.msk [vmem:[#allocation3 + $0xf0] sm:$0xff] %vm611, %v2740
        %2773 = vst.msk [vmem:[#allocation3 + $0xf8] sm:$0xff] %vm611, %v2741
        %s2774 = scalar_lea.vmem [#allocation2], 64
        %v2775 = vld [vmem:[%s2774 + $0x7] sm:$0xff]
        %v2776 = vld [vmem:[%s2774 + $0xf] sm:$0xff]
        %v2777 = vld [vmem:[%s2774 + $0x27] sm:$0xff]
        %v2778 = vld [vmem:[%s2774 + $0x2f] sm:$0xff]
        %v2779 = vld [vmem:[%s2774 + $0x47] sm:$0xff]
        %v2780 = vld [vmem:[%s2774 + $0x4f] sm:$0xff]
        %v2781 = vld [vmem:[%s2774 + $0x67] sm:$0xff]
        %v2782 = vld [vmem:[%s2774 + $0x6f] sm:$0xff]
        %v2783 = vld [vmem:[%s2774 + $0x87] sm:$0xff]
        %v2784 = vld [vmem:[%s2774 + $0x8f] sm:$0xff]
        %v2785 = vld [vmem:[%s2774 + $0xa7] sm:$0xff]
        %v2786 = vld [vmem:[%s2774 + $0xaf] sm:$0xff]
        %v2787 = vld [vmem:[%s2774 + $0xc7] sm:$0xff]
        %v2788 = vld [vmem:[%s2774 + $0xcf] sm:$0xff]
        %v2789 = vld [vmem:[%s2774 + $0xe7] sm:$0xff]
        %v2790 = vld [vmem:[%s2774 + $0xef] sm:$0xff]
        %v2791 = vld [vmem:[%s2774 + $0x107] sm:$0xff]
        %v2792 = vld [vmem:[%s2774 + $0x10f] sm:$0xff]
        %v2793 = vld [vmem:[%s2774 + $0x127] sm:$0xff]
        %v2794 = vld [vmem:[%s2774 + $0x12f] sm:$0xff]
        %v2795 = vld [vmem:[%s2774 + $0x147] sm:$0xff]
        %v2796 = vld [vmem:[%s2774 + $0x14f] sm:$0xff]
        %v2797 = vld [vmem:[%s2774 + $0x167] sm:$0xff]
        %v2798 = vld [vmem:[%s2774 + $0x16f] sm:$0xff]
        %v2799 = vld [vmem:[%s2774 + $0x187] sm:$0xff]
        %v2800 = vld [vmem:[%s2774 + $0x18f] sm:$0xff]
        %v2801 = vld [vmem:[%s2774 + $0x1a7] sm:$0xff]
        %v2802 = vld [vmem:[%s2774 + $0x1af] sm:$0xff]
        %v2803 = vld [vmem:[%s2774 + $0x1c7] sm:$0xff]
        %v2804 = vld [vmem:[%s2774 + $0x1cf] sm:$0xff]
        %v2805 = vld [vmem:[%s2774 + $0x1e7] sm:$0xff]
        %v2806 = vld [vmem:[%s2774 + $0x1ef] sm:$0xff]
        %v2807 = vpack.c.bf16 %v2776, %v2775
        %v2808 = vpack.c.bf16 %v2778, %v2777
        %v2809 = vpack.c.bf16 %v2780, %v2779
        %v2810 = vpack.c.bf16 %v2782, %v2781
        %v2811 = vpack.c.bf16 %v2784, %v2783
        %v2812 = vpack.c.bf16 %v2786, %v2785
        %v2813 = vpack.c.bf16 %v2788, %v2787
        %v2814 = vpack.c.bf16 %v2790, %v2789
        %v2815 = vpack.c.bf16 %v2792, %v2791
        %v2816 = vpack.c.bf16 %v2794, %v2793
        %v2817 = vpack.c.bf16 %v2796, %v2795
        %v2818 = vpack.c.bf16 %v2798, %v2797
        %v2819 = vpack.c.bf16 %v2800, %v2799
        %v2820 = vpack.c.bf16 %v2802, %v2801
        %v2821 = vpack.c.bf16 %v2804, %v2803
        %v2822 = vpack.c.bf16 %v2806, %v2805
        %s2823 = scalar_lea.vmem %s3, 24
        %v2824 = vld [vmem:[%s2823] sm:$0xf]
        %v2826 = vsel %vm611, %v2807, 0
        %v2829 = vsel %vm611, %v2808, 0
        %v2832 = vsel %vm611, %v2809, 0
        %v2835 = vsel %vm611, %v2810, 0
        %v2838 = vsel %vm611, %v2811, 0
        %v2841 = vsel %vm611, %v2812, 0
        %v2844 = vsel %vm611, %v2813, 0
        %v2847 = vsel %vm611, %v2814, 0
        %v2850 = vsel %vm611, %v2815, 0
        %v2853 = vsel %vm611, %v2816, 0
        %v2856 = vsel %vm611, %v2817, 0
        %v2859 = vsel %vm611, %v2818, 0
        %v2862 = vsel %vm611, %v2819, 0
        %v2865 = vsel %vm611, %v2820, 0
        %v2868 = vsel %vm611, %v2821, 0
        %v2871 = vsel %vm611, %v2822, 0
        %v2874 = vsel %vm787, %v2824, 0
        %2876 = vmatprep.subr.bf16.mxu0 0
        %2877 = vmatpush1.bf16.msra.mxu0 %v2874
        %2878 = vmatprep.subr.bf16.mxu0 0
        %2879 = vmatpush1.bf16.msra.mxu0 0
        %2880 = vmatprep.subr.bf16.mxu0 0
        %2881 = vmatpush1.bf16.msra.mxu0 0
        %2882 = vmatprep.subr.bf16.mxu0 0
        %2883 = vmatpush1.bf16.msra.mxu0 0
        %2884 = vmatprep.subr.bf16.mxu0 0
        %2885 = vmatpush1.bf16.msra.mxu0 0
        %2886 = vmatprep.subr.bf16.mxu0 0
        %2887 = vmatpush1.bf16.msra.mxu0 0
        %2888 = vmatprep.subr.bf16.mxu0 0
        %2889 = vmatpush1.bf16.msra.mxu0 0
        %2890 = vmatprep.subr.bf16.mxu0 0
        %2891 = vmatpush1.bf16.msra.mxu0 0
        %2892 = vmatprep.subr.bf16.mxu0 0
        %2893 = vmatpush1.bf16.msra.mxu0 0
        %2894 = vmatprep.subr.bf16.mxu0 0
        %2895 = vmatpush1.bf16.msra.mxu0 0
        %2896 = vmatprep.subr.bf16.mxu0 0
        %2897 = vmatpush1.bf16.msra.mxu0 0
        %2898 = vmatprep.subr.bf16.mxu0 0
        %2899 = vmatpush1.bf16.msra.mxu0 0
        %2900 = vmatprep.subr.bf16.mxu0 0
        %2901 = vmatpush1.bf16.msra.mxu0 0
        %2902 = vmatprep.subr.bf16.mxu0 0
        %2903 = vmatpush1.bf16.msra.mxu0 0
        %2904 = vmatprep.subr.bf16.mxu0 0
        %2905 = vmatpush1.bf16.msra.mxu0 0
        %2906 = vmatprep.subr.bf16.mxu0 0
        %2907 = vmatpush1.bf16.msra.mxu0 0
        %2908 = vmatprep.mubr.bf16.mxu0 0
        %2909 = vmatmul.mubr.bf16.gmra.mrb[0].mxu0 %v2826
        %v2910 = vpop.f32.mrb[0].mxu0
        %v2911 = vadd.f32 0.0, %v2910
        %v2912 = vpop.f32.mrb[0].mxu0
        %v2913 = vpop.f32.mrb[0].mxu0
        %v2914 = vadd.f32 0.0, %v2913
        %v2915 = vpop.f32.mrb[0].mxu0
        %2916 = vmatprep.mubr.bf16.mxu0 0
        %2917 = vmatmul.mubr.bf16.gmra.mrb[0].mxu0 %v2829
        %v2918 = vpop.f32.mrb[0].mxu0
        %v2919 = vadd.f32 0.0, %v2918
        %v2920 = vpop.f32.mrb[0].mxu0
        %v2921 = vpop.f32.mrb[0].mxu0
        %v2922 = vadd.f32 0.0, %v2921
        %v2923 = vpop.f32.mrb[0].mxu0
        %2924 = vmatprep.mubr.bf16.mxu0 0
        %2925 = vmatmul.mubr.bf16.gmra.mrb[0].mxu0 %v2832
        %v2926 = vpop.f32.mrb[0].mxu0
        %v2927 = vadd.f32 0.0, %v2926
        %v2928 = vpop.f32.mrb[0].mxu0
        %v2929 = vpop.f32.mrb[0].mxu0
        %v2930 = vadd.f32 0.0, %v2929
        %v2931 = vpop.f32.mrb[0].mxu0
        %2932 = vmatprep.mubr.bf16.mxu0 0
        %2933 = vmatmul.mubr.bf16.gmra.mrb[0].mxu0 %v2835
        %v2934 = vpop.f32.mrb[0].mxu0
        %v2935 = vadd.f32 0.0, %v2934
        %v2936 = vpop.f32.mrb[0].mxu0
        %v2937 = vpop.f32.mrb[0].mxu0
        %v2938 = vadd.f32 0.0, %v2937
        %v2939 = vpop.f32.mrb[0].mxu0
        %2940 = vmatprep.mubr.bf16.mxu0 0
        %2941 = vmatmul.mubr.bf16.gmra.mrb[0].mxu0 %v2838
        %v2942 = vpop.f32.mrb[0].mxu0
        %v2943 = vadd.f32 0.0, %v2942
        %v2944 = vpop.f32.mrb[0].mxu0
        %v2945 = vpop.f32.mrb[0].mxu0
        %v2946 = vadd.f32 0.0, %v2945
        %v2947 = vpop.f32.mrb[0].mxu0
        %2948 = vmatprep.mubr.bf16.mxu0 0
        %2949 = vmatmul.mubr.bf16.gmra.mrb[0].mxu0 %v2841
        %v2950 = vpop.f32.mrb[0].mxu0
        %v2951 = vadd.f32 0.0, %v2950
        %v2952 = vpop.f32.mrb[0].mxu0
        %v2953 = vpop.f32.mrb[0].mxu0
        %v2954 = vadd.f32 0.0, %v2953
        %v2955 = vpop.f32.mrb[0].mxu0
        %2956 = vmatprep.mubr.bf16.mxu0 0
        %2957 = vmatmul.mubr.bf16.gmra.mrb[0].mxu0 %v2844
        %v2958 = vpop.f32.mrb[0].mxu0
        %v2959 = vadd.f32 0.0, %v2958
        %v2960 = vpop.f32.mrb[0].mxu0
        %v2961 = vpop.f32.mrb[0].mxu0
        %v2962 = vadd.f32 0.0, %v2961
        %v2963 = vpop.f32.mrb[0].mxu0
        %2964 = vmatprep.mubr.bf16.mxu0 0
        %2965 = vmatmul.mubr.bf16.gmra.mrb[0].mxu0 %v2847
        %v2966 = vpop.f32.mrb[0].mxu0
        %v2967 = vadd.f32 0.0, %v2966
        %v2968 = vpop.f32.mrb[0].mxu0
        %v2969 = vpop.f32.mrb[0].mxu0
        %v2970 = vadd.f32 0.0, %v2969
        %v2971 = vpop.f32.mrb[0].mxu0
        %2972 = vmatprep.mubr.bf16.mxu0 0
        %2973 = vmatmul.mubr.bf16.gmra.mrb[0].mxu0 %v2850
        %v2974 = vpop.f32.mrb[0].mxu0
        %v2975 = vadd.f32 0.0, %v2974
        %v2976 = vpop.f32.mrb[0].mxu0
        %v2977 = vpop.f32.mrb[0].mxu0
        %v2978 = vadd.f32 0.0, %v2977
        %v2979 = vpop.f32.mrb[0].mxu0
        %2980 = vmatprep.mubr.bf16.mxu0 0
        %2981 = vmatmul.mubr.bf16.gmra.mrb[0].mxu0 %v2853
        %v2982 = vpop.f32.mrb[0].mxu0
        %v2983 = vadd.f32 0.0, %v2982
        %v2984 = vpop.f32.mrb[0].mxu0
        %v2985 = vpop.f32.mrb[0].mxu0
        %v2986 = vadd.f32 0.0, %v2985
        %v2987 = vpop.f32.mrb[0].mxu0
        %2988 = vmatprep.mubr.bf16.mxu0 0
        %2989 = vmatmul.mubr.bf16.gmra.mrb[0].mxu0 %v2856
        %v2990 = vpop.f32.mrb[0].mxu0
        %v2991 = vadd.f32 0.0, %v2990
        %v2992 = vpop.f32.mrb[0].mxu0
        %v2993 = vpop.f32.mrb[0].mxu0
        %v2994 = vadd.f32 0.0, %v2993
        %v2995 = vpop.f32.mrb[0].mxu0
        %2996 = vmatprep.mubr.bf16.mxu0 0
        %2997 = vmatmul.mubr.bf16.gmra.mrb[0].mxu0 %v2859
        %v2998 = vpop.f32.mrb[0].mxu0
        %v2999 = vadd.f32 0.0, %v2998
        %v3000 = vpop.f32.mrb[0].mxu0
        %v3001 = vpop.f32.mrb[0].mxu0
        %v3002 = vadd.f32 0.0, %v3001
        %v3003 = vpop.f32.mrb[0].mxu0
        %3004 = vmatprep.mubr.bf16.mxu0 0
        %3005 = vmatmul.mubr.bf16.gmra.mrb[0].mxu0 %v2862
        %v3006 = vpop.f32.mrb[0].mxu0
        %v3007 = vadd.f32 0.0, %v3006
        %v3008 = vpop.f32.mrb[0].mxu0
        %v3009 = vpop.f32.mrb[0].mxu0
        %v3010 = vadd.f32 0.0, %v3009
        %v3011 = vpop.f32.mrb[0].mxu0
        %3012 = vmatprep.mubr.bf16.mxu0 0
        %3013 = vmatmul.mubr.bf16.gmra.mrb[0].mxu0 %v2865
        %v3014 = vpop.f32.mrb[0].mxu0
        %v3015 = vadd.f32 0.0, %v3014
        %v3016 = vpop.f32.mrb[0].mxu0
        %v3017 = vpop.f32.mrb[0].mxu0
        %v3018 = vadd.f32 0.0, %v3017
        %v3019 = vpop.f32.mrb[0].mxu0
        %3020 = vmatprep.mubr.bf16.mxu0 0
        %3021 = vmatmul.mubr.bf16.gmra.mrb[0].mxu0 %v2868
        %v3022 = vpop.f32.mrb[0].mxu0
        %v3023 = vadd.f32 0.0, %v3022
        %v3024 = vpop.f32.mrb[0].mxu0
        %v3025 = vpop.f32.mrb[0].mxu0
        %v3026 = vadd.f32 0.0, %v3025
        %v3027 = vpop.f32.mrb[0].mxu0
        %3028 = vmatprep.mubr.bf16.mxu0 0
        %3029 = vmatmul.mubr.bf16.gmra.mrb[0].mxu0 %v2871
        %v3030 = vpop.f32.mrb[0].mxu0
        %v3031 = vadd.f32 0.0, %v3030
        %v3032 = vpop.f32.mrb[0].mxu0
        %v3033 = vpop.f32.mrb[0].mxu0
        %v3034 = vadd.f32 0.0, %v3033
        %v3035 = vpop.f32.mrb[0].mxu0
        %3036 = vdwg.mxu0
        %v3037 = vld [vmem:[#allocation3] sm:$0xff]
        %v3038 = vld [vmem:[#allocation3 + $0x8] sm:$0xff]
        %v3039 = vld [vmem:[#allocation3 + $0x10] sm:$0xff]
        %v3040 = vld [vmem:[#allocation3 + $0x18] sm:$0xff]
        %v3041 = vld [vmem:[#allocation3 + $0x20] sm:$0xff]
        %v3042 = vld [vmem:[#allocation3 + $0x28] sm:$0xff]
        %v3043 = vld [vmem:[#allocation3 + $0x30] sm:$0xff]
        %v3044 = vld [vmem:[#allocation3 + $0x38] sm:$0xff]
        %v3045 = vld [vmem:[#allocation3 + $0x40] sm:$0xff]
        %v3046 = vld [vmem:[#allocation3 + $0x48] sm:$0xff]
        %v3047 = vld [vmem:[#allocation3 + $0x50] sm:$0xff]
        %v3048 = vld [vmem:[#allocation3 + $0x58] sm:$0xff]
        %v3049 = vld [vmem:[#allocation3 + $0x60] sm:$0xff]
        %v3050 = vld [vmem:[#allocation3 + $0x68] sm:$0xff]
        %v3051 = vld [vmem:[#allocation3 + $0x70] sm:$0xff]
        %v3052 = vld [vmem:[#allocation3 + $0x78] sm:$0xff]
        %v3053 = vld [vmem:[#allocation3 + $0x80] sm:$0xff]
        %v3054 = vld [vmem:[#allocation3 + $0x88] sm:$0xff]
        %v3055 = vld [vmem:[#allocation3 + $0x90] sm:$0xff]
        %v3056 = vld [vmem:[#allocation3 + $0x98] sm:$0xff]
        %v3057 = vld [vmem:[#allocation3 + $0xa0] sm:$0xff]
        %v3058 = vld [vmem:[#allocation3 + $0xa8] sm:$0xff]
        %v3059 = vld [vmem:[#allocation3 + $0xb0] sm:$0xff]
        %v3060 = vld [vmem:[#allocation3 + $0xb8] sm:$0xff]
        %v3061 = vld [vmem:[#allocation3 + $0xc0] sm:$0xff]
        %v3062 = vld [vmem:[#allocation3 + $0xc8] sm:$0xff]
        %v3063 = vld [vmem:[#allocation3 + $0xd0] sm:$0xff]
        %v3064 = vld [vmem:[#allocation3 + $0xd8] sm:$0xff]
        %v3065 = vld [vmem:[#allocation3 + $0xe0] sm:$0xff]
        %v3066 = vld [vmem:[#allocation3 + $0xe8] sm:$0xff]
        %v3067 = vld [vmem:[#allocation3 + $0xf0] sm:$0xff]
        %v3068 = vld [vmem:[#allocation3 + $0xf8] sm:$0xff]
        %v3069 = vadd.f32 %v3037, %v2911
        %v3070 = vadd.f32 %v3038, %v2914
        %v3071 = vadd.f32 %v3039, %v2919
        %v3072 = vadd.f32 %v3040, %v2922
        %v3073 = vadd.f32 %v3041, %v2927
        %v3074 = vadd.f32 %v3042, %v2930
        %v3075 = vadd.f32 %v3043, %v2935
        %v3076 = vadd.f32 %v3044, %v2938
        %v3077 = vadd.f32 %v3045, %v2943
        %v3078 = vadd.f32 %v3046, %v2946
        %v3079 = vadd.f32 %v3047, %v2951
        %v3080 = vadd.f32 %v3048, %v2954
        %v3081 = vadd.f32 %v3049, %v2959
        %v3082 = vadd.f32 %v3050, %v2962
        %v3083 = vadd.f32 %v3051, %v2967
        %v3084 = vadd.f32 %v3052, %v2970
        %v3085 = vadd.f32 %v3053, %v2975
        %v3086 = vadd.f32 %v3054, %v2978
        %v3087 = vadd.f32 %v3055, %v2983
        %v3088 = vadd.f32 %v3056, %v2986
        %v3089 = vadd.f32 %v3057, %v2991
        %v3090 = vadd.f32 %v3058, %v2994
        %v3091 = vadd.f32 %v3059, %v2999
        %v3092 = vadd.f32 %v3060, %v3002
        %v3093 = vadd.f32 %v3061, %v3007
        %v3094 = vadd.f32 %v3062, %v3010
        %v3095 = vadd.f32 %v3063, %v3015
        %v3096 = vadd.f32 %v3064, %v3018
        %v3097 = vadd.f32 %v3065, %v3023
        %v3098 = vadd.f32 %v3066, %v3026
        %v3099 = vadd.f32 %v3067, %v3031
        %v3100 = vadd.f32 %v3068, %v3034
        %3101 = vst.msk [vmem:[#allocation3] sm:$0xff] %vm611, %v3069
        %3102 = vst.msk [vmem:[#allocation3 + $0x8] sm:$0xff] %vm611, %v3070
        %3103 = vst.msk [vmem:[#allocation3 + $0x10] sm:$0xff] %vm611, %v3071
        %3104 = vst.msk [vmem:[#allocation3 + $0x18] sm:$0xff] %vm611, %v3072
        %3105 = vst.msk [vmem:[#allocation3 + $0x20] sm:$0xff] %vm611, %v3073
        %3106 = vst.msk [vmem:[#allocation3 + $0x28] sm:$0xff] %vm611, %v3074
        %3107 = vst.msk [vmem:[#allocation3 + $0x30] sm:$0xff] %vm611, %v3075
        %3108 = vst.msk [vmem:[#allocation3 + $0x38] sm:$0xff] %vm611, %v3076
        %3109 = vst.msk [vmem:[#allocation3 + $0x40] sm:$0xff] %vm611, %v3077
        %3110 = vst.msk [vmem:[#allocation3 + $0x48] sm:$0xff] %vm611, %v3078
        %3111 = vst.msk [vmem:[#allocation3 + $0x50] sm:$0xff] %vm611, %v3079
        %3112 = vst.msk [vmem:[#allocation3 + $0x58] sm:$0xff] %vm611, %v3080
        %3113 = vst.msk [vmem:[#allocation3 + $0x60] sm:$0xff] %vm611, %v3081
        %3114 = vst.msk [vmem:[#allocation3 + $0x68] sm:$0xff] %vm611, %v3082
        %3115 = vst.msk [vmem:[#allocation3 + $0x70] sm:$0xff] %vm611, %v3083
        %3116 = vst.msk [vmem:[#allocation3 + $0x78] sm:$0xff] %vm611, %v3084
        %3117 = vst.msk [vmem:[#allocation3 + $0x80] sm:$0xff] %vm611, %v3085
        %3118 = vst.msk [vmem:[#allocation3 + $0x88] sm:$0xff] %vm611, %v3086
        %3119 = vst.msk [vmem:[#allocation3 + $0x90] sm:$0xff] %vm611, %v3087
        %3120 = vst.msk [vmem:[#allocation3 + $0x98] sm:$0xff] %vm611, %v3088
        %3121 = vst.msk [vmem:[#allocation3 + $0xa0] sm:$0xff] %vm611, %v3089
        %3122 = vst.msk [vmem:[#allocation3 + $0xa8] sm:$0xff] %vm611, %v3090
        %3123 = vst.msk [vmem:[#allocation3 + $0xb0] sm:$0xff] %vm611, %v3091
        %3124 = vst.msk [vmem:[#allocation3 + $0xb8] sm:$0xff] %vm611, %v3092
        %3125 = vst.msk [vmem:[#allocation3 + $0xc0] sm:$0xff] %vm611, %v3093
        %3126 = vst.msk [vmem:[#allocation3 + $0xc8] sm:$0xff] %vm611, %v3094
        %3127 = vst.msk [vmem:[#allocation3 + $0xd0] sm:$0xff] %vm611, %v3095
        %3128 = vst.msk [vmem:[#allocation3 + $0xd8] sm:$0xff] %vm611, %v3096
        %3129 = vst.msk [vmem:[#allocation3 + $0xe0] sm:$0xff] %vm611, %v3097
        %3130 = vst.msk [vmem:[#allocation3 + $0xe8] sm:$0xff] %vm611, %v3098
        %3131 = vst.msk [vmem:[#allocation3 + $0xf0] sm:$0xff] %vm611, %v3099
        %3132 = vst.msk [vmem:[#allocation3 + $0xf8] sm:$0xff] %vm611, %v3100
        %v3133 = vld [vmem:[%s2774 + $0x8] sm:$0xff]
        %v3134 = vld [vmem:[%s2774 + $0x10] sm:$0xff]
        %v3135 = vld [vmem:[%s2774 + $0x28] sm:$0xff]
        %v3136 = vld [vmem:[%s2774 + $0x30] sm:$0xff]
        %v3137 = vld [vmem:[%s2774 + $0x48] sm:$0xff]
        %v3138 = vld [vmem:[%s2774 + $0x50] sm:$0xff]
        %v3139 = vld [vmem:[%s2774 + $0x68] sm:$0xff]
        %v3140 = vld [vmem:[%s2774 + $0x70] sm:$0xff]
        %v3141 = vld [vmem:[%s2774 + $0x88] sm:$0xff]
        %v3142 = vld [vmem:[%s2774 + $0x90] sm:$0xff]
        %v3143 = vld [vmem:[%s2774 + $0xa8] sm:$0xff]
        %v3144 = vld [vmem:[%s2774 + $0xb0] sm:$0xff]
        %v3145 = vld [vmem:[%s2774 + $0xc8] sm:$0xff]
        %v3146 = vld [vmem:[%s2774 + $0xd0] sm:$0xff]
        %v3147 = vld [vmem:[%s2774 + $0xe8] sm:$0xff]
        %v3148 = vld [vmem:[%s2774 + $0xf0] sm:$0xff]
        %v3149 = vld [vmem:[%s2774 + $0x108] sm:$0xff]
        %v3150 = vld [vmem:[%s2774 + $0x110] sm:$0xff]
        %v3151 = vld [vmem:[%s2774 + $0x128] sm:$0xff]
        %v3152 = vld [vmem:[%s2774 + $0x130] sm:$0xff]
        %v3153 = vld [vmem:[%s2774 + $0x148] sm:$0xff]
        %v3154 = vld [vmem:[%s2774 + $0x150] sm:$0xff]
        %v3155 = vld [vmem:[%s2774 + $0x168] sm:$0xff]
        %v3156 = vld [vmem:[%s2774 + $0x170] sm:$0xff]
        %v3157 = vld [vmem:[%s2774 + $0x188] sm:$0xff]
        %v3158 = vld [vmem:[%s2774 + $0x190] sm:$0xff]
        %v3159 = vld [vmem:[%s2774 + $0x1a8] sm:$0xff]
        %v3160 = vld [vmem:[%s2774 + $0x1b0] sm:$0xff]
        %v3161 = vld [vmem:[%s2774 + $0x1c8] sm:$0xff]
        %v3162 = vld [vmem:[%s2774 + $0x1d0] sm:$0xff]
        %v3163 = vld [vmem:[%s2774 + $0x1e8] sm:$0xff]
        %v3164 = vld [vmem:[%s2774 + $0x1f0] sm:$0xff]
        %v3165 = vpack.c.bf16 %v3134, %v3133
        %v3166 = vpack.c.bf16 %v3136, %v3135
        %v3167 = vpack.c.bf16 %v3138, %v3137
        %v3168 = vpack.c.bf16 %v3140, %v3139
        %v3169 = vpack.c.bf16 %v3142, %v3141
        %v3170 = vpack.c.bf16 %v3144, %v3143
        %v3171 = vpack.c.bf16 %v3146, %v3145
        %v3172 = vpack.c.bf16 %v3148, %v3147
        %v3173 = vpack.c.bf16 %v3150, %v3149
        %v3174 = vpack.c.bf16 %v3152, %v3151
        %v3175 = vpack.c.bf16 %v3154, %v3153
        %v3176 = vpack.c.bf16 %v3156, %v3155
        %v3177 = vpack.c.bf16 %v3158, %v3157
        %v3178 = vpack.c.bf16 %v3160, %v3159
        %v3179 = vpack.c.bf16 %v3162, %v3161
        %v3180 = vpack.c.bf16 %v3164, %v3163
        %s3181 = scalar_lea.vmem %s3, 28
        %v3182 = vld [vmem:[%s3181] sm:$0xf]
        %v3184 = vsel %vm611, %v3165, 0
        %v3187 = vsel %vm611, %v3166, 0
        %v3190 = vsel %vm611, %v3167, 0
        %v3193 = vsel %vm611, %v3168, 0
        %v3196 = vsel %vm611, %v3169, 0
        %v3199 = vsel %vm611, %v3170, 0
        %v3202 = vsel %vm611, %v3171, 0
        %v3205 = vsel %vm611, %v3172, 0
        %v3208 = vsel %vm611, %v3173, 0
        %v3211 = vsel %vm611, %v3174, 0
        %v3214 = vsel %vm611, %v3175, 0
        %v3217 = vsel %vm611, %v3176, 0
        %v3220 = vsel %vm611, %v3177, 0
        %v3223 = vsel %vm611, %v3178, 0
        %v3226 = vsel %vm611, %v3179, 0
        %v3229 = vsel %vm611, %v3180, 0
        %v3232 = vsel %vm787, %v3182, 0
        %3234 = vmatprep.subr.bf16.mxu0 0
        %3235 = vmatpush1.bf16.msra.mxu0 %v3232
        %3236 = vmatprep.subr.bf16.mxu0 0
        %3237 = vmatpush1.bf16.msra.mxu0 0
        %3238 = vmatprep.subr.bf16.mxu0 0
        %3239 = vmatpush1.bf16.msra.mxu0 0
        %3240 = vmatprep.subr.bf16.mxu0 0
        %3241 = vmatpush1.bf16.msra.mxu0 0
        %3242 = vmatprep.subr.bf16.mxu0 0
        %3243 = vmatpush1.bf16.msra.mxu0 0
        %3244 = vmatprep.subr.bf16.mxu0 0
        %3245 = vmatpush1.bf16.msra.mxu0 0
        %3246 = vmatprep.subr.bf16.mxu0 0
        %3247 = vmatpush1.bf16.msra.mxu0 0
        %3248 = vmatprep.subr.bf16.mxu0 0
        %3249 = vmatpush1.bf16.msra.mxu0 0
        %3250 = vmatprep.subr.bf16.mxu0 0
        %3251 = vmatpush1.bf16.msra.mxu0 0
        %3252 = vmatprep.subr.bf16.mxu0 0
        %3253 = vmatpush1.bf16.msra.mxu0 0
        %3254 = vmatprep.subr.bf16.mxu0 0
        %3255 = vmatpush1.bf16.msra.mxu0 0
        %3256 = vmatprep.subr.bf16.mxu0 0
        %3257 = vmatpush1.bf16.msra.mxu0 0
        %3258 = vmatprep.subr.bf16.mxu0 0
        %3259 = vmatpush1.bf16.msra.mxu0 0
        %3260 = vmatprep.subr.bf16.mxu0 0
        %3261 = vmatpush1.bf16.msra.mxu0 0
        %3262 = vmatprep.subr.bf16.mxu0 0
        %3263 = vmatpush1.bf16.msra.mxu0 0
        %3264 = vmatprep.subr.bf16.mxu0 0
        %3265 = vmatpush1.bf16.msra.mxu0 0
        %3266 = vmatprep.mubr.bf16.mxu0 0
        %3267 = vmatmul.mubr.bf16.gmra.mrb[0].mxu0 %v3184
        %v3268 = vpop.f32.mrb[0].mxu0
        %v3269 = vadd.f32 0.0, %v3268
        %v3270 = vpop.f32.mrb[0].mxu0
        %v3271 = vpop.f32.mrb[0].mxu0
        %v3272 = vadd.f32 0.0, %v3271
        %v3273 = vpop.f32.mrb[0].mxu0
        %3274 = vmatprep.mubr.bf16.mxu0 0
        %3275 = vmatmul.mubr.bf16.gmra.mrb[0].mxu0 %v3187
        %v3276 = vpop.f32.mrb[0].mxu0
        %v3277 = vadd.f32 0.0, %v3276
        %v3278 = vpop.f32.mrb[0].mxu0
        %v3279 = vpop.f32.mrb[0].mxu0
        %v3280 = vadd.f32 0.0, %v3279
        %v3281 = vpop.f32.mrb[0].mxu0
        %3282 = vmatprep.mubr.bf16.mxu0 0
        %3283 = vmatmul.mubr.bf16.gmra.mrb[0].mxu0 %v3190
        %v3284 = vpop.f32.mrb[0].mxu0
        %v3285 = vadd.f32 0.0, %v3284
        %v3286 = vpop.f32.mrb[0].mxu0
        %v3287 = vpop.f32.mrb[0].mxu0
        %v3288 = vadd.f32 0.0, %v3287
        %v3289 = vpop.f32.mrb[0].mxu0
        %3290 = vmatprep.mubr.bf16.mxu0 0
        %3291 = vmatmul.mubr.bf16.gmra.mrb[0].mxu0 %v3193
        %v3292 = vpop.f32.mrb[0].mxu0
        %v3293 = vadd.f32 0.0, %v3292
        %v3294 = vpop.f32.mrb[0].mxu0
        %v3295 = vpop.f32.mrb[0].mxu0
        %v3296 = vadd.f32 0.0, %v3295
        %v3297 = vpop.f32.mrb[0].mxu0
        %3298 = vmatprep.mubr.bf16.mxu0 0
        %3299 = vmatmul.mubr.bf16.gmra.mrb[0].mxu0 %v3196
        %v3300 = vpop.f32.mrb[0].mxu0
        %v3301 = vadd.f32 0.0, %v3300
        %v3302 = vpop.f32.mrb[0].mxu0
        %v3303 = vpop.f32.mrb[0].mxu0
        %v3304 = vadd.f32 0.0, %v3303
        %v3305 = vpop.f32.mrb[0].mxu0
        %3306 = vmatprep.mubr.bf16.mxu0 0
        %3307 = vmatmul.mubr.bf16.gmra.mrb[0].mxu0 %v3199
        %v3308 = vpop.f32.mrb[0].mxu0
        %v3309 = vadd.f32 0.0, %v3308
        %v3310 = vpop.f32.mrb[0].mxu0
        %v3311 = vpop.f32.mrb[0].mxu0
        %v3312 = vadd.f32 0.0, %v3311
        %v3313 = vpop.f32.mrb[0].mxu0
        %3314 = vmatprep.mubr.bf16.mxu0 0
        %3315 = vmatmul.mubr.bf16.gmra.mrb[0].mxu0 %v3202
        %v3316 = vpop.f32.mrb[0].mxu0
        %v3317 = vadd.f32 0.0, %v3316
        %v3318 = vpop.f32.mrb[0].mxu0
        %v3319 = vpop.f32.mrb[0].mxu0
        %v3320 = vadd.f32 0.0, %v3319
        %v3321 = vpop.f32.mrb[0].mxu0
        %3322 = vmatprep.mubr.bf16.mxu0 0
        %3323 = vmatmul.mubr.bf16.gmra.mrb[0].mxu0 %v3205
        %v3324 = vpop.f32.mrb[0].mxu0
        %v3325 = vadd.f32 0.0, %v3324
        %v3326 = vpop.f32.mrb[0].mxu0
        %v3327 = vpop.f32.mrb[0].mxu0
        %v3328 = vadd.f32 0.0, %v3327
        %v3329 = vpop.f32.mrb[0].mxu0
        %3330 = vmatprep.mubr.bf16.mxu0 0
        %3331 = vmatmul.mubr.bf16.gmra.mrb[0].mxu0 %v3208
        %v3332 = vpop.f32.mrb[0].mxu0
        %v3333 = vadd.f32 0.0, %v3332
        %v3334 = vpop.f32.mrb[0].mxu0
        %v3335 = vpop.f32.mrb[0].mxu0
        %v3336 = vadd.f32 0.0, %v3335
        %v3337 = vpop.f32.mrb[0].mxu0
        %3338 = vmatprep.mubr.bf16.mxu0 0
        %3339 = vmatmul.mubr.bf16.gmra.mrb[0].mxu0 %v3211
        %v3340 = vpop.f32.mrb[0].mxu0
        %v3341 = vadd.f32 0.0, %v3340
        %v3342 = vpop.f32.mrb[0].mxu0
        %v3343 = vpop.f32.mrb[0].mxu0
        %v3344 = vadd.f32 0.0, %v3343
        %v3345 = vpop.f32.mrb[0].mxu0
        %3346 = vmatprep.mubr.bf16.mxu0 0
        %3347 = vmatmul.mubr.bf16.gmra.mrb[0].mxu0 %v3214
        %v3348 = vpop.f32.mrb[0].mxu0
        %v3349 = vadd.f32 0.0, %v3348
        %v3350 = vpop.f32.mrb[0].mxu0
        %v3351 = vpop.f32.mrb[0].mxu0
        %v3352 = vadd.f32 0.0, %v3351
        %v3353 = vpop.f32.mrb[0].mxu0
        %3354 = vmatprep.mubr.bf16.mxu0 0
        %3355 = vmatmul.mubr.bf16.gmra.mrb[0].mxu0 %v3217
        %v3356 = vpop.f32.mrb[0].mxu0
        %v3357 = vadd.f32 0.0, %v3356
        %v3358 = vpop.f32.mrb[0].mxu0
        %v3359 = vpop.f32.mrb[0].mxu0
        %v3360 = vadd.f32 0.0, %v3359
        %v3361 = vpop.f32.mrb[0].mxu0
        %3362 = vmatprep.mubr.bf16.mxu0 0
        %3363 = vmatmul.mubr.bf16.gmra.mrb[0].mxu0 %v3220
        %v3364 = vpop.f32.mrb[0].mxu0
        %v3365 = vadd.f32 0.0, %v3364
        %v3366 = vpop.f32.mrb[0].mxu0
        %v3367 = vpop.f32.mrb[0].mxu0
        %v3368 = vadd.f32 0.0, %v3367
        %v3369 = vpop.f32.mrb[0].mxu0
        %3370 = vmatprep.mubr.bf16.mxu0 0
        %3371 = vmatmul.mubr.bf16.gmra.mrb[0].mxu0 %v3223
        %v3372 = vpop.f32.mrb[0].mxu0
        %v3373 = vadd.f32 0.0, %v3372
        %v3374 = vpop.f32.mrb[0].mxu0
        %v3375 = vpop.f32.mrb[0].mxu0
        %v3376 = vadd.f32 0.0, %v3375
        %v3377 = vpop.f32.mrb[0].mxu0
        %3378 = vmatprep.mubr.bf16.mxu0 0
        %3379 = vmatmul.mubr.bf16.gmra.mrb[0].mxu0 %v3226
        %v3380 = vpop.f32.mrb[0].mxu0
        %v3381 = vadd.f32 0.0, %v3380
        %v3382 = vpop.f32.mrb[0].mxu0
        %v3383 = vpop.f32.mrb[0].mxu0
        %v3384 = vadd.f32 0.0, %v3383
        %v3385 = vpop.f32.mrb[0].mxu0
        %3386 = vmatprep.mubr.bf16.mxu0 0
        %3387 = vmatmul.mubr.bf16.gmra.mrb[0].mxu0 %v3229
        %v3388 = vpop.f32.mrb[0].mxu0
        %v3389 = vadd.f32 0.0, %v3388
        %v3390 = vpop.f32.mrb[0].mxu0
        %v3391 = vpop.f32.mrb[0].mxu0
        %v3392 = vadd.f32 0.0, %v3391
        %v3393 = vpop.f32.mrb[0].mxu0
        %3394 = vdwg.mxu0
        %v3395 = vld [vmem:[#allocation3] sm:$0xff]
        %v3396 = vld [vmem:[#allocation3 + $0x8] sm:$0xff]
        %v3397 = vld [vmem:[#allocation3 + $0x10] sm:$0xff]
        %v3398 = vld [vmem:[#allocation3 + $0x18] sm:$0xff]
        %v3399 = vld [vmem:[#allocation3 + $0x20] sm:$0xff]
        %v3400 = vld [vmem:[#allocation3 + $0x28] sm:$0xff]
        %v3401 = vld [vmem:[#allocation3 + $0x30] sm:$0xff]
        %v3402 = vld [vmem:[#allocation3 + $0x38] sm:$0xff]
        %v3403 = vld [vmem:[#allocation3 + $0x40] sm:$0xff]
        %v3404 = vld [vmem:[#allocation3 + $0x48] sm:$0xff]
        %v3405 = vld [vmem:[#allocation3 + $0x50] sm:$0xff]
        %v3406 = vld [vmem:[#allocation3 + $0x58] sm:$0xff]
        %v3407 = vld [vmem:[#allocation3 + $0x60] sm:$0xff]
        %v3408 = vld [vmem:[#allocation3 + $0x68] sm:$0xff]
        %v3409 = vld [vmem:[#allocation3 + $0x70] sm:$0xff]
        %v3410 = vld [vmem:[#allocation3 + $0x78] sm:$0xff]
        %v3411 = vld [vmem:[#allocation3 + $0x80] sm:$0xff]
        %v3412 = vld [vmem:[#allocation3 + $0x88] sm:$0xff]
        %v3413 = vld [vmem:[#allocation3 + $0x90] sm:$0xff]
        %v3414 = vld [vmem:[#allocation3 + $0x98] sm:$0xff]
        %v3415 = vld [vmem:[#allocation3 + $0xa0] sm:$0xff]
        %v3416 = vld [vmem:[#allocation3 + $0xa8] sm:$0xff]
        %v3417 = vld [vmem:[#allocation3 + $0xb0] sm:$0xff]
        %v3418 = vld [vmem:[#allocation3 + $0xb8] sm:$0xff]
        %v3419 = vld [vmem:[#allocation3 + $0xc0] sm:$0xff]
        %v3420 = vld [vmem:[#allocation3 + $0xc8] sm:$0xff]
        %v3421 = vld [vmem:[#allocation3 + $0xd0] sm:$0xff]
        %v3422 = vld [vmem:[#allocation3 + $0xd8] sm:$0xff]
        %v3423 = vld [vmem:[#allocation3 + $0xe0] sm:$0xff]
        %v3424 = vld [vmem:[#allocation3 + $0xe8] sm:$0xff]
        %v3425 = vld [vmem:[#allocation3 + $0xf0] sm:$0xff]
        %v3426 = vld [vmem:[#allocation3 + $0xf8] sm:$0xff]
        %v3427 = vadd.f32 %v3395, %v3269
        %v3428 = vadd.f32 %v3396, %v3272
        %v3429 = vadd.f32 %v3397, %v3277
        %v3430 = vadd.f32 %v3398, %v3280
        %v3431 = vadd.f32 %v3399, %v3285
        %v3432 = vadd.f32 %v3400, %v3288
        %v3433 = vadd.f32 %v3401, %v3293
        %v3434 = vadd.f32 %v3402, %v3296
        %v3435 = vadd.f32 %v3403, %v3301
        %v3436 = vadd.f32 %v3404, %v3304
        %v3437 = vadd.f32 %v3405, %v3309
        %v3438 = vadd.f32 %v3406, %v3312
        %v3439 = vadd.f32 %v3407, %v3317
        %v3440 = vadd.f32 %v3408, %v3320
        %v3441 = vadd.f32 %v3409, %v3325
        %v3442 = vadd.f32 %v3410, %v3328
        %v3443 = vadd.f32 %v3411, %v3333
        %v3444 = vadd.f32 %v3412, %v3336
        %v3445 = vadd.f32 %v3413, %v3341
        %v3446 = vadd.f32 %v3414, %v3344
        %v3447 = vadd.f32 %v3415, %v3349
        %v3448 = vadd.f32 %v3416, %v3352
        %v3449 = vadd.f32 %v3417, %v3357
        %v3450 = vadd.f32 %v3418, %v3360
        %v3451 = vadd.f32 %v3419, %v3365
        %v3452 = vadd.f32 %v3420, %v3368
        %v3453 = vadd.f32 %v3421, %v3373
        %v3454 = vadd.f32 %v3422, %v3376
        %v3455 = vadd.f32 %v3423, %v3381
        %v3456 = vadd.f32 %v3424, %v3384
        %v3457 = vadd.f32 %v3425, %v3389
        %v3458 = vadd.f32 %v3426, %v3392
        %3459 = vst.msk [vmem:[#allocation3] sm:$0xff] %vm611, %v3427
        %3460 = vst.msk [vmem:[#allocation3 + $0x8] sm:$0xff] %vm611, %v3428
        %3461 = vst.msk [vmem:[#allocation3 + $0x10] sm:$0xff] %vm611, %v3429
        %3462 = vst.msk [vmem:[#allocation3 + $0x18] sm:$0xff] %vm611, %v3430
        %3463 = vst.msk [vmem:[#allocation3 + $0x20] sm:$0xff] %vm611, %v3431
        %3464 = vst.msk [vmem:[#allocation3 + $0x28] sm:$0xff] %vm611, %v3432
        %3465 = vst.msk [vmem:[#allocation3 + $0x30] sm:$0xff] %vm611, %v3433
        %3466 = vst.msk [vmem:[#allocation3 + $0x38] sm:$0xff] %vm611, %v3434
        %3467 = vst.msk [vmem:[#allocation3 + $0x40] sm:$0xff] %vm611, %v3435
        %3468 = vst.msk [vmem:[#allocation3 + $0x48] sm:$0xff] %vm611, %v3436
        %3469 = vst.msk [vmem:[#allocation3 + $0x50] sm:$0xff] %vm611, %v3437
        %3470 = vst.msk [vmem:[#allocation3 + $0x58] sm:$0xff] %vm611, %v3438
        %3471 = vst.msk [vmem:[#allocation3 + $0x60] sm:$0xff] %vm611, %v3439
        %3472 = vst.msk [vmem:[#allocation3 + $0x68] sm:$0xff] %vm611, %v3440
        %3473 = vst.msk [vmem:[#allocation3 + $0x70] sm:$0xff] %vm611, %v3441
        %3474 = vst.msk [vmem:[#allocation3 + $0x78] sm:$0xff] %vm611, %v3442
        %3475 = vst.msk [vmem:[#allocation3 + $0x80] sm:$0xff] %vm611, %v3443
        %3476 = vst.msk [vmem:[#allocation3 + $0x88] sm:$0xff] %vm611, %v3444
        %3477 = vst.msk [vmem:[#allocation3 + $0x90] sm:$0xff] %vm611, %v3445
        %3478 = vst.msk [vmem:[#allocation3 + $0x98] sm:$0xff] %vm611, %v3446
        %3479 = vst.msk [vmem:[#allocation3 + $0xa0] sm:$0xff] %vm611, %v3447
        %3480 = vst.msk [vmem:[#allocation3 + $0xa8] sm:$0xff] %vm611, %v3448
        %3481 = vst.msk [vmem:[#allocation3 + $0xb0] sm:$0xff] %vm611, %v3449
        %3482 = vst.msk [vmem:[#allocation3 + $0xb8] sm:$0xff] %vm611, %v3450
        %3483 = vst.msk [vmem:[#allocation3 + $0xc0] sm:$0xff] %vm611, %v3451
        %3484 = vst.msk [vmem:[#allocation3 + $0xc8] sm:$0xff] %vm611, %v3452
        %3485 = vst.msk [vmem:[#allocation3 + $0xd0] sm:$0xff] %vm611, %v3453
        %3486 = vst.msk [vmem:[#allocation3 + $0xd8] sm:$0xff] %vm611, %v3454
        %3487 = vst.msk [vmem:[#allocation3 + $0xe0] sm:$0xff] %vm611, %v3455
        %3488 = vst.msk [vmem:[#allocation3 + $0xe8] sm:$0xff] %vm611, %v3456
        %3489 = vst.msk [vmem:[#allocation3 + $0xf0] sm:$0xff] %vm611, %v3457
        %3490 = vst.msk [vmem:[#allocation3 + $0xf8] sm:$0xff] %vm611, %v3458
        %v3491 = vld [vmem:[%s2774 + $0x9] sm:$0xff]
        %v3492 = vld [vmem:[%s2774 + $0x11] sm:$0xff]
        %v3493 = vld [vmem:[%s2774 + $0x29] sm:$0xff]
        %v3494 = vld [vmem:[%s2774 + $0x31] sm:$0xff]
        %v3495 = vld [vmem:[%s2774 + $0x49] sm:$0xff]
        %v3496 = vld [vmem:[%s2774 + $0x51] sm:$0xff]
        %v3497 = vld [vmem:[%s2774 + $0x69] sm:$0xff]
        %v3498 = vld [vmem:[%s2774 + $0x71] sm:$0xff]
        %v3499 = vld [vmem:[%s2774 + $0x89] sm:$0xff]
        %v3500 = vld [vmem:[%s2774 + $0x91] sm:$0xff]
        %v3501 = vld [vmem:[%s2774 + $0xa9] sm:$0xff]
        %v3502 = vld [vmem:[%s2774 + $0xb1] sm:$0xff]
        %v3503 = vld [vmem:[%s2774 + $0xc9] sm:$0xff]
        %v3504 = vld [vmem:[%s2774 + $0xd1] sm:$0xff]
        %v3505 = vld [vmem:[%s2774 + $0xe9] sm:$0xff]
        %v3506 = vld [vmem:[%s2774 + $0xf1] sm:$0xff]
        %v3507 = vld [vmem:[%s2774 + $0x109] sm:$0xff]
        %v3508 = vld [vmem:[%s2774 + $0x111] sm:$0xff]
        %v3509 = vld [vmem:[%s2774 + $0x129] sm:$0xff]
        %v3510 = vld [vmem:[%s2774 + $0x131] sm:$0xff]
        %v3511 = vld [vmem:[%s2774 + $0x149] sm:$0xff]
        %v3512 = vld [vmem:[%s2774 + $0x151] sm:$0xff]
        %v3513 = vld [vmem:[%s2774 + $0x169] sm:$0xff]
        %v3514 = vld [vmem:[%s2774 + $0x171] sm:$0xff]
        %v3515 = vld [vmem:[%s2774 + $0x189] sm:$0xff]
        %v3516 = vld [vmem:[%s2774 + $0x191] sm:$0xff]
        %v3517 = vld [vmem:[%s2774 + $0x1a9] sm:$0xff]
        %v3518 = vld [vmem:[%s2774 + $0x1b1] sm:$0xff]
        %v3519 = vld [vmem:[%s2774 + $0x1c9] sm:$0xff]
        %v3520 = vld [vmem:[%s2774 + $0x1d1] sm:$0xff]
        %v3521 = vld [vmem:[%s2774 + $0x1e9] sm:$0xff]
        %v3522 = vld [vmem:[%s2774 + $0x1f1] sm:$0xff]
        %v3523 = vpack.c.bf16 %v3492, %v3491
        %v3524 = vpack.c.bf16 %v3494, %v3493
        %v3525 = vpack.c.bf16 %v3496, %v3495
        %v3526 = vpack.c.bf16 %v3498, %v3497
        %v3527 = vpack.c.bf16 %v3500, %v3499
        %v3528 = vpack.c.bf16 %v3502, %v3501
        %v3529 = vpack.c.bf16 %v3504, %v3503
        %v3530 = vpack.c.bf16 %v3506, %v3505
        %v3531 = vpack.c.bf16 %v3508, %v3507
        %v3532 = vpack.c.bf16 %v3510, %v3509
        %v3533 = vpack.c.bf16 %v3512, %v3511
        %v3534 = vpack.c.bf16 %v3514, %v3513
        %v3535 = vpack.c.bf16 %v3516, %v3515
        %v3536 = vpack.c.bf16 %v3518, %v3517
        %v3537 = vpack.c.bf16 %v3520, %v3519
        %v3538 = vpack.c.bf16 %v3522, %v3521
        %s3539 = scalar_lea.vmem %s3, 32
        %v3540 = vld [vmem:[%s3539] sm:$0xf]
        %v3542 = vsel %vm611, %v3523, 0
        %v3545 = vsel %vm611, %v3524, 0
        %v3548 = vsel %vm611, %v3525, 0
        %v3551 = vsel %vm611, %v3526, 0
        %v3554 = vsel %vm611, %v3527, 0
        %v3557 = vsel %vm611, %v3528, 0
        %v3560 = vsel %vm611, %v3529, 0
        %v3563 = vsel %vm611, %v3530, 0
        %v3566 = vsel %vm611, %v3531, 0
        %v3569 = vsel %vm611, %v3532, 0
        %v3572 = vsel %vm611, %v3533, 0
        %v3575 = vsel %vm611, %v3534, 0
        %v3578 = vsel %vm611, %v3535, 0
        %v3581 = vsel %vm611, %v3536, 0
        %v3584 = vsel %vm611, %v3537, 0
        %v3587 = vsel %vm611, %v3538, 0
        %v3590 = vsel %vm787, %v3540, 0
        %3592 = vmatprep.subr.bf16.mxu0 0
        %3593 = vmatpush1.bf16.msra.mxu0 %v3590
        %3594 = vmatprep.subr.bf16.mxu0 0
        %3595 = vmatpush1.bf16.msra.mxu0 0
        %3596 = vmatprep.subr.bf16.mxu0 0
        %3597 = vmatpush1.bf16.msra.mxu0 0
        %3598 = vmatprep.subr.bf16.mxu0 0
        %3599 = vmatpush1.bf16.msra.mxu0 0
        %3600 = vmatprep.subr.bf16.mxu0 0
        %3601 = vmatpush1.bf16.msra.mxu0 0
        %3602 = vmatprep.subr.bf16.mxu0 0
        %3603 = vmatpush1.bf16.msra.mxu0 0
        %3604 = vmatprep.subr.bf16.mxu0 0
        %3605 = vmatpush1.bf16.msra.mxu0 0
        %3606 = vmatprep.subr.bf16.mxu0 0
        %3607 = vmatpush1.bf16.msra.mxu0 0
        %3608 = vmatprep.subr.bf16.mxu0 0
        %3609 = vmatpush1.bf16.msra.mxu0 0
        %3610 = vmatprep.subr.bf16.mxu0 0
        %3611 = vmatpush1.bf16.msra.mxu0 0
        %3612 = vmatprep.subr.bf16.mxu0 0
        %3613 = vmatpush1.bf16.msra.mxu0 0
        %3614 = vmatprep.subr.bf16.mxu0 0
        %3615 = vmatpush1.bf16.msra.mxu0 0
        %3616 = vmatprep.subr.bf16.mxu0 0
        %3617 = vmatpush1.bf16.msra.mxu0 0
        %3618 = vmatprep.subr.bf16.mxu0 0
        %3619 = vmatpush1.bf16.msra.mxu0 0
        %3620 = vmatprep.subr.bf16.mxu0 0
        %3621 = vmatpush1.bf16.msra.mxu0 0
        %3622 = vmatprep.subr.bf16.mxu0 0
        %3623 = vmatpush1.bf16.msra.mxu0 0
        %3624 = vmatprep.mubr.bf16.mxu0 0
        %3625 = vmatmul.mubr.bf16.gmra.mrb[0].mxu0 %v3542
        %v3626 = vpop.f32.mrb[0].mxu0
        %v3627 = vadd.f32 0.0, %v3626
        %v3628 = vpop.f32.mrb[0].mxu0
        %v3629 = vpop.f32.mrb[0].mxu0
        %v3630 = vadd.f32 0.0, %v3629
        %v3631 = vpop.f32.mrb[0].mxu0
        %3632 = vmatprep.mubr.bf16.mxu0 0
        %3633 = vmatmul.mubr.bf16.gmra.mrb[0].mxu0 %v3545
        %v3634 = vpop.f32.mrb[0].mxu0
        %v3635 = vadd.f32 0.0, %v3634
        %v3636 = vpop.f32.mrb[0].mxu0
        %v3637 = vpop.f32.mrb[0].mxu0
        %v3638 = vadd.f32 0.0, %v3637
        %v3639 = vpop.f32.mrb[0].mxu0
        %3640 = vmatprep.mubr.bf16.mxu0 0
        %3641 = vmatmul.mubr.bf16.gmra.mrb[0].mxu0 %v3548
        %v3642 = vpop.f32.mrb[0].mxu0
        %v3643 = vadd.f32 0.0, %v3642
        %v3644 = vpop.f32.mrb[0].mxu0
        %v3645 = vpop.f32.mrb[0].mxu0
        %v3646 = vadd.f32 0.0, %v3645
        %v3647 = vpop.f32.mrb[0].mxu0
        %3648 = vmatprep.mubr.bf16.mxu0 0
        %3649 = vmatmul.mubr.bf16.gmra.mrb[0].mxu0 %v3551
        %v3650 = vpop.f32.mrb[0].mxu0
        %v3651 = vadd.f32 0.0, %v3650
        %v3652 = vpop.f32.mrb[0].mxu0
        %v3653 = vpop.f32.mrb[0].mxu0
        %v3654 = vadd.f32 0.0, %v3653
        %v3655 = vpop.f32.mrb[0].mxu0
        %3656 = vmatprep.mubr.bf16.mxu0 0
        %3657 = vmatmul.mubr.bf16.gmra.mrb[0].mxu0 %v3554
        %v3658 = vpop.f32.mrb[0].mxu0
        %v3659 = vadd.f32 0.0, %v3658
        %v3660 = vpop.f32.mrb[0].mxu0
        %v3661 = vpop.f32.mrb[0].mxu0
        %v3662 = vadd.f32 0.0, %v3661
        %v3663 = vpop.f32.mrb[0].mxu0
        %3664 = vmatprep.mubr.bf16.mxu0 0
        %3665 = vmatmul.mubr.bf16.gmra.mrb[0].mxu0 %v3557
        %v3666 = vpop.f32.mrb[0].mxu0
        %v3667 = vadd.f32 0.0, %v3666
        %v3668 = vpop.f32.mrb[0].mxu0
        %v3669 = vpop.f32.mrb[0].mxu0
        %v3670 = vadd.f32 0.0, %v3669
        %v3671 = vpop.f32.mrb[0].mxu0
        %3672 = vmatprep.mubr.bf16.mxu0 0
        %3673 = vmatmul.mubr.bf16.gmra.mrb[0].mxu0 %v3560
        %v3674 = vpop.f32.mrb[0].mxu0
        %v3675 = vadd.f32 0.0, %v3674
        %v3676 = vpop.f32.mrb[0].mxu0
        %v3677 = vpop.f32.mrb[0].mxu0
        %v3678 = vadd.f32 0.0, %v3677
        %v3679 = vpop.f32.mrb[0].mxu0
        %3680 = vmatprep.mubr.bf16.mxu0 0
        %3681 = vmatmul.mubr.bf16.gmra.mrb[0].mxu0 %v3563
        %v3682 = vpop.f32.mrb[0].mxu0
        %v3683 = vadd.f32 0.0, %v3682
        %v3684 = vpop.f32.mrb[0].mxu0
        %v3685 = vpop.f32.mrb[0].mxu0
        %v3686 = vadd.f32 0.0, %v3685
        %v3687 = vpop.f32.mrb[0].mxu0
        %3688 = vmatprep.mubr.bf16.mxu0 0
        %3689 = vmatmul.mubr.bf16.gmra.mrb[0].mxu0 %v3566
        %v3690 = vpop.f32.mrb[0].mxu0
        %v3691 = vadd.f32 0.0, %v3690
        %v3692 = vpop.f32.mrb[0].mxu0
        %v3693 = vpop.f32.mrb[0].mxu0
        %v3694 = vadd.f32 0.0, %v3693
        %v3695 = vpop.f32.mrb[0].mxu0
        %3696 = vmatprep.mubr.bf16.mxu0 0
        %3697 = vmatmul.mubr.bf16.gmra.mrb[0].mxu0 %v3569
        %v3698 = vpop.f32.mrb[0].mxu0
        %v3699 = vadd.f32 0.0, %v3698
        %v3700 = vpop.f32.mrb[0].mxu0
        %v3701 = vpop.f32.mrb[0].mxu0
        %v3702 = vadd.f32 0.0, %v3701
        %v3703 = vpop.f32.mrb[0].mxu0
        %3704 = vmatprep.mubr.bf16.mxu0 0
        %3705 = vmatmul.mubr.bf16.gmra.mrb[0].mxu0 %v3572
        %v3706 = vpop.f32.mrb[0].mxu0
        %v3707 = vadd.f32 0.0, %v3706
        %v3708 = vpop.f32.mrb[0].mxu0
        %v3709 = vpop.f32.mrb[0].mxu0
        %v3710 = vadd.f32 0.0, %v3709
        %v3711 = vpop.f32.mrb[0].mxu0
        %3712 = vmatprep.mubr.bf16.mxu0 0
        %3713 = vmatmul.mubr.bf16.gmra.mrb[0].mxu0 %v3575
        %v3714 = vpop.f32.mrb[0].mxu0
        %v3715 = vadd.f32 0.0, %v3714
        %v3716 = vpop.f32.mrb[0].mxu0
        %v3717 = vpop.f32.mrb[0].mxu0
        %v3718 = vadd.f32 0.0, %v3717
        %v3719 = vpop.f32.mrb[0].mxu0
        %3720 = vmatprep.mubr.bf16.mxu0 0
        %3721 = vmatmul.mubr.bf16.gmra.mrb[0].mxu0 %v3578
        %v3722 = vpop.f32.mrb[0].mxu0
        %v3723 = vadd.f32 0.0, %v3722
        %v3724 = vpop.f32.mrb[0].mxu0
        %v3725 = vpop.f32.mrb[0].mxu0
        %v3726 = vadd.f32 0.0, %v3725
        %v3727 = vpop.f32.mrb[0].mxu0
        %3728 = vmatprep.mubr.bf16.mxu0 0
        %3729 = vmatmul.mubr.bf16.gmra.mrb[0].mxu0 %v3581
        %v3730 = vpop.f32.mrb[0].mxu0
        %v3731 = vadd.f32 0.0, %v3730
        %v3732 = vpop.f32.mrb[0].mxu0
        %v3733 = vpop.f32.mrb[0].mxu0
        %v3734 = vadd.f32 0.0, %v3733
        %v3735 = vpop.f32.mrb[0].mxu0
        %3736 = vmatprep.mubr.bf16.mxu0 0
        %3737 = vmatmul.mubr.bf16.gmra.mrb[0].mxu0 %v3584
        %v3738 = vpop.f32.mrb[0].mxu0
        %v3739 = vadd.f32 0.0, %v3738
        %v3740 = vpop.f32.mrb[0].mxu0
        %v3741 = vpop.f32.mrb[0].mxu0
        %v3742 = vadd.f32 0.0, %v3741
        %v3743 = vpop.f32.mrb[0].mxu0
        %3744 = vmatprep.mubr.bf16.mxu0 0
        %3745 = vmatmul.mubr.bf16.gmra.mrb[0].mxu0 %v3587
        %v3746 = vpop.f32.mrb[0].mxu0
        %v3747 = vadd.f32 0.0, %v3746
        %v3748 = vpop.f32.mrb[0].mxu0
        %v3749 = vpop.f32.mrb[0].mxu0
        %v3750 = vadd.f32 0.0, %v3749
        %v3751 = vpop.f32.mrb[0].mxu0
        %3752 = vdwg.mxu0
        %v3753 = vld [vmem:[#allocation3] sm:$0xff]
        %v3754 = vld [vmem:[#allocation3 + $0x8] sm:$0xff]
        %v3755 = vld [vmem:[#allocation3 + $0x10] sm:$0xff]
        %v3756 = vld [vmem:[#allocation3 + $0x18] sm:$0xff]
        %v3757 = vld [vmem:[#allocation3 + $0x20] sm:$0xff]
        %v3758 = vld [vmem:[#allocation3 + $0x28] sm:$0xff]
        %v3759 = vld [vmem:[#allocation3 + $0x30] sm:$0xff]
        %v3760 = vld [vmem:[#allocation3 + $0x38] sm:$0xff]
        %v3761 = vld [vmem:[#allocation3 + $0x40] sm:$0xff]
        %v3762 = vld [vmem:[#allocation3 + $0x48] sm:$0xff]
        %v3763 = vld [vmem:[#allocation3 + $0x50] sm:$0xff]
        %v3764 = vld [vmem:[#allocation3 + $0x58] sm:$0xff]
        %v3765 = vld [vmem:[#allocation3 + $0x60] sm:$0xff]
        %v3766 = vld [vmem:[#allocation3 + $0x68] sm:$0xff]
        %v3767 = vld [vmem:[#allocation3 + $0x70] sm:$0xff]
        %v3768 = vld [vmem:[#allocation3 + $0x78] sm:$0xff]
        %v3769 = vld [vmem:[#allocation3 + $0x80] sm:$0xff]
        %v3770 = vld [vmem:[#allocation3 + $0x88] sm:$0xff]
        %v3771 = vld [vmem:[#allocation3 + $0x90] sm:$0xff]
        %v3772 = vld [vmem:[#allocation3 + $0x98] sm:$0xff]
        %v3773 = vld [vmem:[#allocation3 + $0xa0] sm:$0xff]
        %v3774 = vld [vmem:[#allocation3 + $0xa8] sm:$0xff]
        %v3775 = vld [vmem:[#allocation3 + $0xb0] sm:$0xff]
        %v3776 = vld [vmem:[#allocation3 + $0xb8] sm:$0xff]
        %v3777 = vld [vmem:[#allocation3 + $0xc0] sm:$0xff]
        %v3778 = vld [vmem:[#allocation3 + $0xc8] sm:$0xff]
        %v3779 = vld [vmem:[#allocation3 + $0xd0] sm:$0xff]
        %v3780 = vld [vmem:[#allocation3 + $0xd8] sm:$0xff]
        %v3781 = vld [vmem:[#allocation3 + $0xe0] sm:$0xff]
        %v3782 = vld [vmem:[#allocation3 + $0xe8] sm:$0xff]
        %v3783 = vld [vmem:[#allocation3 + $0xf0] sm:$0xff]
        %v3784 = vld [vmem:[#allocation3 + $0xf8] sm:$0xff]
        %v3785 = vadd.f32 %v3753, %v3627
        %v3786 = vadd.f32 %v3754, %v3630
        %v3787 = vadd.f32 %v3755, %v3635
        %v3788 = vadd.f32 %v3756, %v3638
        %v3789 = vadd.f32 %v3757, %v3643
        %v3790 = vadd.f32 %v3758, %v3646
        %v3791 = vadd.f32 %v3759, %v3651
        %v3792 = vadd.f32 %v3760, %v3654
        %v3793 = vadd.f32 %v3761, %v3659
        %v3794 = vadd.f32 %v3762, %v3662
        %v3795 = vadd.f32 %v3763, %v3667
        %v3796 = vadd.f32 %v3764, %v3670
        %v3797 = vadd.f32 %v3765, %v3675
        %v3798 = vadd.f32 %v3766, %v3678
        %v3799 = vadd.f32 %v3767, %v3683
        %v3800 = vadd.f32 %v3768, %v3686
        %v3801 = vadd.f32 %v3769, %v3691
        %v3802 = vadd.f32 %v3770, %v3694
        %v3803 = vadd.f32 %v3771, %v3699
        %v3804 = vadd.f32 %v3772, %v3702
        %v3805 = vadd.f32 %v3773, %v3707
        %v3806 = vadd.f32 %v3774, %v3710
        %v3807 = vadd.f32 %v3775, %v3715
        %v3808 = vadd.f32 %v3776, %v3718
        %v3809 = vadd.f32 %v3777, %v3723
        %v3810 = vadd.f32 %v3778, %v3726
        %v3811 = vadd.f32 %v3779, %v3731
        %v3812 = vadd.f32 %v3780, %v3734
        %v3813 = vadd.f32 %v3781, %v3739
        %v3814 = vadd.f32 %v3782, %v3742
        %v3815 = vadd.f32 %v3783, %v3747
        %v3816 = vadd.f32 %v3784, %v3750
        %3817 = vst.msk [vmem:[#allocation3] sm:$0xff] %vm611, %v3785
        %3818 = vst.msk [vmem:[#allocation3 + $0x8] sm:$0xff] %vm611, %v3786
        %3819 = vst.msk [vmem:[#allocation3 + $0x10] sm:$0xff] %vm611, %v3787
        %3820 = vst.msk [vmem:[#allocation3 + $0x18] sm:$0xff] %vm611, %v3788
        %3821 = vst.msk [vmem:[#allocation3 + $0x20] sm:$0xff] %vm611, %v3789
        %3822 = vst.msk [vmem:[#allocation3 + $0x28] sm:$0xff] %vm611, %v3790
        %3823 = vst.msk [vmem:[#allocation3 + $0x30] sm:$0xff] %vm611, %v3791
        %3824 = vst.msk [vmem:[#allocation3 + $0x38] sm:$0xff] %vm611, %v3792
        %3825 = vst.msk [vmem:[#allocation3 + $0x40] sm:$0xff] %vm611, %v3793
        %3826 = vst.msk [vmem:[#allocation3 + $0x48] sm:$0xff] %vm611, %v3794
        %3827 = vst.msk [vmem:[#allocation3 + $0x50] sm:$0xff] %vm611, %v3795
        %3828 = vst.msk [vmem:[#allocation3 + $0x58] sm:$0xff] %vm611, %v3796
        %3829 = vst.msk [vmem:[#allocation3 + $0x60] sm:$0xff] %vm611, %v3797
        %3830 = vst.msk [vmem:[#allocation3 + $0x68] sm:$0xff] %vm611, %v3798
        %3831 = vst.msk [vmem:[#allocation3 + $0x70] sm:$0xff] %vm611, %v3799
        %3832 = vst.msk [vmem:[#allocation3 + $0x78] sm:$0xff] %vm611, %v3800
        %3833 = vst.msk [vmem:[#allocation3 + $0x80] sm:$0xff] %vm611, %v3801
        %3834 = vst.msk [vmem:[#allocation3 + $0x88] sm:$0xff] %vm611, %v3802
        %3835 = vst.msk [vmem:[#allocation3 + $0x90] sm:$0xff] %vm611, %v3803
        %3836 = vst.msk [vmem:[#allocation3 + $0x98] sm:$0xff] %vm611, %v3804
        %3837 = vst.msk [vmem:[#allocation3 + $0xa0] sm:$0xff] %vm611, %v3805
        %3838 = vst.msk [vmem:[#allocation3 + $0xa8] sm:$0xff] %vm611, %v3806
        %3839 = vst.msk [vmem:[#allocation3 + $0xb0] sm:$0xff] %vm611, %v3807
        %3840 = vst.msk [vmem:[#allocation3 + $0xb8] sm:$0xff] %vm611, %v3808
        %3841 = vst.msk [vmem:[#allocation3 + $0xc0] sm:$0xff] %vm611, %v3809
        %3842 = vst.msk [vmem:[#allocation3 + $0xc8] sm:$0xff] %vm611, %v3810
        %3843 = vst.msk [vmem:[#allocation3 + $0xd0] sm:$0xff] %vm611, %v3811
        %3844 = vst.msk [vmem:[#allocation3 + $0xd8] sm:$0xff] %vm611, %v3812
        %3845 = vst.msk [vmem:[#allocation3 + $0xe0] sm:$0xff] %vm611, %v3813
        %3846 = vst.msk [vmem:[#allocation3 + $0xe8] sm:$0xff] %vm611, %v3814
        %3847 = vst.msk [vmem:[#allocation3 + $0xf0] sm:$0xff] %vm611, %v3815
        %3848 = vst.msk [vmem:[#allocation3 + $0xf8] sm:$0xff] %vm611, %v3816
        %v3849 = vld [vmem:[#allocation3] sm:$0xff]
        %v3850 = vld [vmem:[#allocation3 + $0x8] sm:$0xff]
        %v3851 = vld [vmem:[#allocation3 + $0x10] sm:$0xff]
        %v3852 = vld [vmem:[#allocation3 + $0x18] sm:$0xff]
        %v3853 = vld [vmem:[#allocation3 + $0x20] sm:$0xff]
        %v3854 = vld [vmem:[#allocation3 + $0x28] sm:$0xff]
        %v3855 = vld [vmem:[#allocation3 + $0x30] sm:$0xff]
        %v3856 = vld [vmem:[#allocation3 + $0x38] sm:$0xff]
        %v3857 = vld [vmem:[#allocation3 + $0x40] sm:$0xff]
        %v3858 = vld [vmem:[#allocation3 + $0x48] sm:$0xff]
        %v3859 = vld [vmem:[#allocation3 + $0x50] sm:$0xff]
        %v3860 = vld [vmem:[#allocation3 + $0x58] sm:$0xff]
        %v3861 = vld [vmem:[#allocation3 + $0x60] sm:$0xff]
        %v3862 = vld [vmem:[#allocation3 + $0x68] sm:$0xff]
        %v3863 = vld [vmem:[#allocation3 + $0x70] sm:$0xff]
        %v3864 = vld [vmem:[#allocation3 + $0x78] sm:$0xff]
        %v3865 = vld [vmem:[#allocation3 + $0x80] sm:$0xff]
        %v3866 = vld [vmem:[#allocation3 + $0x88] sm:$0xff]
        %v3867 = vld [vmem:[#allocation3 + $0x90] sm:$0xff]
        %v3868 = vld [vmem:[#allocation3 + $0x98] sm:$0xff]
        %v3869 = vld [vmem:[#allocation3 + $0xa0] sm:$0xff]
        %v3870 = vld [vmem:[#allocation3 + $0xa8] sm:$0xff]
        %v3871 = vld [vmem:[#allocation3 + $0xb0] sm:$0xff]
        %v3872 = vld [vmem:[#allocation3 + $0xb8] sm:$0xff]
        %v3873 = vld [vmem:[#allocation3 + $0xc0] sm:$0xff]
        %v3874 = vld [vmem:[#allocation3 + $0xc8] sm:$0xff]
        %v3875 = vld [vmem:[#allocation3 + $0xd0] sm:$0xff]
        %v3876 = vld [vmem:[#allocation3 + $0xd8] sm:$0xff]
        %v3877 = vld [vmem:[#allocation3 + $0xe0] sm:$0xff]
        %v3878 = vld [vmem:[#allocation3 + $0xe8] sm:$0xff]
        %v3879 = vld [vmem:[#allocation3 + $0xf0] sm:$0xff]
        %v3880 = vld [vmem:[#allocation3 + $0xf8] sm:$0xff]
        %v3881 = vld [vmem:[%s4] sm:$0x1]
        %v3883 = vlaneseq
        %v3884 = vshrl.u32 %v3883, 7
        %v3885 = vsub.s32 0, %v3884
        %v3886 = vrot.slane %v3881, %v3885
        %v3888 = vadd.f32 %v3849, %v3886
        %v3889 = vadd.f32 %v3850, %v3886
        %v3890 = vadd.f32 %v3851, %v3886
        %v3891 = vadd.f32 %v3852, %v3886
        %v3892 = vadd.f32 %v3853, %v3886
        %v3893 = vadd.f32 %v3854, %v3886
        %v3894 = vadd.f32 %v3855, %v3886
        %v3895 = vadd.f32 %v3856, %v3886
        %v3896 = vadd.f32 %v3857, %v3886
        %v3897 = vadd.f32 %v3858, %v3886
        %v3898 = vadd.f32 %v3859, %v3886
        %v3899 = vadd.f32 %v3860, %v3886
        %v3900 = vadd.f32 %v3861, %v3886
        %v3901 = vadd.f32 %v3862, %v3886
        %v3902 = vadd.f32 %v3863, %v3886
        %v3903 = vadd.f32 %v3864, %v3886
        %v3904 = vadd.f32 %v3865, %v3886
        %v3905 = vadd.f32 %v3866, %v3886
        %v3906 = vadd.f32 %v3867, %v3886
        %v3907 = vadd.f32 %v3868, %v3886
        %v3908 = vadd.f32 %v3869, %v3886
        %v3909 = vadd.f32 %v3870, %v3886
        %v3910 = vadd.f32 %v3871, %v3886
        %v3911 = vadd.f32 %v3872, %v3886
        %v3912 = vadd.f32 %v3873, %v3886
        %v3913 = vadd.f32 %v3874, %v3886
        %v3914 = vadd.f32 %v3875, %v3886
        %v3915 = vadd.f32 %v3876, %v3886
        %v3916 = vadd.f32 %v3877, %v3886
        %v3917 = vadd.f32 %v3878, %v3886
        %v3918 = vadd.f32 %v3879, %v3886
        %v3919 = vadd.f32 %v3880, %v3886
        %v3920 = vmax.f32 %v3888, 0.0
        %v3921 = vmax.f32 %v3889, 0.0
        %v3922 = vmax.f32 %v3890, 0.0
        %v3923 = vmax.f32 %v3891, 0.0
        %v3924 = vmax.f32 %v3892, 0.0
        %v3925 = vmax.f32 %v3893, 0.0
        %v3926 = vmax.f32 %v3894, 0.0
        %v3927 = vmax.f32 %v3895, 0.0
        %v3928 = vmax.f32 %v3896, 0.0
        %v3929 = vmax.f32 %v3897, 0.0
        %v3930 = vmax.f32 %v3898, 0.0
        %v3931 = vmax.f32 %v3899, 0.0
        %v3932 = vmax.f32 %v3900, 0.0
        %v3933 = vmax.f32 %v3901, 0.0
        %v3934 = vmax.f32 %v3902, 0.0
        %v3935 = vmax.f32 %v3903, 0.0
        %v3936 = vmax.f32 %v3904, 0.0
        %v3937 = vmax.f32 %v3905, 0.0
        %v3938 = vmax.f32 %v3906, 0.0
        %v3939 = vmax.f32 %v3907, 0.0
        %v3940 = vmax.f32 %v3908, 0.0
        %v3941 = vmax.f32 %v3909, 0.0
        %v3942 = vmax.f32 %v3910, 0.0
        %v3943 = vmax.f32 %v3911, 0.0
        %v3944 = vmax.f32 %v3912, 0.0
        %v3945 = vmax.f32 %v3913, 0.0
        %v3946 = vmax.f32 %v3914, 0.0
        %v3947 = vmax.f32 %v3915, 0.0
        %v3948 = vmax.f32 %v3916, 0.0
        %v3949 = vmax.f32 %v3917, 0.0
        %v3950 = vmax.f32 %v3918, 0.0
        %v3951 = vmax.f32 %v3919, 0.0
        %v3952 = vpack.c.bf16 %v3921, %v3920
        %v3953 = vpack.c.bf16 %v3923, %v3922
        %v3954 = vpack.c.bf16 %v3925, %v3924
        %v3955 = vpack.c.bf16 %v3927, %v3926
        %v3956 = vpack.c.bf16 %v3929, %v3928
        %v3957 = vpack.c.bf16 %v3931, %v3930
        %v3958 = vpack.c.bf16 %v3933, %v3932
        %v3959 = vpack.c.bf16 %v3935, %v3934
        %v3960 = vpack.c.bf16 %v3937, %v3936
        %v3961 = vpack.c.bf16 %v3939, %v3938
        %v3962 = vpack.c.bf16 %v3941, %v3940
        %v3963 = vpack.c.bf16 %v3943, %v3942
        %v3964 = vpack.c.bf16 %v3945, %v3944
        %v3965 = vpack.c.bf16 %v3947, %v3946
        %v3966 = vpack.c.bf16 %v3949, %v3948
        %v3967 = vpack.c.bf16 %v3951, %v3950
        %v3968 = vld [vmem:[%s5] sm:$0xf]
        %v3969 = vld [vmem:[%s6] sm:$0x1]
        %v3971 = vlaneseq
        %v3972 = vshrl.u32 %v3971, 7
        %v3973 = vsub.s32 0, %v3972
        %v3974 = vrot.slane %v3969, %v3973
        %v3977 = vsel %vm611, %v3952, 0
        %v3980 = vsel %vm611, %v3953, 0
        %v3983 = vsel %vm611, %v3954, 0
        %v3986 = vsel %vm611, %v3955, 0
        %v3989 = vsel %vm611, %v3956, 0
        %v3992 = vsel %vm611, %v3957, 0
        %v3995 = vsel %vm611, %v3958, 0
        %v3998 = vsel %vm611, %v3959, 0
        %v4001 = vsel %vm611, %v3960, 0
        %v4004 = vsel %vm611, %v3961, 0
        %v4007 = vsel %vm611, %v3962, 0
        %v4010 = vsel %vm611, %v3963, 0
        %v4013 = vsel %vm611, %v3964, 0
        %v4016 = vsel %vm611, %v3965, 0
        %v4019 = vsel %vm611, %v3966, 0
        %v4022 = vsel %vm611, %v3967, 0
        %v4025 = vsel %vm787, %v3968, 0
        %4027 = vmatprep.subr.bf16.mxu0 0
        %4028 = vmatpush1.bf16.msra.mxu0 %v4025
        %4029 = vmatprep.subr.bf16.mxu0 0
        %4030 = vmatpush1.bf16.msra.mxu0 0
        %4031 = vmatprep.subr.bf16.mxu0 0
        %4032 = vmatpush1.bf16.msra.mxu0 0
        %4033 = vmatprep.subr.bf16.mxu0 0
        %4034 = vmatpush1.bf16.msra.mxu0 0
        %4035 = vmatprep.subr.bf16.mxu0 0
        %4036 = vmatpush1.bf16.msra.mxu0 0
        %4037 = vmatprep.subr.bf16.mxu0 0
        %4038 = vmatpush1.bf16.msra.mxu0 0
        %4039 = vmatprep.subr.bf16.mxu0 0
        %4040 = vmatpush1.bf16.msra.mxu0 0
        %4041 = vmatprep.subr.bf16.mxu0 0
        %4042 = vmatpush1.bf16.msra.mxu0 0
        %4043 = vmatprep.subr.bf16.mxu0 0
        %4044 = vmatpush1.bf16.msra.mxu0 0
        %4045 = vmatprep.subr.bf16.mxu0 0
        %4046 = vmatpush1.bf16.msra.mxu0 0
        %4047 = vmatprep.subr.bf16.mxu0 0
        %4048 = vmatpush1.bf16.msra.mxu0 0
        %4049 = vmatprep.subr.bf16.mxu0 0
        %4050 = vmatpush1.bf16.msra.mxu0 0
        %4051 = vmatprep.subr.bf16.mxu0 0
        %4052 = vmatpush1.bf16.msra.mxu0 0
        %4053 = vmatprep.subr.bf16.mxu0 0
        %4054 = vmatpush1.bf16.msra.mxu0 0
        %4055 = vmatprep.subr.bf16.mxu0 0
        %4056 = vmatpush1.bf16.msra.mxu0 0
        %4057 = vmatprep.subr.bf16.mxu0 0
        %4058 = vmatpush1.bf16.msra.mxu0 0
        %4059 = vmatprep.mubr.bf16.mxu0 0
        %4060 = vmatmul.mubr.bf16.gmra.mrb[0].mxu0 %v3977
        %v4061 = vpop.f32.mrb[0].mxu0
        %v4062 = vadd.f32 %v3974, %v4061
        %v4063 = vpop.f32.mrb[0].mxu0
        %v4064 = vpop.f32.mrb[0].mxu0
        %v4065 = vadd.f32 %v3974, %v4064
        %v4066 = vpop.f32.mrb[0].mxu0
        %4067 = vmatprep.mubr.bf16.mxu0 0
        %4068 = vmatmul.mubr.bf16.gmra.mrb[0].mxu0 %v3980
        %v4069 = vpop.f32.mrb[0].mxu0
        %v4070 = vadd.f32 %v3974, %v4069
        %v4071 = vpop.f32.mrb[0].mxu0
        %v4072 = vpop.f32.mrb[0].mxu0
        %v4073 = vadd.f32 %v3974, %v4072
        %v4074 = vpop.f32.mrb[0].mxu0
        %4075 = vmatprep.mubr.bf16.mxu0 0
        %4076 = vmatmul.mubr.bf16.gmra.mrb[0].mxu0 %v3983
        %v4077 = vpop.f32.mrb[0].mxu0
        %v4078 = vadd.f32 %v3974, %v4077
        %v4079 = vpop.f32.mrb[0].mxu0
        %v4080 = vpop.f32.mrb[0].mxu0
        %v4081 = vadd.f32 %v3974, %v4080
        %v4082 = vpop.f32.mrb[0].mxu0
        %4083 = vmatprep.mubr.bf16.mxu0 0
        %4084 = vmatmul.mubr.bf16.gmra.mrb[0].mxu0 %v3986
        %v4085 = vpop.f32.mrb[0].mxu0
        %v4086 = vadd.f32 %v3974, %v4085
        %v4087 = vpop.f32.mrb[0].mxu0
        %v4088 = vpop.f32.mrb[0].mxu0
        %v4089 = vadd.f32 %v3974, %v4088
        %v4090 = vpop.f32.mrb[0].mxu0
        %4091 = vmatprep.mubr.bf16.mxu0 0
        %4092 = vmatmul.mubr.bf16.gmra.mrb[0].mxu0 %v3989
        %v4093 = vpop.f32.mrb[0].mxu0
        %v4094 = vadd.f32 %v3974, %v4093
        %v4095 = vpop.f32.mrb[0].mxu0
        %v4096 = vpop.f32.mrb[0].mxu0
        %v4097 = vadd.f32 %v3974, %v4096
        %v4098 = vpop.f32.mrb[0].mxu0
        %4099 = vmatprep.mubr.bf16.mxu0 0
        %4100 = vmatmul.mubr.bf16.gmra.mrb[0].mxu0 %v3992
        %v4101 = vpop.f32.mrb[0].mxu0
        %v4102 = vadd.f32 %v3974, %v4101
        %v4103 = vpop.f32.mrb[0].mxu0
        %v4104 = vpop.f32.mrb[0].mxu0
        %v4105 = vadd.f32 %v3974, %v4104
        %v4106 = vpop.f32.mrb[0].mxu0
        %4107 = vmatprep.mubr.bf16.mxu0 0
        %4108 = vmatmul.mubr.bf16.gmra.mrb[0].mxu0 %v3995
        %v4109 = vpop.f32.mrb[0].mxu0
        %v4110 = vadd.f32 %v3974, %v4109
        %v4111 = vpop.f32.mrb[0].mxu0
        %v4112 = vpop.f32.mrb[0].mxu0
        %v4113 = vadd.f32 %v3974, %v4112
        %v4114 = vpop.f32.mrb[0].mxu0
        %4115 = vmatprep.mubr.bf16.mxu0 0
        %4116 = vmatmul.mubr.bf16.gmra.mrb[0].mxu0 %v3998
        %v4117 = vpop.f32.mrb[0].mxu0
        %v4118 = vadd.f32 %v3974, %v4117
        %v4119 = vpop.f32.mrb[0].mxu0
        %v4120 = vpop.f32.mrb[0].mxu0
        %v4121 = vadd.f32 %v3974, %v4120
        %v4122 = vpop.f32.mrb[0].mxu0
        %4123 = vmatprep.mubr.bf16.mxu0 0
        %4124 = vmatmul.mubr.bf16.gmra.mrb[0].mxu0 %v4001
        %v4125 = vpop.f32.mrb[0].mxu0
        %v4126 = vadd.f32 %v3974, %v4125
        %v4127 = vpop.f32.mrb[0].mxu0
        %v4128 = vpop.f32.mrb[0].mxu0
        %v4129 = vadd.f32 %v3974, %v4128
        %v4130 = vpop.f32.mrb[0].mxu0
        %4131 = vmatprep.mubr.bf16.mxu0 0
        %4132 = vmatmul.mubr.bf16.gmra.mrb[0].mxu0 %v4004
        %v4133 = vpop.f32.mrb[0].mxu0
        %v4134 = vadd.f32 %v3974, %v4133
        %v4135 = vpop.f32.mrb[0].mxu0
        %v4136 = vpop.f32.mrb[0].mxu0
        %v4137 = vadd.f32 %v3974, %v4136
        %v4138 = vpop.f32.mrb[0].mxu0
        %4139 = vmatprep.mubr.bf16.mxu0 0
        %4140 = vmatmul.mubr.bf16.gmra.mrb[0].mxu0 %v4007
        %v4141 = vpop.f32.mrb[0].mxu0
        %v4142 = vadd.f32 %v3974, %v4141
        %v4143 = vpop.f32.mrb[0].mxu0
        %v4144 = vpop.f32.mrb[0].mxu0
        %v4145 = vadd.f32 %v3974, %v4144
        %v4146 = vpop.f32.mrb[0].mxu0
        %4147 = vmatprep.mubr.bf16.mxu0 0
        %4148 = vmatmul.mubr.bf16.gmra.mrb[0].mxu0 %v4010
        %v4149 = vpop.f32.mrb[0].mxu0
        %v4150 = vadd.f32 %v3974, %v4149
        %v4151 = vpop.f32.mrb[0].mxu0
        %v4152 = vpop.f32.mrb[0].mxu0
        %v4153 = vadd.f32 %v3974, %v4152
        %v4154 = vpop.f32.mrb[0].mxu0
        %4155 = vmatprep.mubr.bf16.mxu0 0
        %4156 = vmatmul.mubr.bf16.gmra.mrb[0].mxu0 %v4013
        %v4157 = vpop.f32.mrb[0].mxu0
        %v4158 = vadd.f32 %v3974, %v4157
        %v4159 = vpop.f32.mrb[0].mxu0
        %v4160 = vpop.f32.mrb[0].mxu0
        %v4161 = vadd.f32 %v3974, %v4160
        %v4162 = vpop.f32.mrb[0].mxu0
        %4163 = vmatprep.mubr.bf16.mxu0 0
        %4164 = vmatmul.mubr.bf16.gmra.mrb[0].mxu0 %v4016
        %v4165 = vpop.f32.mrb[0].mxu0
        %v4166 = vadd.f32 %v3974, %v4165
        %v4167 = vpop.f32.mrb[0].mxu0
        %v4168 = vpop.f32.mrb[0].mxu0
        %v4169 = vadd.f32 %v3974, %v4168
        %v4170 = vpop.f32.mrb[0].mxu0
        %4171 = vmatprep.mubr.bf16.mxu0 0
        %4172 = vmatmul.mubr.bf16.gmra.mrb[0].mxu0 %v4019
        %v4173 = vpop.f32.mrb[0].mxu0
        %v4174 = vadd.f32 %v3974, %v4173
        %v4175 = vpop.f32.mrb[0].mxu0
        %v4176 = vpop.f32.mrb[0].mxu0
        %v4177 = vadd.f32 %v3974, %v4176
        %v4178 = vpop.f32.mrb[0].mxu0
        %4179 = vmatprep.mubr.bf16.mxu0 0
        %4180 = vmatmul.mubr.bf16.gmra.mrb[0].mxu0 %v4022
        %v4181 = vpop.f32.mrb[0].mxu0
        %v4182 = vadd.f32 %v3974, %v4181
        %v4183 = vpop.f32.mrb[0].mxu0
        %v4184 = vpop.f32.mrb[0].mxu0
        %v4185 = vadd.f32 %v3974, %v4184
        %v4186 = vpop.f32.mrb[0].mxu0
        %4187 = vdwg.mxu0
        %v4188 = vadd.f32 %v4062, %v298
        %v4189 = vadd.f32 %v4065, %v299
        %v4190 = vadd.f32 %v4070, %v300
        %v4191 = vadd.f32 %v4073, %v301
        %v4192 = vadd.f32 %v4078, %v302
        %v4193 = vadd.f32 %v4081, %v303
        %v4194 = vadd.f32 %v4086, %v304
        %v4195 = vadd.f32 %v4089, %v305
        %v4196 = vadd.f32 %v4094, %v306
        %v4197 = vadd.f32 %v4097, %v307
        %v4198 = vadd.f32 %v4102, %v308
        %v4199 = vadd.f32 %v4105, %v309
        %v4200 = vadd.f32 %v4110, %v310
        %v4201 = vadd.f32 %v4113, %v311
        %v4202 = vadd.f32 %v4118, %v312
        %v4203 = vadd.f32 %v4121, %v313
        %v4204 = vadd.f32 %v4126, %v314
        %v4205 = vadd.f32 %v4129, %v315
        %v4206 = vadd.f32 %v4134, %v316
        %v4207 = vadd.f32 %v4137, %v317
        %v4208 = vadd.f32 %v4142, %v318
        %v4209 = vadd.f32 %v4145, %v319
        %v4210 = vadd.f32 %v4150, %v320
        %v4211 = vadd.f32 %v4153, %v321
        %v4212 = vadd.f32 %v4158, %v322
        %v4213 = vadd.f32 %v4161, %v323
        %v4214 = vadd.f32 %v4166, %v324
        %v4215 = vadd.f32 %v4169, %v325
        %v4216 = vadd.f32 %v4174, %v326
        %v4217 = vadd.f32 %v4177, %v327
        %v4218 = vadd.f32 %v4182, %v328
        %v4219 = vadd.f32 %v4185, %v329
        %v4220 = vmax.f32 %v4188, 0.0
        %v4221 = vmax.f32 %v4189, 0.0
        %v4222 = vmax.f32 %v4190, 0.0
        %v4223 = vmax.f32 %v4191, 0.0
        %v4224 = vmax.f32 %v4192, 0.0
        %v4225 = vmax.f32 %v4193, 0.0
        %v4226 = vmax.f32 %v4194, 0.0
        %v4227 = vmax.f32 %v4195, 0.0
        %v4228 = vmax.f32 %v4196, 0.0
        %v4229 = vmax.f32 %v4197, 0.0
        %v4230 = vmax.f32 %v4198, 0.0
        %v4231 = vmax.f32 %v4199, 0.0
        %v4232 = vmax.f32 %v4200, 0.0
        %v4233 = vmax.f32 %v4201, 0.0
        %v4234 = vmax.f32 %v4202, 0.0
        %v4235 = vmax.f32 %v4203, 0.0
        %v4236 = vmax.f32 %v4204, 0.0
        %v4237 = vmax.f32 %v4205, 0.0
        %v4238 = vmax.f32 %v4206, 0.0
        %v4239 = vmax.f32 %v4207, 0.0
        %v4240 = vmax.f32 %v4208, 0.0
        %v4241 = vmax.f32 %v4209, 0.0
        %v4242 = vmax.f32 %v4210, 0.0
        %v4243 = vmax.f32 %v4211, 0.0
        %v4244 = vmax.f32 %v4212, 0.0
        %v4245 = vmax.f32 %v4213, 0.0
        %v4246 = vmax.f32 %v4214, 0.0
        %v4247 = vmax.f32 %v4215, 0.0
        %v4248 = vmax.f32 %v4216, 0.0
        %v4249 = vmax.f32 %v4217, 0.0
        %v4250 = vmax.f32 %v4218, 0.0
        %v4251 = vmax.f32 %v4219, 0.0
        %4252 = vst.msk [vmem:[%s296] sm:$0xff] %vm369, %v4220
        %4253 = vst.msk [vmem:[%s296 + $0x8] sm:$0xff] %vm369, %v4221
        %4254 = vst.msk [vmem:[%s296 + $0x10] sm:$0xff] %vm369, %v4222
        %4255 = vst.msk [vmem:[%s296 + $0x18] sm:$0xff] %vm369, %v4223
        %4256 = vst.msk [vmem:[%s296 + $0x20] sm:$0xff] %vm369, %v4224
        %4257 = vst.msk [vmem:[%s296 + $0x28] sm:$0xff] %vm369, %v4225
        %4258 = vst.msk [vmem:[%s296 + $0x30] sm:$0xff] %vm369, %v4226
        %4259 = vst.msk [vmem:[%s296 + $0x38] sm:$0xff] %vm369, %v4227
        %4260 = vst.msk [vmem:[%s296 + $0x40] sm:$0xff] %vm369, %v4228
        %4261 = vst.msk [vmem:[%s296 + $0x48] sm:$0xff] %vm369, %v4229
        %4262 = vst.msk [vmem:[%s296 + $0x50] sm:$0xff] %vm369, %v4230
        %4263 = vst.msk [vmem:[%s296 + $0x58] sm:$0xff] %vm369, %v4231
        %4264 = vst.msk [vmem:[%s296 + $0x60] sm:$0xff] %vm369, %v4232
        %4265 = vst.msk [vmem:[%s296 + $0x68] sm:$0xff] %vm369, %v4233
        %4266 = vst.msk [vmem:[%s296 + $0x70] sm:$0xff] %vm369, %v4234
        %4267 = vst.msk [vmem:[%s296 + $0x78] sm:$0xff] %vm369, %v4235
        %4268 = vst.msk [vmem:[%s296 + $0x80] sm:$0xff] %vm369, %v4236
        %4269 = vst.msk [vmem:[%s296 + $0x88] sm:$0xff] %vm369, %v4237
        %4270 = vst.msk [vmem:[%s296 + $0x90] sm:$0xff] %vm369, %v4238
        %4271 = vst.msk [vmem:[%s296 + $0x98] sm:$0xff] %vm369, %v4239
        %4272 = vst.msk [vmem:[%s296 + $0xa0] sm:$0xff] %vm369, %v4240
        %4273 = vst.msk [vmem:[%s296 + $0xa8] sm:$0xff] %vm369, %v4241
        %4274 = vst.msk [vmem:[%s296 + $0xb0] sm:$0xff] %vm369, %v4242
        %4275 = vst.msk [vmem:[%s296 + $0xb8] sm:$0xff] %vm369, %v4243
        %4276 = vst.msk [vmem:[%s296 + $0xc0] sm:$0xff] %vm369, %v4244
        %4277 = vst.msk [vmem:[%s296 + $0xc8] sm:$0xff] %vm369, %v4245
        %4278 = vst.msk [vmem:[%s296 + $0xd0] sm:$0xff] %vm369, %v4246
        %4279 = vst.msk [vmem:[%s296 + $0xd8] sm:$0xff] %vm369, %v4247
        %4280 = vst.msk [vmem:[%s296 + $0xe0] sm:$0xff] %vm369, %v4248
        %4281 = vst.msk [vmem:[%s296 + $0xe8] sm:$0xff] %vm369, %v4249
        %4282 = vst.msk [vmem:[%s296 + $0xf0] sm:$0xff] %vm369, %v4250
        %4283 = vst.msk [vmem:[%s296 + $0xf8] sm:$0xff] %vm369, %v4251
        %s4284 = sand.u32 %s184, 1
        %s4285 = scalar_lea.sflag [#allocation6], %s4284
        %s4286 = sand.u32 %s184, 1
        %s4287 = smul.addr %s4286, 256
        %s4288 = scalar_lea.vmem [#allocation7], %s4287
        // Predicated region
        $region53: #{bottleneck_forward.1} parent=47 // pred_check
          %p4289 = pneg %p194
        $region54: #{bottleneck_forward.1} parent=47 // pred_check_branch
          %4291 = sbr.rel (%p4289) target = $region56
        $region55: #{bottleneck_forward.1} parent=47 // pred_region
          %s4293 = ssub.s32 4096, 4096
          %4294 = vsyncadd %s4285, %s4293
          %s4295 = smul.addr %s24, 32
          %s4296 = smul.addr %s4295, 128
          %s4297 = scalar_lea.hbm %s7, %s4296
          %s4298 = sshll.u32 %s4288, 4
          %s4299 = int_to_ptr.vmem [resolvable:$true] %s4298
          %4304 = dma.vmem_to_hbm [thread:$0]  %s4299, 4096, %s4297, %s4285, 128, 128, 8
        $region56: #{bottleneck_forward.1} parent=47 // pred_fallthru
          _
      $region48: #{bottleneck_forward.1} parent=5 // pred_fallthru
        _
      %p4305 = scmp.le.s32.totalorder 2, %s19
      // Predicated region
      $region57: #{bottleneck_forward.1} parent=5 // pred_check
        %p4306 = pneg %p4305
      $region58: #{bottleneck_forward.1} parent=5 // pred_check_branch
        %4308 = sbr.rel (%p4306) target = $region60
      $region59: #{bottleneck_forward.1} parent=5 // pred_region
        %s4309 = ssub.s32 %s19, 2
        // Predicated region
        $region61: #{bottleneck_forward.1} parent=59 // pred_check
          %p4310 = pneg %p200
        $region62: #{bottleneck_forward.1} parent=59 // pred_check_branch
          %4312 = sbr.rel (%p4310) target = $region64
        $region63: #{bottleneck_forward.1} parent=59 // pred_region
          %s4313 = sand.u32 %s185, 1
          %s4314 = scalar_lea.sflag [#allocation6], %s4313
          %s4315 = sand.u32 %s185, 1
          %s4316 = smul.addr %s4315, 256
          %s4317 = scalar_lea.vmem [#allocation7], %s4316
          %4318 = dma.done %s4314, 4096
        $region64: #{bottleneck_forward.1} parent=59 // pred_fallthru
          _
      $region60: #{bottleneck_forward.1} parent=5 // pred_fallthru
        _
    $region6: #{bottleneck_forward.1} parent=1 // loop_footer
      %s23 = sadd.s32 1, %s19
    $region7: #{bottleneck_forward.1} parent=1 // loop_footer_branch
      %18 = sbr.rel target = $region3
    $region8: #{bottleneck_forward.1} parent=1 // loop_exit
      _
    %4319 = vsyncpa [#allocation5], 1
    %s4320 = scalar_lea.sflag [#allocation5], 1
    %4321 = vsyncpa %s4320, 1
    %4322 = vsyncpa [#allocation6], 1
    %s4323 = scalar_lea.sflag [#allocation6], 1
    %4324 = vsyncpa %s4323, 1

</llo_original>
